<compile_context>
chip_gen: v7x
topology: tpu7x:2x2x1
jax: 0.10.0
libtpu: 0.0.40
codegen_flags: <defaults>
</compile_context>

<pallas_src>
import jax
import jax.numpy as jnp
from jax import lax
from jax.experimental import pallas as pl
from jax.experimental.pallas import tpu as pltpu


def _tree_reduce(fn, items):
    """Balanced binary reduction over a Python list of traced values."""
    items = list(items)
    while len(items) > 1:
        nxt = []
        for i in range(0, len(items) - 1, 2):
            nxt.append(fn(items[i], items[i + 1]))
        if len(items) % 2:
            nxt.append(items[-1])
        items = nxt
    return items[0]


def _make_kernel(num_layers, T, B, D, H, C_pad):
    def kernel(*refs):
        x_ref, h0_ref, c0_ref = refs[0:3]
        idx = 3
        layers = []
        for _ in range(num_layers):
            layers.append(refs[idx:idx + 3])
            idx += 3
        (ln_g_ref, ln_b_ref, attn_w_ref,
         fc1_w_ref, fc1_b_ref, fc_w_ref, fc_b_ref) = refs[idx:idx + 7]
        out_ref = refs[idx + 7]
        seq_ref = refs[idx + 8]          # (T*B, H) VMEM scratch: inter-layer handoff

        f32 = jnp.float32
        n = T * B

        # ---- per-feature normalization over (batch, time): mean / unbiased std (+1e-8) ----
        # One-time op on a tiny slab -> exact division (matches torch semantics closely).
        xv = x_ref[...]                                       # (T*B, D), row = t*B + b
        mean = jnp.mean(xv, axis=0, keepdims=True)
        var_unb = jnp.sum((xv - mean) ** 2, axis=0, keepdims=True) / (n - 1)
        std = jnp.sqrt(var_unb) + 1e-8
        seq2d = (xv - mean) / std                             # (T*B, D)

        # ---- stacked LSTM (PyTorch gate order: i, f, g, o) ----
        outs = None
        for l in range(num_layers):
            w_ih_ref, w_hh_ref, b_ref = layers[l]
            w_ih = w_ih_ref[...]                              # (D_in, 4H)
            w_hh = w_hh_ref[...]                              # (H, 4H)
            b = b_ref[...]                                    # (1, 4H)  (b_ih + b_hh)

            # Hoisted, time-batched input projection: off the serial critical path.
            gates_in = jnp.dot(seq2d, w_ih, preferred_element_type=f32) + b   # (T*B, 4H)

            h = h0_ref[l]                                     # (B, H) carried in vregs
            c = c0_ref[l]
            outs = []
            for t in range(T):                                # fully unrolled (T static, small)
                z = gates_in[t * B:(t + 1) * B, :] + jnp.dot(
                    h, w_hh, preferred_element_type=f32)       # (B, 4H)
                i_g = jax.nn.sigmoid(z[:, 0:H])
                f_g = jax.nn.sigmoid(z[:, H:2 * H])
                g_g = jnp.tanh(z[:, 2 * H:3 * H])
                o_g = jax.nn.sigmoid(z[:, 3 * H:4 * H])
                c = f_g * c + i_g * g_g
                h = o_g * jnp.tanh(c)
                outs.append(h)
                if l < num_layers - 1:
                    # off-critical-path store feeding the next layer's batched projection
                    seq_ref[t * B:(t + 1) * B, :] = h
            if l < num_layers - 1:
                seq2d = seq_ref[...]                          # (T*B, H)

        # ---- attention: LayerNorm -> score -> max-sub -> clamp -> softmax(time) -> weighted sum ----
        ln_g = ln_g_ref[...]                                  # (1, H)
        ln_b = ln_b_ref[...]                                  # (1, H)
        attn_w = attn_w_ref[...]                              # (1, H)

        ys, scores = [], []
        for h_t in outs:                                      # per-timestep (B, H) values
            mu = jnp.mean(h_t, axis=-1, keepdims=True)
            var = jnp.mean((h_t - mu) ** 2, axis=-1, keepdims=True)
            y_t = (h_t - mu) * lax.rsqrt(var + 1e-5) * ln_g + ln_b
            ys.append(y_t)
            scores.append(jnp.sum(y_t * attn_w, axis=-1, keepdims=True))   # (B, 1)

        # log-depth reductions over the unrolled time axis (shorter dependency chains)
        m = _tree_reduce(jnp.maximum, scores)                 # (B, 1) max over time
        es = [jnp.exp(jnp.clip(s - m, -10.0, 10.0)) for s in scores]
        denom = _tree_reduce(lambda a, b_: a + b_, es)        # (B, 1)
        inv = pl.reciprocal(denom, approx=True)               # EUP slot, off the VALU path
        # TODO(synk): attention dropout (p=0.1) and head dropout are identity in inference mode.
        acc = _tree_reduce(lambda a, b_: a + b_,
                           [e * y_t for e, y_t in zip(es, ys)])
        attended = acc * inv                                  # (B, H)

        # ---- head: relu -> fc_1 -> relu -> fc (output lane-padded to C_pad) ----
        o = jnp.maximum(attended, 0.0)
        h1 = jnp.dot(o, fc1_w_ref[...], preferred_element_type=f32) + fc1_b_ref[...]
        h1 = jnp.maximum(h1, 0.0)
        logits = jnp.dot(h1, fc_w_ref[...], preferred_element_type=f32) + fc_b_ref[...]
        out_ref[...] = logits

    return kernel


def init_params(key, input_size, hidden_size, num_layers, num_classes):
    """Deterministic synthetic init mirroring Model.init_weights shapes."""
    H = hidden_size
    params = {}
    keys = jax.random.split(key, 2 * num_layers + 3)
    ki = 0
    for l in range(num_layers):
        d_in = input_size if l == 0 else H
        # weight_ih ~ U(-0.1, 0.1)
        w_ih = jax.random.uniform(keys[ki], (4 * H, d_in), minval=-0.1, maxval=0.1)
        ki += 1
        # weight_hh orthogonal (semi-orthogonal via QR)
        q, _ = jnp.linalg.qr(jax.random.normal(keys[ki], (4 * H, H)))
        ki += 1
        params[f"w_ih_{l}"] = w_ih.T.astype(jnp.float32)            # (d_in, 4H)
        params[f"w_hh_{l}"] = q.T.astype(jnp.float32)               # (H, 4H)
        params[f"b_{l}"] = jnp.zeros((1, 4 * H), jnp.float32)       # biases init to 0
    b_attn = H ** -0.5
    params["attn_w"] = jax.random.uniform(keys[ki], (1, H), minval=-b_attn, maxval=b_attn).astype(jnp.float32)
    ki += 1
    params["ln_g"] = jnp.ones((1, H), jnp.float32)
    params["ln_b"] = jnp.zeros((1, H), jnp.float32)
    b1 = H ** -0.5
    params["fc1_w"] = jax.random.uniform(keys[ki], (H, 128), minval=-b1, maxval=b1).astype(jnp.float32)
    ki += 1
    params["fc1_b"] = jnp.zeros((1, 128), jnp.float32)
    b2 = 128 ** -0.5
    params["fc_w"] = jax.random.uniform(keys[ki], (128, num_classes), minval=-b2, maxval=b2).astype(jnp.float32)
    ki += 1
    params["fc_b"] = jnp.zeros((1, num_classes), jnp.float32)
    return params


def lstm_attn_forward(x, params, num_layers, hidden_size, num_classes, h0, c0):
    B, T, D = x.shape
    H = hidden_size
    C = num_classes
    C_pad = 128   # lane-dense output store; wrapper slices back to C

    # time-major, then flatten (time, batch) so each layer's input projection is ONE matmul
    x2d = jnp.transpose(x, (1, 0, 2)).reshape(T * B, D).astype(jnp.float32)

    fc_w_p = jnp.pad(params["fc_w"], ((0, 0), (0, C_pad - C)))
    fc_b_p = jnp.pad(params["fc_b"], ((0, 0), (0, C_pad - C)))

    inputs = [x2d, h0.astype(jnp.float32), c0.astype(jnp.float32)]
    for l in range(num_layers):
        inputs += [params[f"w_ih_{l}"], params[f"w_hh_{l}"], params[f"b_{l}"]]
    inputs += [params["ln_g"], params["ln_b"], params["attn_w"],
               params["fc1_w"], params["fc1_b"], fc_w_p, fc_b_p]

    in_specs = [pl.BlockSpec(a.shape, lambda i, nd=a.ndim: (0,) * nd) for a in inputs]
    out_spec = pl.BlockSpec((B, C_pad), lambda i: (0, 0))

    kernel = _make_kernel(num_layers, T, B, D, H, C_pad)

    out = pl.pallas_call(
        kernel,
        out_shape=jax.ShapeDtypeStruct((B, C_pad), jnp.float32),
        grid_spec=pltpu.PrefetchScalarGridSpec(
            num_scalar_prefetch=0,
            grid=(1,),
            in_specs=in_specs,
            out_specs=out_spec,
            scratch_shapes=[
                pltpu.VMEM((T * B, H), jnp.float32),   # inter-layer sequence handoff
            ],
        ),
        compiler_params=pltpu.CompilerParams(dimension_semantics=("arbitrary",)),
    )(*inputs)
    return out[:, :C]


if __name__ == "__main__":
    # Small shapes consistent with the module: batch=2, seq=8, input_size=4,
    # hidden_size=32, num_layers=2, num_classes=5.
    B, T, D, H, L, C = 2, 8, 4, 32, 2, 5

    key = jax.random.PRNGKey(0)
    kx, kh, kc, kp = jax.random.split(key, 4)

    x = jax.random.normal(kx, (B, T, D), dtype=jnp.float32)
    params = init_params(kp, D, H, L, C)

    # h_0 / c_0 = zeros + 0.001 * randn (as in the PyTorch forward)
    h0 = jax.random.normal(kh, (L, B, H), dtype=jnp.float32) * 0.001
    c0 = jax.random.normal(kc, (L, B, H), dtype=jnp.float32) * 0.001

    out = lstm_attn_forward(x, params, L, H, C, h0, c0)
    out = jax.block_until_ready(out)
    assert out.shape == (B, C) and out.dtype == jnp.float32
    print("KERNEL_OK")
</pallas_src>

<mosaic_0001>
module attributes {stable_mosaic.version = 11 : i64} {
  func.func @kernel(%arg0: i32, %arg1: memref<16x4xf32, #tpu.memory_space<vmem>>, %arg2: memref<2x2x32xf32, #tpu.memory_space<vmem>>, %arg3: memref<2x2x32xf32, #tpu.memory_space<vmem>>, %arg4: memref<4x128xf32, #tpu.memory_space<vmem>>, %arg5: memref<32x128xf32, #tpu.memory_space<vmem>>, %arg6: memref<1x128xf32, #tpu.memory_space<vmem>>, %arg7: memref<32x128xf32, #tpu.memory_space<vmem>>, %arg8: memref<32x128xf32, #tpu.memory_space<vmem>>, %arg9: memref<1x128xf32, #tpu.memory_space<vmem>>, %arg10: memref<1x32xf32, #tpu.memory_space<vmem>>, %arg11: memref<1x32xf32, #tpu.memory_space<vmem>>, %arg12: memref<1x32xf32, #tpu.memory_space<vmem>>, %arg13: memref<32x128xf32, #tpu.memory_space<vmem>>, %arg14: memref<1x128xf32, #tpu.memory_space<vmem>>, %arg15: memref<128x128xf32, #tpu.memory_space<vmem>>, %arg16: memref<1x128xf32, #tpu.memory_space<vmem>>, %arg17: memref<2x128xf32, #tpu.memory_space<vmem>>, %arg18: memref<16x32xf32, #tpu.memory_space<vmem>>) attributes {dimension_semantics = [#tpu.dimension_semantics<arbitrary>], iteration_bounds = array<i64: 1>, scalar_prefetch = 0 : i64, scratch_operands = 1 : i64, tpu.core_type = #tpu.core_type<tc>, window_params = [{pipeline_mode = #tpu.pipeline_mode<synchronous>, transform_indices = @transform_0, window_bounds = array<i64: 16, 4>}, {pipeline_mode = #tpu.pipeline_mode<synchronous>, transform_indices = @transform_1, window_bounds = array<i64: 2, 2, 32>}, {pipeline_mode = #tpu.pipeline_mode<synchronous>, transform_indices = @transform_2, window_bounds = array<i64: 2, 2, 32>}, {pipeline_mode = #tpu.pipeline_mode<synchronous>, transform_indices = @transform_3, window_bounds = array<i64: 4, 128>}, {pipeline_mode = #tpu.pipeline_mode<synchronous>, transform_indices = @transform_4, window_bounds = array<i64: 32, 128>}, {pipeline_mode = #tpu.pipeline_mode<synchronous>, transform_indices = @transform_5, window_bounds = array<i64: 1, 128>}, {pipeline_mode = #tpu.pipeline_mode<synchronous>, transform_indices = @transform_6, window_bounds = array<i64: 32, 128>}, {pipeline_mode = #tpu.pipeline_mode<synchronous>, transform_indices = @transform_7, window_bounds = array<i64: 32, 128>}, {pipeline_mode = #tpu.pipeline_mode<synchronous>, transform_indices = @transform_8, window_bounds = array<i64: 1, 128>}, {pipeline_mode = #tpu.pipeline_mode<synchronous>, transform_indices = @transform_9, window_bounds = array<i64: 1, 32>}, {pipeline_mode = #tpu.pipeline_mode<synchronous>, transform_indices = @transform_10, window_bounds = array<i64: 1, 32>}, {pipeline_mode = #tpu.pipeline_mode<synchronous>, transform_indices = @transform_11, window_bounds = array<i64: 1, 32>}, {pipeline_mode = #tpu.pipeline_mode<synchronous>, transform_indices = @transform_12, window_bounds = array<i64: 32, 128>}, {pipeline_mode = #tpu.pipeline_mode<synchronous>, transform_indices = @transform_13, window_bounds = array<i64: 1, 128>}, {pipeline_mode = #tpu.pipeline_mode<synchronous>, transform_indices = @transform_14, window_bounds = array<i64: 128, 128>}, {pipeline_mode = #tpu.pipeline_mode<synchronous>, transform_indices = @transform_15, window_bounds = array<i64: 1, 128>}, {pipeline_mode = #tpu.pipeline_mode<synchronous>, transform_indices = @transform_16, window_bounds = array<i64: 2, 128>}]} {
    %c0 = arith.constant 0 : index
    %c0_0 = arith.constant 0 : index
    %0 = vector.load %arg1[%c0, %c0_0] : memref<16x4xf32, #tpu.memory_space<vmem>>, vector<16x4xf32>
    %cst = arith.constant dense<0.000000e+00> : vector<4xf32>
    %1 = vector.multi_reduction <add>, %0, %cst [0] : vector<16x4xf32> to vector<4xf32>
    %2 = vector.shape_cast %1 : vector<4xf32> to vector<1x4xf32>
    %cst_1 = arith.constant 1.600000e+01 : f32
    %3 = vector.broadcast %cst_1 : f32 to vector<1x4xf32>
    %4 = arith.divf %2, %3 : vector<1x4xf32>
    %5 = vector.broadcast %4 : vector<1x4xf32> to vector<16x4xf32>
    %6 = arith.subf %0, %5 : vector<16x4xf32>
    %7 = arith.mulf %6, %6 : vector<16x4xf32>
    %cst_2 = arith.constant dense<0.000000e+00> : vector<4xf32>
    %8 = vector.multi_reduction <add>, %7, %cst_2 [0] : vector<16x4xf32> to vector<4xf32>
    %9 = vector.shape_cast %8 : vector<4xf32> to vector<1x4xf32>
    %cst_3 = arith.constant 1.500000e+01 : f32
    %10 = vector.broadcast %cst_3 : f32 to vector<1x4xf32>
    %11 = arith.divf %9, %10 : vector<1x4xf32>
    %12 = math.sqrt %11 : vector<1x4xf32>
    %cst_4 = arith.constant 9.99999993E-9 : f32
    %13 = vector.broadcast %cst_4 : f32 to vector<1x4xf32>
    %14 = arith.addf %12, %13 : vector<1x4xf32>
    %15 = vector.broadcast %4 : vector<1x4xf32> to vector<16x4xf32>
    %16 = arith.subf %0, %15 : vector<16x4xf32>
    %17 = vector.broadcast %14 : vector<1x4xf32> to vector<16x4xf32>
    %18 = arith.divf %16, %17 : vector<16x4xf32>
    %c0_5 = arith.constant 0 : index
    %c0_6 = arith.constant 0 : index
    %19 = vector.load %arg4[%c0_5, %c0_6] : memref<4x128xf32, #tpu.memory_space<vmem>>, vector<4x128xf32>
    %c0_7 = arith.constant 0 : index
    %c0_8 = arith.constant 0 : index
    %20 = vector.load %arg5[%c0_7, %c0_8] : memref<32x128xf32, #tpu.memory_space<vmem>>, vector<32x128xf32>
    %c0_9 = arith.constant 0 : index
    %c0_10 = arith.constant 0 : index
    %21 = vector.load %arg6[%c0_9, %c0_10] : memref<1x128xf32, #tpu.memory_space<vmem>>, vector<1x128xf32>
    %cst_11 = arith.constant dense<0.000000e+00> : vector<16x128xf32>
    %22 = tpu.matmul %18, %19, %cst_11 {dimension_numbers = #tpu.dot_dimension_numbers<[1], [0], [0], [1], [0, 0, 1, 1], [], []>} : vector<16x4xf32>, vector<4x128xf32>, vector<16x128xf32> -> vector<16x128xf32>
    %23 = vector.broadcast %21 : vector<1x128xf32> to vector<16x128xf32>
    %24 = arith.addf %22, %23 : vector<16x128xf32>
    %c0_12 = arith.constant 0 : index
    %c0_13 = arith.constant 0 : index
    %c0_14 = arith.constant 0 : index
    %25 = vector.load %arg2[%c0_12, %c0_13, %c0_14] : memref<2x2x32xf32, #tpu.memory_space<vmem>>, vector<1x2x32xf32>
    %26 = vector.shape_cast %25 : vector<1x2x32xf32> to vector<2x32xf32>
    %c0_15 = arith.constant 0 : index
    %c0_16 = arith.constant 0 : index
    %c0_17 = arith.constant 0 : index
    %27 = vector.load %arg3[%c0_15, %c0_16, %c0_17] : memref<2x2x32xf32, #tpu.memory_space<vmem>>, vector<1x2x32xf32>
    %28 = vector.shape_cast %27 : vector<1x2x32xf32> to vector<2x32xf32>
    %29 = vector.extract_strided_slice %24 {offsets = [0, 0], sizes = [2, 128], strides = [1, 1]} : vector<16x128xf32> to vector<2x128xf32>
    %cst_18 = arith.constant dense<0.000000e+00> : vector<2x128xf32>
    %30 = tpu.matmul %26, %20, %cst_18 {dimension_numbers = #tpu.dot_dimension_numbers<[1], [0], [0], [1], [0, 0, 1, 1], [], []>} : vector<2x32xf32>, vector<32x128xf32>, vector<2x128xf32> -> vector<2x128xf32>
    %31 = arith.addf %29, %30 : vector<2x128xf32>
    %32 = vector.extract_strided_slice %31 {offsets = [0, 0], sizes = [2, 32], strides = [1, 1]} : vector<2x128xf32> to vector<2x32xf32>
    %33 = arith.negf %32 : vector<2x32xf32>
    %34 = math.exp %33 : vector<2x32xf32>
    %cst_19 = arith.constant 1.000000e+00 : f32
    %35 = vector.broadcast %cst_19 : f32 to vector<2x32xf32>
    %36 = arith.addf %35, %34 : vector<2x32xf32>
    %37 = arith.divf %35, %36 : vector<2x32xf32>
    %38 = vector.extract_strided_slice %31 {offsets = [0, 32], sizes = [2, 32], strides = [1, 1]} : vector<2x128xf32> to vector<2x32xf32>
    %39 = arith.negf %38 : vector<2x32xf32>
    %40 = math.exp %39 : vector<2x32xf32>
    %cst_20 = arith.constant 1.000000e+00 : f32
    %41 = vector.broadcast %cst_20 : f32 to vector<2x32xf32>
    %42 = arith.addf %41, %40 : vector<2x32xf32>
    %43 = arith.divf %41, %42 : vector<2x32xf32>
    %44 = vector.extract_strided_slice %31 {offsets = [0, 64], sizes = [2, 32], strides = [1, 1]} : vector<2x128xf32> to vector<2x32xf32>
    %45 = math.tanh %44 : vector<2x32xf32>
    %46 = vector.extract_strided_slice %31 {offsets = [0, 96], sizes = [2, 32], strides = [1, 1]} : vector<2x128xf32> to vector<2x32xf32>
    %47 = arith.negf %46 : vector<2x32xf32>
    %48 = math.exp %47 : vector<2x32xf32>
    %cst_21 = arith.constant 1.000000e+00 : f32
    %49 = vector.broadcast %cst_21 : f32 to vector<2x32xf32>
    %50 = arith.addf %49, %48 : vector<2x32xf32>
    %51 = arith.divf %49, %50 : vector<2x32xf32>
    %52 = arith.mulf %43, %28 : vector<2x32xf32>
    %53 = arith.mulf %37, %45 : vector<2x32xf32>
    %54 = arith.addf %52, %53 : vector<2x32xf32>
    %55 = math.tanh %54 : vector<2x32xf32>
    %56 = arith.mulf %51, %55 : vector<2x32xf32>
    %c0_22 = arith.constant 0 : index
    %c0_23 = arith.constant 0 : index
    %57 = vector.load %arg18[%c0_22, %c0_23] : memref<16x32xf32, #tpu.memory_space<vmem>>, vector<2x32xf32>
    tpu.vector_store %arg18[%c0_22, %c0_23], %56 {strides = array<i32>} : memref<16x32xf32, #tpu.memory_space<vmem>>, vector<2x32xf32>,
    %58 = vector.extract_strided_slice %24 {offsets = [2, 0], sizes = [2, 128], strides = [1, 1]} : vector<16x128xf32> to vector<2x128xf32>
    %cst_24 = arith.constant dense<0.000000e+00> : vector<2x128xf32>
    %59 = tpu.matmul %56, %20, %cst_24 {dimension_numbers = #tpu.dot_dimension_numbers<[1], [0], [0], [1], [0, 0, 1, 1], [], []>} : vector<2x32xf32>, vector<32x128xf32>, vector<2x128xf32> -> vector<2x128xf32>
    %60 = arith.addf %58, %59 : vector<2x128xf32>
    %61 = vector.extract_strided_slice %60 {offsets = [0, 0], sizes = [2, 32], strides = [1, 1]} : vector<2x128xf32> to vector<2x32xf32>
    %62 = arith.negf %61 : vector<2x32xf32>
    %63 = math.exp %62 : vector<2x32xf32>
    %cst_25 = arith.constant 1.000000e+00 : f32
    %64 = vector.broadcast %cst_25 : f32 to vector<2x32xf32>
    %65 = arith.addf %64, %63 : vector<2x32xf32>
    %66 = arith.divf %64, %65 : vector<2x32xf32>
    %67 = vector.extract_strided_slice %60 {offsets = [0, 32], sizes = [2, 32], strides = [1, 1]} : vector<2x128xf32> to vector<2x32xf32>
    %68 = arith.negf %67 : vector<2x32xf32>
    %69 = math.exp %68 : vector<2x32xf32>
    %cst_26 = arith.constant 1.000000e+00 : f32
    %70 = vector.broadcast %cst_26 : f32 to vector<2x32xf32>
    %71 = arith.addf %70, %69 : vector<2x32xf32>
    %72 = arith.divf %70, %71 : vector<2x32xf32>
    %73 = vector.extract_strided_slice %60 {offsets = [0, 64], sizes = [2, 32], strides = [1, 1]} : vector<2x128xf32> to vector<2x32xf32>
    %74 = math.tanh %73 : vector<2x32xf32>
    %75 = vector.extract_strided_slice %60 {offsets = [0, 96], sizes = [2, 32], strides = [1, 1]} : vector<2x128xf32> to vector<2x32xf32>
    %76 = arith.negf %75 : vector<2x32xf32>
    %77 = math.exp %76 : vector<2x32xf32>
    %cst_27 = arith.constant 1.000000e+00 : f32
    %78 = vector.broadcast %cst_27 : f32 to vector<2x32xf32>
    %79 = arith.addf %78, %77 : vector<2x32xf32>
    %80 = arith.divf %78, %79 : vector<2x32xf32>
    %81 = arith.mulf %72, %54 : vector<2x32xf32>
    %82 = arith.mulf %66, %74 : vector<2x32xf32>
    %83 = arith.addf %81, %82 : vector<2x32xf32>
    %84 = math.tanh %83 : vector<2x32xf32>
    %85 = arith.mulf %80, %84 : vector<2x32xf32>
    %c2 = arith.constant 2 : index
    %c0_28 = arith.constant 0 : index
    %86 = vector.load %arg18[%c2, %c0_28] : memref<16x32xf32, #tpu.memory_space<vmem>>, vector<2x32xf32>
    tpu.vector_store %arg18[%c2, %c0_28], %85 {strides = array<i32>} : memref<16x32xf32, #tpu.memory_space<vmem>>, vector<2x32xf32>,
    %87 = vector.extract_strided_slice %24 {offsets = [4, 0], sizes = [2, 128], strides = [1, 1]} : vector<16x128xf32> to vector<2x128xf32>
    %cst_29 = arith.constant dense<0.000000e+00> : vector<2x128xf32>
    %88 = tpu.matmul %85, %20, %cst_29 {dimension_numbers = #tpu.dot_dimension_numbers<[1], [0], [0], [1], [0, 0, 1, 1], [], []>} : vector<2x32xf32>, vector<32x128xf32>, vector<2x128xf32> -> vector<2x128xf32>
    %89 = arith.addf %87, %88 : vector<2x128xf32>
    %90 = vector.extract_strided_slice %89 {offsets = [0, 0], sizes = [2, 32], strides = [1, 1]} : vector<2x128xf32> to vector<2x32xf32>
    %91 = arith.negf %90 : vector<2x32xf32>
    %92 = math.exp %91 : vector<2x32xf32>
    %cst_30 = arith.constant 1.000000e+00 : f32
    %93 = vector.broadcast %cst_30 : f32 to vector<2x32xf32>
    %94 = arith.addf %93, %92 : vector<2x32xf32>
    %95 = arith.divf %93, %94 : vector<2x32xf32>
    %96 = vector.extract_strided_slice %89 {offsets = [0, 32], sizes = [2, 32], strides = [1, 1]} : vector<2x128xf32> to vector<2x32xf32>
    %97 = arith.negf %96 : vector<2x32xf32>
    %98 = math.exp %97 : vector<2x32xf32>
    %cst_31 = arith.constant 1.000000e+00 : f32
    %99 = vector.broadcast %cst_31 : f32 to vector<2x32xf32>
    %100 = arith.addf %99, %98 : vector<2x32xf32>
    %101 = arith.divf %99, %100 : vector<2x32xf32>
    %102 = vector.extract_strided_slice %89 {offsets = [0, 64], sizes = [2, 32], strides = [1, 1]} : vector<2x128xf32> to vector<2x32xf32>
    %103 = math.tanh %102 : vector<2x32xf32>
    %104 = vector.extract_strided_slice %89 {offsets = [0, 96], sizes = [2, 32], strides = [1, 1]} : vector<2x128xf32> to vector<2x32xf32>
    %105 = arith.negf %104 : vector<2x32xf32>
    %106 = math.exp %105 : vector<2x32xf32>
    %cst_32 = arith.constant 1.000000e+00 : f32
    %107 = vector.broadcast %cst_32 : f32 to vector<2x32xf32>
    %108 = arith.addf %107, %106 : vector<2x32xf32>
    %109 = arith.divf %107, %108 : vector<2x32xf32>
    %110 = arith.mulf %101, %83 : vector<2x32xf32>
    %111 = arith.mulf %95, %103 : vector<2x32xf32>
    %112 = arith.addf %110, %111 : vector<2x32xf32>
    %113 = math.tanh %112 : vector<2x32xf32>
    %114 = arith.mulf %109, %113 : vector<2x32xf32>
    %c4 = arith.constant 4 : index
    %c0_33 = arith.constant 0 : index
    %115 = vector.load %arg18[%c4, %c0_33] : memref<16x32xf32, #tpu.memory_space<vmem>>, vector<2x32xf32>
    tpu.vector_store %arg18[%c4, %c0_33], %114 {strides = array<i32>} : memref<16x32xf32, #tpu.memory_space<vmem>>, vector<2x32xf32>,
    %116 = vector.extract_strided_slice %24 {offsets = [6, 0], sizes = [2, 128], strides = [1, 1]} : vector<16x128xf32> to vector<2x128xf32>
    %cst_34 = arith.constant dense<0.000000e+00> : vector<2x128xf32>
    %117 = tpu.matmul %114, %20, %cst_34 {dimension_numbers = #tpu.dot_dimension_numbers<[1], [0], [0], [1], [0, 0, 1, 1], [], []>} : vector<2x32xf32>, vector<32x128xf32>, vector<2x128xf32> -> vector<2x128xf32>
    %118 = arith.addf %116, %117 : vector<2x128xf32>
    %119 = vector.extract_strided_slice %118 {offsets = [0, 0], sizes = [2, 32], strides = [1, 1]} : vector<2x128xf32> to vector<2x32xf32>
    %120 = arith.negf %119 : vector<2x32xf32>
    %121 = math.exp %120 : vector<2x32xf32>
    %cst_35 = arith.constant 1.000000e+00 : f32
    %122 = vector.broadcast %cst_35 : f32 to vector<2x32xf32>
    %123 = arith.addf %122, %121 : vector<2x32xf32>
    %124 = arith.divf %122, %123 : vector<2x32xf32>
    %125 = vector.extract_strided_slice %118 {offsets = [0, 32], sizes = [2, 32], strides = [1, 1]} : vector<2x128xf32> to vector<2x32xf32>
    %126 = arith.negf %125 : vector<2x32xf32>
    %127 = math.exp %126 : vector<2x32xf32>
    %cst_36 = arith.constant 1.000000e+00 : f32
    %128 = vector.broadcast %cst_36 : f32 to vector<2x32xf32>
    %129 = arith.addf %128, %127 : vector<2x32xf32>
    %130 = arith.divf %128, %129 : vector<2x32xf32>
    %131 = vector.extract_strided_slice %118 {offsets = [0, 64], sizes = [2, 32], strides = [1, 1]} : vector<2x128xf32> to vector<2x32xf32>
    %132 = math.tanh %131 : vector<2x32xf32>
    %133 = vector.extract_strided_slice %118 {offsets = [0, 96], sizes = [2, 32], strides = [1, 1]} : vector<2x128xf32> to vector<2x32xf32>
    %134 = arith.negf %133 : vector<2x32xf32>
    %135 = math.exp %134 : vector<2x32xf32>
    %cst_37 = arith.constant 1.000000e+00 : f32
    %136 = vector.broadcast %cst_37 : f32 to vector<2x32xf32>
    %137 = arith.addf %136, %135 : vector<2x32xf32>
    %138 = arith.divf %136, %137 : vector<2x32xf32>
    %139 = arith.mulf %130, %112 : vector<2x32xf32>
    %140 = arith.mulf %124, %132 : vector<2x32xf32>
    %141 = arith.addf %139, %140 : vector<2x32xf32>
    %142 = math.tanh %141 : vector<2x32xf32>
    %143 = arith.mulf %138, %142 : vector<2x32xf32>
    %c6 = arith.constant 6 : index
    %c0_38 = arith.constant 0 : index
    %144 = vector.load %arg18[%c6, %c0_38] : memref<16x32xf32, #tpu.memory_space<vmem>>, vector<2x32xf32>
    tpu.vector_store %arg18[%c6, %c0_38], %143 {strides = array<i32>} : memref<16x32xf32, #tpu.memory_space<vmem>>, vector<2x32xf32>,
    %145 = vector.extract_strided_slice %24 {offsets = [8, 0], sizes = [2, 128], strides = [1, 1]} : vector<16x128xf32> to vector<2x128xf32>
    %cst_39 = arith.constant dense<0.000000e+00> : vector<2x128xf32>
    %146 = tpu.matmul %143, %20, %cst_39 {dimension_numbers = #tpu.dot_dimension_numbers<[1], [0], [0], [1], [0, 0, 1, 1], [], []>} : vector<2x32xf32>, vector<32x128xf32>, vector<2x128xf32> -> vector<2x128xf32>
    %147 = arith.addf %145, %146 : vector<2x128xf32>
    %148 = vector.extract_strided_slice %147 {offsets = [0, 0], sizes = [2, 32], strides = [1, 1]} : vector<2x128xf32> to vector<2x32xf32>
    %149 = arith.negf %148 : vector<2x32xf32>
    %150 = math.exp %149 : vector<2x32xf32>
    %cst_40 = arith.constant 1.000000e+00 : f32
    %151 = vector.broadcast %cst_40 : f32 to vector<2x32xf32>
    %152 = arith.addf %151, %150 : vector<2x32xf32>
    %153 = arith.divf %151, %152 : vector<2x32xf32>
    %154 = vector.extract_strided_slice %147 {offsets = [0, 32], sizes = [2, 32], strides = [1, 1]} : vector<2x128xf32> to vector<2x32xf32>
    %155 = arith.negf %154 : vector<2x32xf32>
    %156 = math.exp %155 : vector<2x32xf32>
    %cst_41 = arith.constant 1.000000e+00 : f32
    %157 = vector.broadcast %cst_41 : f32 to vector<2x32xf32>
    %158 = arith.addf %157, %156 : vector<2x32xf32>
    %159 = arith.divf %157, %158 : vector<2x32xf32>
    %160 = vector.extract_strided_slice %147 {offsets = [0, 64], sizes = [2, 32], strides = [1, 1]} : vector<2x128xf32> to vector<2x32xf32>
    %161 = math.tanh %160 : vector<2x32xf32>
    %162 = vector.extract_strided_slice %147 {offsets = [0, 96], sizes = [2, 32], strides = [1, 1]} : vector<2x128xf32> to vector<2x32xf32>
    %163 = arith.negf %162 : vector<2x32xf32>
    %164 = math.exp %163 : vector<2x32xf32>
    %cst_42 = arith.constant 1.000000e+00 : f32
    %165 = vector.broadcast %cst_42 : f32 to vector<2x32xf32>
    %166 = arith.addf %165, %164 : vector<2x32xf32>
    %167 = arith.divf %165, %166 : vector<2x32xf32>
    %168 = arith.mulf %159, %141 : vector<2x32xf32>
    %169 = arith.mulf %153, %161 : vector<2x32xf32>
    %170 = arith.addf %168, %169 : vector<2x32xf32>
    %171 = math.tanh %170 : vector<2x32xf32>
    %172 = arith.mulf %167, %171 : vector<2x32xf32>
    %c8 = arith.constant 8 : index
    %c0_43 = arith.constant 0 : index
    %173 = vector.load %arg18[%c8, %c0_43] : memref<16x32xf32, #tpu.memory_space<vmem>>, vector<2x32xf32>
    tpu.vector_store %arg18[%c8, %c0_43], %172 {strides = array<i32>} : memref<16x32xf32, #tpu.memory_space<vmem>>, vector<2x32xf32>,
    %174 = vector.extract_strided_slice %24 {offsets = [10, 0], sizes = [2, 128], strides = [1, 1]} : vector<16x128xf32> to vector<2x128xf32>
    %cst_44 = arith.constant dense<0.000000e+00> : vector<2x128xf32>
    %175 = tpu.matmul %172, %20, %cst_44 {dimension_numbers = #tpu.dot_dimension_numbers<[1], [0], [0], [1], [0, 0, 1, 1], [], []>} : vector<2x32xf32>, vector<32x128xf32>, vector<2x128xf32> -> vector<2x128xf32>
    %176 = arith.addf %174, %175 : vector<2x128xf32>
    %177 = vector.extract_strided_slice %176 {offsets = [0, 0], sizes = [2, 32], strides = [1, 1]} : vector<2x128xf32> to vector<2x32xf32>
    %178 = arith.negf %177 : vector<2x32xf32>
    %179 = math.exp %178 : vector<2x32xf32>
    %cst_45 = arith.constant 1.000000e+00 : f32
    %180 = vector.broadcast %cst_45 : f32 to vector<2x32xf32>
    %181 = arith.addf %180, %179 : vector<2x32xf32>
    %182 = arith.divf %180, %181 : vector<2x32xf32>
    %183 = vector.extract_strided_slice %176 {offsets = [0, 32], sizes = [2, 32], strides = [1, 1]} : vector<2x128xf32> to vector<2x32xf32>
    %184 = arith.negf %183 : vector<2x32xf32>
    %185 = math.exp %184 : vector<2x32xf32>
    %cst_46 = arith.constant 1.000000e+00 : f32
    %186 = vector.broadcast %cst_46 : f32 to vector<2x32xf32>
    %187 = arith.addf %186, %185 : vector<2x32xf32>
    %188 = arith.divf %186, %187 : vector<2x32xf32>
    %189 = vector.extract_strided_slice %176 {offsets = [0, 64], sizes = [2, 32], strides = [1, 1]} : vector<2x128xf32> to vector<2x32xf32>
    %190 = math.tanh %189 : vector<2x32xf32>
    %191 = vector.extract_strided_slice %176 {offsets = [0, 96], sizes = [2, 32], strides = [1, 1]} : vector<2x128xf32> to vector<2x32xf32>
    %192 = arith.negf %191 : vector<2x32xf32>
    %193 = math.exp %192 : vector<2x32xf32>
    %cst_47 = arith.constant 1.000000e+00 : f32
    %194 = vector.broadcast %cst_47 : f32 to vector<2x32xf32>
    %195 = arith.addf %194, %193 : vector<2x32xf32>
    %196 = arith.divf %194, %195 : vector<2x32xf32>
    %197 = arith.mulf %188, %170 : vector<2x32xf32>
    %198 = arith.mulf %182, %190 : vector<2x32xf32>
    %199 = arith.addf %197, %198 : vector<2x32xf32>
    %200 = math.tanh %199 : vector<2x32xf32>
    %201 = arith.mulf %196, %200 : vector<2x32xf32>
    %c10 = arith.constant 10 : index
    %c0_48 = arith.constant 0 : index
    %202 = vector.load %arg18[%c10, %c0_48] : memref<16x32xf32, #tpu.memory_space<vmem>>, vector<2x32xf32>
    tpu.vector_store %arg18[%c10, %c0_48], %201 {strides = array<i32>} : memref<16x32xf32, #tpu.memory_space<vmem>>, vector<2x32xf32>,
    %203 = vector.extract_strided_slice %24 {offsets = [12, 0], sizes = [2, 128], strides = [1, 1]} : vector<16x128xf32> to vector<2x128xf32>
    %cst_49 = arith.constant dense<0.000000e+00> : vector<2x128xf32>
    %204 = tpu.matmul %201, %20, %cst_49 {dimension_numbers = #tpu.dot_dimension_numbers<[1], [0], [0], [1], [0, 0, 1, 1], [], []>} : vector<2x32xf32>, vector<32x128xf32>, vector<2x128xf32> -> vector<2x128xf32>
    %205 = arith.addf %203, %204 : vector<2x128xf32>
    %206 = vector.extract_strided_slice %205 {offsets = [0, 0], sizes = [2, 32], strides = [1, 1]} : vector<2x128xf32> to vector<2x32xf32>
    %207 = arith.negf %206 : vector<2x32xf32>
    %208 = math.exp %207 : vector<2x32xf32>
    %cst_50 = arith.constant 1.000000e+00 : f32
    %209 = vector.broadcast %cst_50 : f32 to vector<2x32xf32>
    %210 = arith.addf %209, %208 : vector<2x32xf32>
    %211 = arith.divf %209, %210 : vector<2x32xf32>
    %212 = vector.extract_strided_slice %205 {offsets = [0, 32], sizes = [2, 32], strides = [1, 1]} : vector<2x128xf32> to vector<2x32xf32>
    %213 = arith.negf %212 : vector<2x32xf32>
    %214 = math.exp %213 : vector<2x32xf32>
    %cst_51 = arith.constant 1.000000e+00 : f32
    %215 = vector.broadcast %cst_51 : f32 to vector<2x32xf32>
    %216 = arith.addf %215, %214 : vector<2x32xf32>
    %217 = arith.divf %215, %216 : vector<2x32xf32>
    %218 = vector.extract_strided_slice %205 {offsets = [0, 64], sizes = [2, 32], strides = [1, 1]} : vector<2x128xf32> to vector<2x32xf32>
    %219 = math.tanh %218 : vector<2x32xf32>
    %220 = vector.extract_strided_slice %205 {offsets = [0, 96], sizes = [2, 32], strides = [1, 1]} : vector<2x128xf32> to vector<2x32xf32>
    %221 = arith.negf %220 : vector<2x32xf32>
    %222 = math.exp %221 : vector<2x32xf32>
    %cst_52 = arith.constant 1.000000e+00 : f32
    %223 = vector.broadcast %cst_52 : f32 to vector<2x32xf32>
    %224 = arith.addf %223, %222 : vector<2x32xf32>
    %225 = arith.divf %223, %224 : vector<2x32xf32>
    %226 = arith.mulf %217, %199 : vector<2x32xf32>
    %227 = arith.mulf %211, %219 : vector<2x32xf32>
    %228 = arith.addf %226, %227 : vector<2x32xf32>
    %229 = math.tanh %228 : vector<2x32xf32>
    %230 = arith.mulf %225, %229 : vector<2x32xf32>
    %c12 = arith.constant 12 : index
    %c0_53 = arith.constant 0 : index
    %231 = vector.load %arg18[%c12, %c0_53] : memref<16x32xf32, #tpu.memory_space<vmem>>, vector<2x32xf32>
    tpu.vector_store %arg18[%c12, %c0_53], %230 {strides = array<i32>} : memref<16x32xf32, #tpu.memory_space<vmem>>, vector<2x32xf32>,
    %232 = vector.extract_strided_slice %24 {offsets = [14, 0], sizes = [2, 128], strides = [1, 1]} : vector<16x128xf32> to vector<2x128xf32>
    %cst_54 = arith.constant dense<0.000000e+00> : vector<2x128xf32>
    %233 = tpu.matmul %230, %20, %cst_54 {dimension_numbers = #tpu.dot_dimension_numbers<[1], [0], [0], [1], [0, 0, 1, 1], [], []>} : vector<2x32xf32>, vector<32x128xf32>, vector<2x128xf32> -> vector<2x128xf32>
    %234 = arith.addf %232, %233 : vector<2x128xf32>
    %235 = vector.extract_strided_slice %234 {offsets = [0, 0], sizes = [2, 32], strides = [1, 1]} : vector<2x128xf32> to vector<2x32xf32>
    %236 = arith.negf %235 : vector<2x32xf32>
    %237 = math.exp %236 : vector<2x32xf32>
    %cst_55 = arith.constant 1.000000e+00 : f32
    %238 = vector.broadcast %cst_55 : f32 to vector<2x32xf32>
    %239 = arith.addf %238, %237 : vector<2x32xf32>
    %240 = arith.divf %238, %239 : vector<2x32xf32>
    %241 = vector.extract_strided_slice %234 {offsets = [0, 32], sizes = [2, 32], strides = [1, 1]} : vector<2x128xf32> to vector<2x32xf32>
    %242 = arith.negf %241 : vector<2x32xf32>
    %243 = math.exp %242 : vector<2x32xf32>
    %cst_56 = arith.constant 1.000000e+00 : f32
    %244 = vector.broadcast %cst_56 : f32 to vector<2x32xf32>
    %245 = arith.addf %244, %243 : vector<2x32xf32>
    %246 = arith.divf %244, %245 : vector<2x32xf32>
    %247 = vector.extract_strided_slice %234 {offsets = [0, 64], sizes = [2, 32], strides = [1, 1]} : vector<2x128xf32> to vector<2x32xf32>
    %248 = math.tanh %247 : vector<2x32xf32>
    %249 = vector.extract_strided_slice %234 {offsets = [0, 96], sizes = [2, 32], strides = [1, 1]} : vector<2x128xf32> to vector<2x32xf32>
    %250 = arith.negf %249 : vector<2x32xf32>
    %251 = math.exp %250 : vector<2x32xf32>
    %cst_57 = arith.constant 1.000000e+00 : f32
    %252 = vector.broadcast %cst_57 : f32 to vector<2x32xf32>
    %253 = arith.addf %252, %251 : vector<2x32xf32>
    %254 = arith.divf %252, %253 : vector<2x32xf32>
    %255 = arith.mulf %246, %228 : vector<2x32xf32>
    %256 = arith.mulf %240, %248 : vector<2x32xf32>
    %257 = arith.addf %255, %256 : vector<2x32xf32>
    %258 = math.tanh %257 : vector<2x32xf32>
    %259 = arith.mulf %254, %258 : vector<2x32xf32>
    %c14 = arith.constant 14 : index
    %c0_58 = arith.constant 0 : index
    %260 = vector.load %arg18[%c14, %c0_58] : memref<16x32xf32, #tpu.memory_space<vmem>>, vector<2x32xf32>
    tpu.vector_store %arg18[%c14, %c0_58], %259 {strides = array<i32>} : memref<16x32xf32, #tpu.memory_space<vmem>>, vector<2x32xf32>,
    %c0_59 = arith.constant 0 : index
    %c0_60 = arith.constant 0 : index
    %261 = vector.load %arg18[%c0_59, %c0_60] : memref<16x32xf32, #tpu.memory_space<vmem>>, vector<16x32xf32>
    %c0_61 = arith.constant 0 : index
    %c0_62 = arith.constant 0 : index
    %262 = vector.load %arg7[%c0_61, %c0_62] : memref<32x128xf32, #tpu.memory_space<vmem>>, vector<32x128xf32>
    %c0_63 = arith.constant 0 : index
    %c0_64 = arith.constant 0 : index
    %263 = vector.load %arg8[%c0_63, %c0_64] : memref<32x128xf32, #tpu.memory_space<vmem>>, vector<32x128xf32>
    %c0_65 = arith.constant 0 : index
    %c0_66 = arith.constant 0 : index
    %264 = vector.load %arg9[%c0_65, %c0_66] : memref<1x128xf32, #tpu.memory_space<vmem>>, vector<1x128xf32>
    %cst_67 = arith.constant dense<0.000000e+00> : vector<16x128xf32>
    %265 = tpu.matmul %261, %262, %cst_67 {dimension_numbers = #tpu.dot_dimension_numbers<[1], [0], [0], [1], [0, 0, 1, 1], [], []>} : vector<16x32xf32>, vector<32x128xf32>, vector<16x128xf32> -> vector<16x128xf32>
    %266 = vector.broadcast %264 : vector<1x128xf32> to vector<16x128xf32>
    %267 = arith.addf %265, %266 : vector<16x128xf32>
    %c1 = arith.constant 1 : index
    %c0_68 = arith.constant 0 : index
    %c0_69 = arith.constant 0 : index
    %268 = vector.load %arg2[%c1, %c0_68, %c0_69] : memref<2x2x32xf32, #tpu.memory_space<vmem>>, vector<1x2x32xf32>
    %269 = vector.shape_cast %268 : vector<1x2x32xf32> to vector<2x32xf32>
    %c1_70 = arith.constant 1 : index
    %c0_71 = arith.constant 0 : index
    %c0_72 = arith.constant 0 : index
    %270 = vector.load %arg3[%c1_70, %c0_71, %c0_72] : memref<2x2x32xf32, #tpu.memory_space<vmem>>, vector<1x2x32xf32>
    %271 = vector.shape_cast %270 : vector<1x2x32xf32> to vector<2x32xf32>
    %272 = vector.extract_strided_slice %267 {offsets = [0, 0], sizes = [2, 128], strides = [1, 1]} : vector<16x128xf32> to vector<2x128xf32>
    %cst_73 = arith.constant dense<0.000000e+00> : vector<2x128xf32>
    %273 = tpu.matmul %269, %263, %cst_73 {dimension_numbers = #tpu.dot_dimension_numbers<[1], [0], [0], [1], [0, 0, 1, 1], [], []>} : vector<2x32xf32>, vector<32x128xf32>, vector<2x128xf32> -> vector<2x128xf32>
    %274 = arith.addf %272, %273 : vector<2x128xf32>
    %275 = vector.extract_strided_slice %274 {offsets = [0, 0], sizes = [2, 32], strides = [1, 1]} : vector<2x128xf32> to vector<2x32xf32>
    %276 = arith.negf %275 : vector<2x32xf32>
    %277 = math.exp %276 : vector<2x32xf32>
    %cst_74 = arith.constant 1.000000e+00 : f32
    %278 = vector.broadcast %cst_74 : f32 to vector<2x32xf32>
    %279 = arith.addf %278, %277 : vector<2x32xf32>
    %280 = arith.divf %278, %279 : vector<2x32xf32>
    %281 = vector.extract_strided_slice %274 {offsets = [0, 32], sizes = [2, 32], strides = [1, 1]} : vector<2x128xf32> to vector<2x32xf32>
    %282 = arith.negf %281 : vector<2x32xf32>
    %283 = math.exp %282 : vector<2x32xf32>
    %cst_75 = arith.constant 1.000000e+00 : f32
    %284 = vector.broadcast %cst_75 : f32 to vector<2x32xf32>
    %285 = arith.addf %284, %283 : vector<2x32xf32>
    %286 = arith.divf %284, %285 : vector<2x32xf32>
    %287 = vector.extract_strided_slice %274 {offsets = [0, 64], sizes = [2, 32], strides = [1, 1]} : vector<2x128xf32> to vector<2x32xf32>
    %288 = math.tanh %287 : vector<2x32xf32>
    %289 = vector.extract_strided_slice %274 {offsets = [0, 96], sizes = [2, 32], strides = [1, 1]} : vector<2x128xf32> to vector<2x32xf32>
    %290 = arith.negf %289 : vector<2x32xf32>
    %291 = math.exp %290 : vector<2x32xf32>
    %cst_76 = arith.constant 1.000000e+00 : f32
    %292 = vector.broadcast %cst_76 : f32 to vector<2x32xf32>
    %293 = arith.addf %292, %291 : vector<2x32xf32>
    %294 = arith.divf %292, %293 : vector<2x32xf32>
    %295 = arith.mulf %286, %271 : vector<2x32xf32>
    %296 = arith.mulf %280, %288 : vector<2x32xf32>
    %297 = arith.addf %295, %296 : vector<2x32xf32>
    %298 = math.tanh %297 : vector<2x32xf32>
    %299 = arith.mulf %294, %298 : vector<2x32xf32>
    %300 = vector.extract_strided_slice %267 {offsets = [2, 0], sizes = [2, 128], strides = [1, 1]} : vector<16x128xf32> to vector<2x128xf32>
    %cst_77 = arith.constant dense<0.000000e+00> : vector<2x128xf32>
    %301 = tpu.matmul %299, %263, %cst_77 {dimension_numbers = #tpu.dot_dimension_numbers<[1], [0], [0], [1], [0, 0, 1, 1], [], []>} : vector<2x32xf32>, vector<32x128xf32>, vector<2x128xf32> -> vector<2x128xf32>
    %302 = arith.addf %300, %301 : vector<2x128xf32>
    %303 = vector.extract_strided_slice %302 {offsets = [0, 0], sizes = [2, 32], strides = [1, 1]} : vector<2x128xf32> to vector<2x32xf32>
    %304 = arith.negf %303 : vector<2x32xf32>
    %305 = math.exp %304 : vector<2x32xf32>
    %cst_78 = arith.constant 1.000000e+00 : f32
    %306 = vector.broadcast %cst_78 : f32 to vector<2x32xf32>
    %307 = arith.addf %306, %305 : vector<2x32xf32>
    %308 = arith.divf %306, %307 : vector<2x32xf32>
    %309 = vector.extract_strided_slice %302 {offsets = [0, 32], sizes = [2, 32], strides = [1, 1]} : vector<2x128xf32> to vector<2x32xf32>
    %310 = arith.negf %309 : vector<2x32xf32>
    %311 = math.exp %310 : vector<2x32xf32>
    %cst_79 = arith.constant 1.000000e+00 : f32
    %312 = vector.broadcast %cst_79 : f32 to vector<2x32xf32>
    %313 = arith.addf %312, %311 : vector<2x32xf32>
    %314 = arith.divf %312, %313 : vector<2x32xf32>
    %315 = vector.extract_strided_slice %302 {offsets = [0, 64], sizes = [2, 32], strides = [1, 1]} : vector<2x128xf32> to vector<2x32xf32>
    %316 = math.tanh %315 : vector<2x32xf32>
    %317 = vector.extract_strided_slice %302 {offsets = [0, 96], sizes = [2, 32], strides = [1, 1]} : vector<2x128xf32> to vector<2x32xf32>
    %318 = arith.negf %317 : vector<2x32xf32>
    %319 = math.exp %318 : vector<2x32xf32>
    %cst_80 = arith.constant 1.000000e+00 : f32
    %320 = vector.broadcast %cst_80 : f32 to vector<2x32xf32>
    %321 = arith.addf %320, %319 : vector<2x32xf32>
    %322 = arith.divf %320, %321 : vector<2x32xf32>
    %323 = arith.mulf %314, %297 : vector<2x32xf32>
    %324 = arith.mulf %308, %316 : vector<2x32xf32>
    %325 = arith.addf %323, %324 : vector<2x32xf32>
    %326 = math.tanh %325 : vector<2x32xf32>
    %327 = arith.mulf %322, %326 : vector<2x32xf32>
    %328 = vector.extract_strided_slice %267 {offsets = [4, 0], sizes = [2, 128], strides = [1, 1]} : vector<16x128xf32> to vector<2x128xf32>
    %cst_81 = arith.constant dense<0.000000e+00> : vector<2x128xf32>
    %329 = tpu.matmul %327, %263, %cst_81 {dimension_numbers = #tpu.dot_dimension_numbers<[1], [0], [0], [1], [0, 0, 1, 1], [], []>} : vector<2x32xf32>, vector<32x128xf32>, vector<2x128xf32> -> vector<2x128xf32>
    %330 = arith.addf %328, %329 : vector<2x128xf32>
    %331 = vector.extract_strided_slice %330 {offsets = [0, 0], sizes = [2, 32], strides = [1, 1]} : vector<2x128xf32> to vector<2x32xf32>
    %332 = arith.negf %331 : vector<2x32xf32>
    %333 = math.exp %332 : vector<2x32xf32>
    %cst_82 = arith.constant 1.000000e+00 : f32
    %334 = vector.broadcast %cst_82 : f32 to vector<2x32xf32>
    %335 = arith.addf %334, %333 : vector<2x32xf32>
    %336 = arith.divf %334, %335 : vector<2x32xf32>
    %337 = vector.extract_strided_slice %330 {offsets = [0, 32], sizes = [2, 32], strides = [1, 1]} : vector<2x128xf32> to vector<2x32xf32>
    %338 = arith.negf %337 : vector<2x32xf32>
    %339 = math.exp %338 : vector<2x32xf32>
    %cst_83 = arith.constant 1.000000e+00 : f32
    %340 = vector.broadcast %cst_83 : f32 to vector<2x32xf32>
    %341 = arith.addf %340, %339 : vector<2x32xf32>
    %342 = arith.divf %340, %341 : vector<2x32xf32>
    %343 = vector.extract_strided_slice %330 {offsets = [0, 64], sizes = [2, 32], strides = [1, 1]} : vector<2x128xf32> to vector<2x32xf32>
    %344 = math.tanh %343 : vector<2x32xf32>
    %345 = vector.extract_strided_slice %330 {offsets = [0, 96], sizes = [2, 32], strides = [1, 1]} : vector<2x128xf32> to vector<2x32xf32>
    %346 = arith.negf %345 : vector<2x32xf32>
    %347 = math.exp %346 : vector<2x32xf32>
    %cst_84 = arith.constant 1.000000e+00 : f32
    %348 = vector.broadcast %cst_84 : f32 to vector<2x32xf32>
    %349 = arith.addf %348, %347 : vector<2x32xf32>
    %350 = arith.divf %348, %349 : vector<2x32xf32>
    %351 = arith.mulf %342, %325 : vector<2x32xf32>
    %352 = arith.mulf %336, %344 : vector<2x32xf32>
    %353 = arith.addf %351, %352 : vector<2x32xf32>
    %354 = math.tanh %353 : vector<2x32xf32>
    %355 = arith.mulf %350, %354 : vector<2x32xf32>
    %356 = vector.extract_strided_slice %267 {offsets = [6, 0], sizes = [2, 128], strides = [1, 1]} : vector<16x128xf32> to vector<2x128xf32>
    %cst_85 = arith.constant dense<0.000000e+00> : vector<2x128xf32>
    %357 = tpu.matmul %355, %263, %cst_85 {dimension_numbers = #tpu.dot_dimension_numbers<[1], [0], [0], [1], [0, 0, 1, 1], [], []>} : vector<2x32xf32>, vector<32x128xf32>, vector<2x128xf32> -> vector<2x128xf32>
    %358 = arith.addf %356, %357 : vector<2x128xf32>
    %359 = vector.extract_strided_slice %358 {offsets = [0, 0], sizes = [2, 32], strides = [1, 1]} : vector<2x128xf32> to vector<2x32xf32>
    %360 = arith.negf %359 : vector<2x32xf32>
    %361 = math.exp %360 : vector<2x32xf32>
    %cst_86 = arith.constant 1.000000e+00 : f32
    %362 = vector.broadcast %cst_86 : f32 to vector<2x32xf32>
    %363 = arith.addf %362, %361 : vector<2x32xf32>
    %364 = arith.divf %362, %363 : vector<2x32xf32>
    %365 = vector.extract_strided_slice %358 {offsets = [0, 32], sizes = [2, 32], strides = [1, 1]} : vector<2x128xf32> to vector<2x32xf32>
    %366 = arith.negf %365 : vector<2x32xf32>
    %367 = math.exp %366 : vector<2x32xf32>
    %cst_87 = arith.constant 1.000000e+00 : f32
    %368 = vector.broadcast %cst_87 : f32 to vector<2x32xf32>
    %369 = arith.addf %368, %367 : vector<2x32xf32>
    %370 = arith.divf %368, %369 : vector<2x32xf32>
    %371 = vector.extract_strided_slice %358 {offsets = [0, 64], sizes = [2, 32], strides = [1, 1]} : vector<2x128xf32> to vector<2x32xf32>
    %372 = math.tanh %371 : vector<2x32xf32>
    %373 = vector.extract_strided_slice %358 {offsets = [0, 96], sizes = [2, 32], strides = [1, 1]} : vector<2x128xf32> to vector<2x32xf32>
    %374 = arith.negf %373 : vector<2x32xf32>
    %375 = math.exp %374 : vector<2x32xf32>
    %cst_88 = arith.constant 1.000000e+00 : f32
    %376 = vector.broadcast %cst_88 : f32 to vector<2x32xf32>
    %377 = arith.addf %376, %375 : vector<2x32xf32>
    %378 = arith.divf %376, %377 : vector<2x32xf32>
    %379 = arith.mulf %370, %353 : vector<2x32xf32>
    %380 = arith.mulf %364, %372 : vector<2x32xf32>
    %381 = arith.addf %379, %380 : vector<2x32xf32>
    %382 = math.tanh %381 : vector<2x32xf32>
    %383 = arith.mulf %378, %382 : vector<2x32xf32>
    %384 = vector.extract_strided_slice %267 {offsets = [8, 0], sizes = [2, 128], strides = [1, 1]} : vector<16x128xf32> to vector<2x128xf32>
    %cst_89 = arith.constant dense<0.000000e+00> : vector<2x128xf32>
    %385 = tpu.matmul %383, %263, %cst_89 {dimension_numbers = #tpu.dot_dimension_numbers<[1], [0], [0], [1], [0, 0, 1, 1], [], []>} : vector<2x32xf32>, vector<32x128xf32>, vector<2x128xf32> -> vector<2x128xf32>
    %386 = arith.addf %384, %385 : vector<2x128xf32>
    %387 = vector.extract_strided_slice %386 {offsets = [0, 0], sizes = [2, 32], strides = [1, 1]} : vector<2x128xf32> to vector<2x32xf32>
    %388 = arith.negf %387 : vector<2x32xf32>
    %389 = math.exp %388 : vector<2x32xf32>
    %cst_90 = arith.constant 1.000000e+00 : f32
    %390 = vector.broadcast %cst_90 : f32 to vector<2x32xf32>
    %391 = arith.addf %390, %389 : vector<2x32xf32>
    %392 = arith.divf %390, %391 : vector<2x32xf32>
    %393 = vector.extract_strided_slice %386 {offsets = [0, 32], sizes = [2, 32], strides = [1, 1]} : vector<2x128xf32> to vector<2x32xf32>
    %394 = arith.negf %393 : vector<2x32xf32>
    %395 = math.exp %394 : vector<2x32xf32>
    %cst_91 = arith.constant 1.000000e+00 : f32
    %396 = vector.broadcast %cst_91 : f32 to vector<2x32xf32>
    %397 = arith.addf %396, %395 : vector<2x32xf32>
    %398 = arith.divf %396, %397 : vector<2x32xf32>
    %399 = vector.extract_strided_slice %386 {offsets = [0, 64], sizes = [2, 32], strides = [1, 1]} : vector<2x128xf32> to vector<2x32xf32>
    %400 = math.tanh %399 : vector<2x32xf32>
    %401 = vector.extract_strided_slice %386 {offsets = [0, 96], sizes = [2, 32], strides = [1, 1]} : vector<2x128xf32> to vector<2x32xf32>
    %402 = arith.negf %401 : vector<2x32xf32>
    %403 = math.exp %402 : vector<2x32xf32>
    %cst_92 = arith.constant 1.000000e+00 : f32
    %404 = vector.broadcast %cst_92 : f32 to vector<2x32xf32>
    %405 = arith.addf %404, %403 : vector<2x32xf32>
    %406 = arith.divf %404, %405 : vector<2x32xf32>
    %407 = arith.mulf %398, %381 : vector<2x32xf32>
    %408 = arith.mulf %392, %400 : vector<2x32xf32>
    %409 = arith.addf %407, %408 : vector<2x32xf32>
    %410 = math.tanh %409 : vector<2x32xf32>
    %411 = arith.mulf %406, %410 : vector<2x32xf32>
    %412 = vector.extract_strided_slice %267 {offsets = [10, 0], sizes = [2, 128], strides = [1, 1]} : vector<16x128xf32> to vector<2x128xf32>
    %cst_93 = arith.constant dense<0.000000e+00> : vector<2x128xf32>
    %413 = tpu.matmul %411, %263, %cst_93 {dimension_numbers = #tpu.dot_dimension_numbers<[1], [0], [0], [1], [0, 0, 1, 1], [], []>} : vector<2x32xf32>, vector<32x128xf32>, vector<2x128xf32> -> vector<2x128xf32>
    %414 = arith.addf %412, %413 : vector<2x128xf32>
    %415 = vector.extract_strided_slice %414 {offsets = [0, 0], sizes = [2, 32], strides = [1, 1]} : vector<2x128xf32> to vector<2x32xf32>
    %416 = arith.negf %415 : vector<2x32xf32>
    %417 = math.exp %416 : vector<2x32xf32>
    %cst_94 = arith.constant 1.000000e+00 : f32
    %418 = vector.broadcast %cst_94 : f32 to vector<2x32xf32>
    %419 = arith.addf %418, %417 : vector<2x32xf32>
    %420 = arith.divf %418, %419 : vector<2x32xf32>
    %421 = vector.extract_strided_slice %414 {offsets = [0, 32], sizes = [2, 32], strides = [1, 1]} : vector<2x128xf32> to vector<2x32xf32>
    %422 = arith.negf %421 : vector<2x32xf32>
    %423 = math.exp %422 : vector<2x32xf32>
    %cst_95 = arith.constant 1.000000e+00 : f32
    %424 = vector.broadcast %cst_95 : f32 to vector<2x32xf32>
    %425 = arith.addf %424, %423 : vector<2x32xf32>
    %426 = arith.divf %424, %425 : vector<2x32xf32>
    %427 = vector.extract_strided_slice %414 {offsets = [0, 64], sizes = [2, 32], strides = [1, 1]} : vector<2x128xf32> to vector<2x32xf32>
    %428 = math.tanh %427 : vector<2x32xf32>
    %429 = vector.extract_strided_slice %414 {offsets = [0, 96], sizes = [2, 32], strides = [1, 1]} : vector<2x128xf32> to vector<2x32xf32>
    %430 = arith.negf %429 : vector<2x32xf32>
    %431 = math.exp %430 : vector<2x32xf32>
    %cst_96 = arith.constant 1.000000e+00 : f32
    %432 = vector.broadcast %cst_96 : f32 to vector<2x32xf32>
    %433 = arith.addf %432, %431 : vector<2x32xf32>
    %434 = arith.divf %432, %433 : vector<2x32xf32>
    %435 = arith.mulf %426, %409 : vector<2x32xf32>
    %436 = arith.mulf %420, %428 : vector<2x32xf32>
    %437 = arith.addf %435, %436 : vector<2x32xf32>
    %438 = math.tanh %437 : vector<2x32xf32>
    %439 = arith.mulf %434, %438 : vector<2x32xf32>
    %440 = vector.extract_strided_slice %267 {offsets = [12, 0], sizes = [2, 128], strides = [1, 1]} : vector<16x128xf32> to vector<2x128xf32>
    %cst_97 = arith.constant dense<0.000000e+00> : vector<2x128xf32>
    %441 = tpu.matmul %439, %263, %cst_97 {dimension_numbers = #tpu.dot_dimension_numbers<[1], [0], [0], [1], [0, 0, 1, 1], [], []>} : vector<2x32xf32>, vector<32x128xf32>, vector<2x128xf32> -> vector<2x128xf32>
    %442 = arith.addf %440, %441 : vector<2x128xf32>
    %443 = vector.extract_strided_slice %442 {offsets = [0, 0], sizes = [2, 32], strides = [1, 1]} : vector<2x128xf32> to vector<2x32xf32>
    %444 = arith.negf %443 : vector<2x32xf32>
    %445 = math.exp %444 : vector<2x32xf32>
    %cst_98 = arith.constant 1.000000e+00 : f32
    %446 = vector.broadcast %cst_98 : f32 to vector<2x32xf32>
    %447 = arith.addf %446, %445 : vector<2x32xf32>
    %448 = arith.divf %446, %447 : vector<2x32xf32>
    %449 = vector.extract_strided_slice %442 {offsets = [0, 32], sizes = [2, 32], strides = [1, 1]} : vector<2x128xf32> to vector<2x32xf32>
    %450 = arith.negf %449 : vector<2x32xf32>
    %451 = math.exp %450 : vector<2x32xf32>
    %cst_99 = arith.constant 1.000000e+00 : f32
    %452 = vector.broadcast %cst_99 : f32 to vector<2x32xf32>
    %453 = arith.addf %452, %451 : vector<2x32xf32>
    %454 = arith.divf %452, %453 : vector<2x32xf32>
    %455 = vector.extract_strided_slice %442 {offsets = [0, 64], sizes = [2, 32], strides = [1, 1]} : vector<2x128xf32> to vector<2x32xf32>
    %456 = math.tanh %455 : vector<2x32xf32>
    %457 = vector.extract_strided_slice %442 {offsets = [0, 96], sizes = [2, 32], strides = [1, 1]} : vector<2x128xf32> to vector<2x32xf32>
    %458 = arith.negf %457 : vector<2x32xf32>
    %459 = math.exp %458 : vector<2x32xf32>
    %cst_100 = arith.constant 1.000000e+00 : f32
    %460 = vector.broadcast %cst_100 : f32 to vector<2x32xf32>
    %461 = arith.addf %460, %459 : vector<2x32xf32>
    %462 = arith.divf %460, %461 : vector<2x32xf32>
    %463 = arith.mulf %454, %437 : vector<2x32xf32>
    %464 = arith.mulf %448, %456 : vector<2x32xf32>
    %465 = arith.addf %463, %464 : vector<2x32xf32>
    %466 = math.tanh %465 : vector<2x32xf32>
    %467 = arith.mulf %462, %466 : vector<2x32xf32>
    %468 = vector.extract_strided_slice %267 {offsets = [14, 0], sizes = [2, 128], strides = [1, 1]} : vector<16x128xf32> to vector<2x128xf32>
    %cst_101 = arith.constant dense<0.000000e+00> : vector<2x128xf32>
    %469 = tpu.matmul %467, %263, %cst_101 {dimension_numbers = #tpu.dot_dimension_numbers<[1], [0], [0], [1], [0, 0, 1, 1], [], []>} : vector<2x32xf32>, vector<32x128xf32>, vector<2x128xf32> -> vector<2x128xf32>
    %470 = arith.addf %468, %469 : vector<2x128xf32>
    %471 = vector.extract_strided_slice %470 {offsets = [0, 0], sizes = [2, 32], strides = [1, 1]} : vector<2x128xf32> to vector<2x32xf32>
    %472 = arith.negf %471 : vector<2x32xf32>
    %473 = math.exp %472 : vector<2x32xf32>
    %cst_102 = arith.constant 1.000000e+00 : f32
    %474 = vector.broadcast %cst_102 : f32 to vector<2x32xf32>
    %475 = arith.addf %474, %473 : vector<2x32xf32>
    %476 = arith.divf %474, %475 : vector<2x32xf32>
    %477 = vector.extract_strided_slice %470 {offsets = [0, 32], sizes = [2, 32], strides = [1, 1]} : vector<2x128xf32> to vector<2x32xf32>
    %478 = arith.negf %477 : vector<2x32xf32>
    %479 = math.exp %478 : vector<2x32xf32>
    %cst_103 = arith.constant 1.000000e+00 : f32
    %480 = vector.broadcast %cst_103 : f32 to vector<2x32xf32>
    %481 = arith.addf %480, %479 : vector<2x32xf32>
    %482 = arith.divf %480, %481 : vector<2x32xf32>
    %483 = vector.extract_strided_slice %470 {offsets = [0, 64], sizes = [2, 32], strides = [1, 1]} : vector<2x128xf32> to vector<2x32xf32>
    %484 = math.tanh %483 : vector<2x32xf32>
    %485 = vector.extract_strided_slice %470 {offsets = [0, 96], sizes = [2, 32], strides = [1, 1]} : vector<2x128xf32> to vector<2x32xf32>
    %486 = arith.negf %485 : vector<2x32xf32>
    %487 = math.exp %486 : vector<2x32xf32>
    %cst_104 = arith.constant 1.000000e+00 : f32
    %488 = vector.broadcast %cst_104 : f32 to vector<2x32xf32>
    %489 = arith.addf %488, %487 : vector<2x32xf32>
    %490 = arith.divf %488, %489 : vector<2x32xf32>
    %491 = arith.mulf %482, %465 : vector<2x32xf32>
    %492 = arith.mulf %476, %484 : vector<2x32xf32>
    %493 = arith.addf %491, %492 : vector<2x32xf32>
    %494 = math.tanh %493 : vector<2x32xf32>
    %495 = arith.mulf %490, %494 : vector<2x32xf32>
    %c0_105 = arith.constant 0 : index
    %c0_106 = arith.constant 0 : index
    %496 = vector.load %arg10[%c0_105, %c0_106] : memref<1x32xf32, #tpu.memory_space<vmem>>, vector<1x32xf32>
    %c0_107 = arith.constant 0 : index
    %c0_108 = arith.constant 0 : index
    %497 = vector.load %arg11[%c0_107, %c0_108] : memref<1x32xf32, #tpu.memory_space<vmem>>, vector<1x32xf32>
    %c0_109 = arith.constant 0 : index
    %c0_110 = arith.constant 0 : index
    %498 = vector.load %arg12[%c0_109, %c0_110] : memref<1x32xf32, #tpu.memory_space<vmem>>, vector<1x32xf32>
    %cst_111 = arith.constant dense<0.000000e+00> : vector<2xf32>
    %499 = vector.multi_reduction <add>, %299, %cst_111 [1] : vector<2x32xf32> to vector<2xf32>
    %500 = vector.shape_cast %499 : vector<2xf32> to vector<2x1xf32>
    %cst_112 = arith.constant 3.200000e+01 : f32
    %501 = vector.broadcast %cst_112 : f32 to vector<2x1xf32>
    %502 = arith.divf %500, %501 : vector<2x1xf32>
    %503 = vector.broadcast %502 : vector<2x1xf32> to vector<2x32xf32>
    %504 = arith.subf %299, %503 : vector<2x32xf32>
    %505 = arith.mulf %504, %504 : vector<2x32xf32>
    %cst_113 = arith.constant dense<0.000000e+00> : vector<2xf32>
    %506 = vector.multi_reduction <add>, %505, %cst_113 [1] : vector<2x32xf32> to vector<2xf32>
    %507 = vector.shape_cast %506 : vector<2xf32> to vector<2x1xf32>
    %cst_114 = arith.constant 3.200000e+01 : f32
    %508 = vector.broadcast %cst_114 : f32 to vector<2x1xf32>
    %509 = arith.divf %507, %508 : vector<2x1xf32>
    %510 = vector.broadcast %502 : vector<2x1xf32> to vector<2x32xf32>
    %511 = arith.subf %299, %510 : vector<2x32xf32>
    %cst_115 = arith.constant 9.99999974E-6 : f32
    %512 = vector.broadcast %cst_115 : f32 to vector<2x1xf32>
    %513 = arith.addf %509, %512 : vector<2x1xf32>
    %514 = math.rsqrt %513 : vector<2x1xf32>
    %515 = vector.broadcast %514 : vector<2x1xf32> to vector<2x32xf32>
    %516 = arith.mulf %511, %515 : vector<2x32xf32>
    %517 = vector.broadcast %496 : vector<1x32xf32> to vector<2x32xf32>
    %518 = arith.mulf %516, %517 : vector<2x32xf32>
    %519 = vector.broadcast %497 : vector<1x32xf32> to vector<2x32xf32>
    %520 = arith.addf %518, %519 : vector<2x32xf32>
    %521 = vector.broadcast %498 : vector<1x32xf32> to vector<2x32xf32>
    %522 = arith.mulf %520, %521 : vector<2x32xf32>
    %cst_116 = arith.constant dense<0.000000e+00> : vector<2xf32>
    %523 = vector.multi_reduction <add>, %522, %cst_116 [1] : vector<2x32xf32> to vector<2xf32>
    %524 = vector.shape_cast %523 : vector<2xf32> to vector<2x1xf32>
    %cst_117 = arith.constant dense<0.000000e+00> : vector<2xf32>
    %525 = vector.multi_reduction <add>, %327, %cst_117 [1] : vector<2x32xf32> to vector<2xf32>
    %526 = vector.shape_cast %525 : vector<2xf32> to vector<2x1xf32>
    %cst_118 = arith.constant 3.200000e+01 : f32
    %527 = vector.broadcast %cst_118 : f32 to vector<2x1xf32>
    %528 = arith.divf %526, %527 : vector<2x1xf32>
    %529 = vector.broadcast %528 : vector<2x1xf32> to vector<2x32xf32>
    %530 = arith.subf %327, %529 : vector<2x32xf32>
    %531 = arith.mulf %530, %530 : vector<2x32xf32>
    %cst_119 = arith.constant dense<0.000000e+00> : vector<2xf32>
    %532 = vector.multi_reduction <add>, %531, %cst_119 [1] : vector<2x32xf32> to vector<2xf32>
    %533 = vector.shape_cast %532 : vector<2xf32> to vector<2x1xf32>
    %cst_120 = arith.constant 3.200000e+01 : f32
    %534 = vector.broadcast %cst_120 : f32 to vector<2x1xf32>
    %535 = arith.divf %533, %534 : vector<2x1xf32>
    %536 = vector.broadcast %528 : vector<2x1xf32> to vector<2x32xf32>
    %537 = arith.subf %327, %536 : vector<2x32xf32>
    %cst_121 = arith.constant 9.99999974E-6 : f32
    %538 = vector.broadcast %cst_121 : f32 to vector<2x1xf32>
    %539 = arith.addf %535, %538 : vector<2x1xf32>
    %540 = math.rsqrt %539 : vector<2x1xf32>
    %541 = vector.broadcast %540 : vector<2x1xf32> to vector<2x32xf32>
    %542 = arith.mulf %537, %541 : vector<2x32xf32>
    %543 = vector.broadcast %496 : vector<1x32xf32> to vector<2x32xf32>
    %544 = arith.mulf %542, %543 : vector<2x32xf32>
    %545 = vector.broadcast %497 : vector<1x32xf32> to vector<2x32xf32>
    %546 = arith.addf %544, %545 : vector<2x32xf32>
    %547 = vector.broadcast %498 : vector<1x32xf32> to vector<2x32xf32>
    %548 = arith.mulf %546, %547 : vector<2x32xf32>
    %cst_122 = arith.constant dense<0.000000e+00> : vector<2xf32>
    %549 = vector.multi_reduction <add>, %548, %cst_122 [1] : vector<2x32xf32> to vector<2xf32>
    %550 = vector.shape_cast %549 : vector<2xf32> to vector<2x1xf32>
    %cst_123 = arith.constant dense<0.000000e+00> : vector<2xf32>
    %551 = vector.multi_reduction <add>, %355, %cst_123 [1] : vector<2x32xf32> to vector<2xf32>
    %552 = vector.shape_cast %551 : vector<2xf32> to vector<2x1xf32>
    %cst_124 = arith.constant 3.200000e+01 : f32
    %553 = vector.broadcast %cst_124 : f32 to vector<2x1xf32>
    %554 = arith.divf %552, %553 : vector<2x1xf32>
    %555 = vector.broadcast %554 : vector<2x1xf32> to vector<2x32xf32>
    %556 = arith.subf %355, %555 : vector<2x32xf32>
    %557 = arith.mulf %556, %556 : vector<2x32xf32>
    %cst_125 = arith.constant dense<0.000000e+00> : vector<2xf32>
    %558 = vector.multi_reduction <add>, %557, %cst_125 [1] : vector<2x32xf32> to vector<2xf32>
    %559 = vector.shape_cast %558 : vector<2xf32> to vector<2x1xf32>
    %cst_126 = arith.constant 3.200000e+01 : f32
    %560 = vector.broadcast %cst_126 : f32 to vector<2x1xf32>
    %561 = arith.divf %559, %560 : vector<2x1xf32>
    %562 = vector.broadcast %554 : vector<2x1xf32> to vector<2x32xf32>
    %563 = arith.subf %355, %562 : vector<2x32xf32>
    %cst_127 = arith.constant 9.99999974E-6 : f32
    %564 = vector.broadcast %cst_127 : f32 to vector<2x1xf32>
    %565 = arith.addf %561, %564 : vector<2x1xf32>
    %566 = math.rsqrt %565 : vector<2x1xf32>
    %567 = vector.broadcast %566 : vector<2x1xf32> to vector<2x32xf32>
    %568 = arith.mulf %563, %567 : vector<2x32xf32>
    %569 = vector.broadcast %496 : vector<1x32xf32> to vector<2x32xf32>
    %570 = arith.mulf %568, %569 : vector<2x32xf32>
    %571 = vector.broadcast %497 : vector<1x32xf32> to vector<2x32xf32>
    %572 = arith.addf %570, %571 : vector<2x32xf32>
    %573 = vector.broadcast %498 : vector<1x32xf32> to vector<2x32xf32>
    %574 = arith.mulf %572, %573 : vector<2x32xf32>
    %cst_128 = arith.constant dense<0.000000e+00> : vector<2xf32>
    %575 = vector.multi_reduction <add>, %574, %cst_128 [1] : vector<2x32xf32> to vector<2xf32>
    %576 = vector.shape_cast %575 : vector<2xf32> to vector<2x1xf32>
    %cst_129 = arith.constant dense<0.000000e+00> : vector<2xf32>
    %577 = vector.multi_reduction <add>, %383, %cst_129 [1] : vector<2x32xf32> to vector<2xf32>
    %578 = vector.shape_cast %577 : vector<2xf32> to vector<2x1xf32>
    %cst_130 = arith.constant 3.200000e+01 : f32
    %579 = vector.broadcast %cst_130 : f32 to vector<2x1xf32>
    %580 = arith.divf %578, %579 : vector<2x1xf32>
    %581 = vector.broadcast %580 : vector<2x1xf32> to vector<2x32xf32>
    %582 = arith.subf %383, %581 : vector<2x32xf32>
    %583 = arith.mulf %582, %582 : vector<2x32xf32>
    %cst_131 = arith.constant dense<0.000000e+00> : vector<2xf32>
    %584 = vector.multi_reduction <add>, %583, %cst_131 [1] : vector<2x32xf32> to vector<2xf32>
    %585 = vector.shape_cast %584 : vector<2xf32> to vector<2x1xf32>
    %cst_132 = arith.constant 3.200000e+01 : f32
    %586 = vector.broadcast %cst_132 : f32 to vector<2x1xf32>
    %587 = arith.divf %585, %586 : vector<2x1xf32>
    %588 = vector.broadcast %580 : vector<2x1xf32> to vector<2x32xf32>
    %589 = arith.subf %383, %588 : vector<2x32xf32>
    %cst_133 = arith.constant 9.99999974E-6 : f32
    %590 = vector.broadcast %cst_133 : f32 to vector<2x1xf32>
    %591 = arith.addf %587, %590 : vector<2x1xf32>
    %592 = math.rsqrt %591 : vector<2x1xf32>
    %593 = vector.broadcast %592 : vector<2x1xf32> to vector<2x32xf32>
    %594 = arith.mulf %589, %593 : vector<2x32xf32>
    %595 = vector.broadcast %496 : vector<1x32xf32> to vector<2x32xf32>
    %596 = arith.mulf %594, %595 : vector<2x32xf32>
    %597 = vector.broadcast %497 : vector<1x32xf32> to vector<2x32xf32>
    %598 = arith.addf %596, %597 : vector<2x32xf32>
    %599 = vector.broadcast %498 : vector<1x32xf32> to vector<2x32xf32>
    %600 = arith.mulf %598, %599 : vector<2x32xf32>
    %cst_134 = arith.constant dense<0.000000e+00> : vector<2xf32>
    %601 = vector.multi_reduction <add>, %600, %cst_134 [1] : vector<2x32xf32> to vector<2xf32>
    %602 = vector.shape_cast %601 : vector<2xf32> to vector<2x1xf32>
    %cst_135 = arith.constant dense<0.000000e+00> : vector<2xf32>
    %603 = vector.multi_reduction <add>, %411, %cst_135 [1] : vector<2x32xf32> to vector<2xf32>
    %604 = vector.shape_cast %603 : vector<2xf32> to vector<2x1xf32>
    %cst_136 = arith.constant 3.200000e+01 : f32
    %605 = vector.broadcast %cst_136 : f32 to vector<2x1xf32>
    %606 = arith.divf %604, %605 : vector<2x1xf32>
    %607 = vector.broadcast %606 : vector<2x1xf32> to vector<2x32xf32>
    %608 = arith.subf %411, %607 : vector<2x32xf32>
    %609 = arith.mulf %608, %608 : vector<2x32xf32>
    %cst_137 = arith.constant dense<0.000000e+00> : vector<2xf32>
    %610 = vector.multi_reduction <add>, %609, %cst_137 [1] : vector<2x32xf32> to vector<2xf32>
    %611 = vector.shape_cast %610 : vector<2xf32> to vector<2x1xf32>
    %cst_138 = arith.constant 3.200000e+01 : f32
    %612 = vector.broadcast %cst_138 : f32 to vector<2x1xf32>
    %613 = arith.divf %611, %612 : vector<2x1xf32>
    %614 = vector.broadcast %606 : vector<2x1xf32> to vector<2x32xf32>
    %615 = arith.subf %411, %614 : vector<2x32xf32>
    %cst_139 = arith.constant 9.99999974E-6 : f32
    %616 = vector.broadcast %cst_139 : f32 to vector<2x1xf32>
    %617 = arith.addf %613, %616 : vector<2x1xf32>
    %618 = math.rsqrt %617 : vector<2x1xf32>
    %619 = vector.broadcast %618 : vector<2x1xf32> to vector<2x32xf32>
    %620 = arith.mulf %615, %619 : vector<2x32xf32>
    %621 = vector.broadcast %496 : vector<1x32xf32> to vector<2x32xf32>
    %622 = arith.mulf %620, %621 : vector<2x32xf32>
    %623 = vector.broadcast %497 : vector<1x32xf32> to vector<2x32xf32>
    %624 = arith.addf %622, %623 : vector<2x32xf32>
    %625 = vector.broadcast %498 : vector<1x32xf32> to vector<2x32xf32>
    %626 = arith.mulf %624, %625 : vector<2x32xf32>
    %cst_140 = arith.constant dense<0.000000e+00> : vector<2xf32>
    %627 = vector.multi_reduction <add>, %626, %cst_140 [1] : vector<2x32xf32> to vector<2xf32>
    %628 = vector.shape_cast %627 : vector<2xf32> to vector<2x1xf32>
    %cst_141 = arith.constant dense<0.000000e+00> : vector<2xf32>
    %629 = vector.multi_reduction <add>, %439, %cst_141 [1] : vector<2x32xf32> to vector<2xf32>
    %630 = vector.shape_cast %629 : vector<2xf32> to vector<2x1xf32>
    %cst_142 = arith.constant 3.200000e+01 : f32
    %631 = vector.broadcast %cst_142 : f32 to vector<2x1xf32>
    %632 = arith.divf %630, %631 : vector<2x1xf32>
    %633 = vector.broadcast %632 : vector<2x1xf32> to vector<2x32xf32>
    %634 = arith.subf %439, %633 : vector<2x32xf32>
    %635 = arith.mulf %634, %634 : vector<2x32xf32>
    %cst_143 = arith.constant dense<0.000000e+00> : vector<2xf32>
    %636 = vector.multi_reduction <add>, %635, %cst_143 [1] : vector<2x32xf32> to vector<2xf32>
    %637 = vector.shape_cast %636 : vector<2xf32> to vector<2x1xf32>
    %cst_144 = arith.constant 3.200000e+01 : f32
    %638 = vector.broadcast %cst_144 : f32 to vector<2x1xf32>
    %639 = arith.divf %637, %638 : vector<2x1xf32>
    %640 = vector.broadcast %632 : vector<2x1xf32> to vector<2x32xf32>
    %641 = arith.subf %439, %640 : vector<2x32xf32>
    %cst_145 = arith.constant 9.99999974E-6 : f32
    %642 = vector.broadcast %cst_145 : f32 to vector<2x1xf32>
    %643 = arith.addf %639, %642 : vector<2x1xf32>
    %644 = math.rsqrt %643 : vector<2x1xf32>
    %645 = vector.broadcast %644 : vector<2x1xf32> to vector<2x32xf32>
    %646 = arith.mulf %641, %645 : vector<2x32xf32>
    %647 = vector.broadcast %496 : vector<1x32xf32> to vector<2x32xf32>
    %648 = arith.mulf %646, %647 : vector<2x32xf32>
    %649 = vector.broadcast %497 : vector<1x32xf32> to vector<2x32xf32>
    %650 = arith.addf %648, %649 : vector<2x32xf32>
    %651 = vector.broadcast %498 : vector<1x32xf32> to vector<2x32xf32>
    %652 = arith.mulf %650, %651 : vector<2x32xf32>
    %cst_146 = arith.constant dense<0.000000e+00> : vector<2xf32>
    %653 = vector.multi_reduction <add>, %652, %cst_146 [1] : vector<2x32xf32> to vector<2xf32>
    %654 = vector.shape_cast %653 : vector<2xf32> to vector<2x1xf32>
    %cst_147 = arith.constant dense<0.000000e+00> : vector<2xf32>
    %655 = vector.multi_reduction <add>, %467, %cst_147 [1] : vector<2x32xf32> to vector<2xf32>
    %656 = vector.shape_cast %655 : vector<2xf32> to vector<2x1xf32>
    %cst_148 = arith.constant 3.200000e+01 : f32
    %657 = vector.broadcast %cst_148 : f32 to vector<2x1xf32>
    %658 = arith.divf %656, %657 : vector<2x1xf32>
    %659 = vector.broadcast %658 : vector<2x1xf32> to vector<2x32xf32>
    %660 = arith.subf %467, %659 : vector<2x32xf32>
    %661 = arith.mulf %660, %660 : vector<2x32xf32>
    %cst_149 = arith.constant dense<0.000000e+00> : vector<2xf32>
    %662 = vector.multi_reduction <add>, %661, %cst_149 [1] : vector<2x32xf32> to vector<2xf32>
    %663 = vector.shape_cast %662 : vector<2xf32> to vector<2x1xf32>
    %cst_150 = arith.constant 3.200000e+01 : f32
    %664 = vector.broadcast %cst_150 : f32 to vector<2x1xf32>
    %665 = arith.divf %663, %664 : vector<2x1xf32>
    %666 = vector.broadcast %658 : vector<2x1xf32> to vector<2x32xf32>
    %667 = arith.subf %467, %666 : vector<2x32xf32>
    %cst_151 = arith.constant 9.99999974E-6 : f32
    %668 = vector.broadcast %cst_151 : f32 to vector<2x1xf32>
    %669 = arith.addf %665, %668 : vector<2x1xf32>
    %670 = math.rsqrt %669 : vector<2x1xf32>
    %671 = vector.broadcast %670 : vector<2x1xf32> to vector<2x32xf32>
    %672 = arith.mulf %667, %671 : vector<2x32xf32>
    %673 = vector.broadcast %496 : vector<1x32xf32> to vector<2x32xf32>
    %674 = arith.mulf %672, %673 : vector<2x32xf32>
    %675 = vector.broadcast %497 : vector<1x32xf32> to vector<2x32xf32>
    %676 = arith.addf %674, %675 : vector<2x32xf32>
    %677 = vector.broadcast %498 : vector<1x32xf32> to vector<2x32xf32>
    %678 = arith.mulf %676, %677 : vector<2x32xf32>
    %cst_152 = arith.constant dense<0.000000e+00> : vector<2xf32>
    %679 = vector.multi_reduction <add>, %678, %cst_152 [1] : vector<2x32xf32> to vector<2xf32>
    %680 = vector.shape_cast %679 : vector<2xf32> to vector<2x1xf32>
    %cst_153 = arith.constant dense<0.000000e+00> : vector<2xf32>
    %681 = vector.multi_reduction <add>, %495, %cst_153 [1] : vector<2x32xf32> to vector<2xf32>
    %682 = vector.shape_cast %681 : vector<2xf32> to vector<2x1xf32>
    %cst_154 = arith.constant 3.200000e+01 : f32
    %683 = vector.broadcast %cst_154 : f32 to vector<2x1xf32>
    %684 = arith.divf %682, %683 : vector<2x1xf32>
    %685 = vector.broadcast %684 : vector<2x1xf32> to vector<2x32xf32>
    %686 = arith.subf %495, %685 : vector<2x32xf32>
    %687 = arith.mulf %686, %686 : vector<2x32xf32>
    %cst_155 = arith.constant dense<0.000000e+00> : vector<2xf32>
    %688 = vector.multi_reduction <add>, %687, %cst_155 [1] : vector<2x32xf32> to vector<2xf32>
    %689 = vector.shape_cast %688 : vector<2xf32> to vector<2x1xf32>
    %cst_156 = arith.constant 3.200000e+01 : f32
    %690 = vector.broadcast %cst_156 : f32 to vector<2x1xf32>
    %691 = arith.divf %689, %690 : vector<2x1xf32>
    %692 = vector.broadcast %684 : vector<2x1xf32> to vector<2x32xf32>
    %693 = arith.subf %495, %692 : vector<2x32xf32>
    %cst_157 = arith.constant 9.99999974E-6 : f32
    %694 = vector.broadcast %cst_157 : f32 to vector<2x1xf32>
    %695 = arith.addf %691, %694 : vector<2x1xf32>
    %696 = math.rsqrt %695 : vector<2x1xf32>
    %697 = vector.broadcast %696 : vector<2x1xf32> to vector<2x32xf32>
    %698 = arith.mulf %693, %697 : vector<2x32xf32>
    %699 = vector.broadcast %496 : vector<1x32xf32> to vector<2x32xf32>
    %700 = arith.mulf %698, %699 : vector<2x32xf32>
    %701 = vector.broadcast %497 : vector<1x32xf32> to vector<2x32xf32>
    %702 = arith.addf %700, %701 : vector<2x32xf32>
    %703 = vector.broadcast %498 : vector<1x32xf32> to vector<2x32xf32>
    %704 = arith.mulf %702, %703 : vector<2x32xf32>
    %cst_158 = arith.constant dense<0.000000e+00> : vector<2xf32>
    %705 = vector.multi_reduction <add>, %704, %cst_158 [1] : vector<2x32xf32> to vector<2xf32>
    %706 = vector.shape_cast %705 : vector<2xf32> to vector<2x1xf32>
    %707 = arith.maximumf %524, %550 : vector<2x1xf32>
    %708 = arith.maximumf %576, %602 : vector<2x1xf32>
    %709 = arith.maximumf %628, %654 : vector<2x1xf32>
    %710 = arith.maximumf %680, %706 : vector<2x1xf32>
    %711 = arith.maximumf %707, %708 : vector<2x1xf32>
    %712 = arith.maximumf %709, %710 : vector<2x1xf32>
    %713 = arith.maximumf %711, %712 : vector<2x1xf32>
    %714 = arith.subf %524, %713 : vector<2x1xf32>
    %cst_159 = arith.constant -1.000000e+01 : f32
    %cst_160 = arith.constant 1.000000e+01 : f32
    %715 = vector.broadcast %cst_159 : f32 to vector<2x1xf32>
    %716 = arith.maximumf %715, %714 : vector<2x1xf32>
    %717 = vector.broadcast %cst_160 : f32 to vector<2x1xf32>
    %718 = arith.minimumf %717, %716 : vector<2x1xf32>
    %719 = math.exp %718 : vector<2x1xf32>
    %720 = arith.subf %550, %713 : vector<2x1xf32>
    %cst_161 = arith.constant -1.000000e+01 : f32
    %cst_162 = arith.constant 1.000000e+01 : f32
    %721 = vector.broadcast %cst_161 : f32 to vector<2x1xf32>
    %722 = arith.maximumf %721, %720 : vector<2x1xf32>
    %723 = vector.broadcast %cst_162 : f32 to vector<2x1xf32>
    %724 = arith.minimumf %723, %722 : vector<2x1xf32>
    %725 = math.exp %724 : vector<2x1xf32>
    %726 = arith.subf %576, %713 : vector<2x1xf32>
    %cst_163 = arith.constant -1.000000e+01 : f32
    %cst_164 = arith.constant 1.000000e+01 : f32
    %727 = vector.broadcast %cst_163 : f32 to vector<2x1xf32>
    %728 = arith.maximumf %727, %726 : vector<2x1xf32>
    %729 = vector.broadcast %cst_164 : f32 to vector<2x1xf32>
    %730 = arith.minimumf %729, %728 : vector<2x1xf32>
    %731 = math.exp %730 : vector<2x1xf32>
    %732 = arith.subf %602, %713 : vector<2x1xf32>
    %cst_165 = arith.constant -1.000000e+01 : f32
    %cst_166 = arith.constant 1.000000e+01 : f32
    %733 = vector.broadcast %cst_165 : f32 to vector<2x1xf32>
    %734 = arith.maximumf %733, %732 : vector<2x1xf32>
    %735 = vector.broadcast %cst_166 : f32 to vector<2x1xf32>
    %736 = arith.minimumf %735, %734 : vector<2x1xf32>
    %737 = math.exp %736 : vector<2x1xf32>
    %738 = arith.subf %628, %713 : vector<2x1xf32>
    %cst_167 = arith.constant -1.000000e+01 : f32
    %cst_168 = arith.constant 1.000000e+01 : f32
    %739 = vector.broadcast %cst_167 : f32 to vector<2x1xf32>
    %740 = arith.maximumf %739, %738 : vector<2x1xf32>
    %741 = vector.broadcast %cst_168 : f32 to vector<2x1xf32>
    %742 = arith.minimumf %741, %740 : vector<2x1xf32>
    %743 = math.exp %742 : vector<2x1xf32>
    %744 = arith.subf %654, %713 : vector<2x1xf32>
    %cst_169 = arith.constant -1.000000e+01 : f32
    %cst_170 = arith.constant 1.000000e+01 : f32
    %745 = vector.broadcast %cst_169 : f32 to vector<2x1xf32>
    %746 = arith.maximumf %745, %744 : vector<2x1xf32>
    %747 = vector.broadcast %cst_170 : f32 to vector<2x1xf32>
    %748 = arith.minimumf %747, %746 : vector<2x1xf32>
    %749 = math.exp %748 : vector<2x1xf32>
    %750 = arith.subf %680, %713 : vector<2x1xf32>
    %cst_171 = arith.constant -1.000000e+01 : f32
    %cst_172 = arith.constant 1.000000e+01 : f32
    %751 = vector.broadcast %cst_171 : f32 to vector<2x1xf32>
    %752 = arith.maximumf %751, %750 : vector<2x1xf32>
    %753 = vector.broadcast %cst_172 : f32 to vector<2x1xf32>
    %754 = arith.minimumf %753, %752 : vector<2x1xf32>
    %755 = math.exp %754 : vector<2x1xf32>
    %756 = arith.subf %706, %713 : vector<2x1xf32>
    %cst_173 = arith.constant -1.000000e+01 : f32
    %cst_174 = arith.constant 1.000000e+01 : f32
    %757 = vector.broadcast %cst_173 : f32 to vector<2x1xf32>
    %758 = arith.maximumf %757, %756 : vector<2x1xf32>
    %759 = vector.broadcast %cst_174 : f32 to vector<2x1xf32>
    %760 = arith.minimumf %759, %758 : vector<2x1xf32>
    %761 = math.exp %760 : vector<2x1xf32>
    %762 = arith.addf %719, %725 : vector<2x1xf32>
    %763 = arith.addf %731, %737 : vector<2x1xf32>
    %764 = arith.addf %743, %749 : vector<2x1xf32>
    %765 = arith.addf %755, %761 : vector<2x1xf32>
    %766 = arith.addf %762, %763 : vector<2x1xf32>
    %767 = arith.addf %764, %765 : vector<2x1xf32>
    %768 = arith.addf %766, %767 : vector<2x1xf32>
    %769 = tpu.reciprocal %768 {approx = true} : vector<2x1xf32> -> vector<2x1xf32>
    %770 = vector.broadcast %719 : vector<2x1xf32> to vector<2x32xf32>
    %771 = arith.mulf %770, %520 : vector<2x32xf32>
    %772 = vector.broadcast %725 : vector<2x1xf32> to vector<2x32xf32>
    %773 = arith.mulf %772, %546 : vector<2x32xf32>
    %774 = vector.broadcast %731 : vector<2x1xf32> to vector<2x32xf32>
    %775 = arith.mulf %774, %572 : vector<2x32xf32>
    %776 = vector.broadcast %737 : vector<2x1xf32> to vector<2x32xf32>
    %777 = arith.mulf %776, %598 : vector<2x32xf32>
    %778 = vector.broadcast %743 : vector<2x1xf32> to vector<2x32xf32>
    %779 = arith.mulf %778, %624 : vector<2x32xf32>
    %780 = vector.broadcast %749 : vector<2x1xf32> to vector<2x32xf32>
    %781 = arith.mulf %780, %650 : vector<2x32xf32>
    %782 = vector.broadcast %755 : vector<2x1xf32> to vector<2x32xf32>
    %783 = arith.mulf %782, %676 : vector<2x32xf32>
    %784 = vector.broadcast %761 : vector<2x1xf32> to vector<2x32xf32>
    %785 = arith.mulf %784, %702 : vector<2x32xf32>
    %786 = arith.addf %771, %773 : vector<2x32xf32>
    %787 = arith.addf %775, %777 : vector<2x32xf32>
    %788 = arith.addf %779, %781 : vector<2x32xf32>
    %789 = arith.addf %783, %785 : vector<2x32xf32>
    %790 = arith.addf %786, %787 : vector<2x32xf32>
    %791 = arith.addf %788, %789 : vector<2x32xf32>
    %792 = arith.addf %790, %791 : vector<2x32xf32>
    %793 = vector.broadcast %769 : vector<2x1xf32> to vector<2x32xf32>
    %794 = arith.mulf %792, %793 : vector<2x32xf32>
    %cst_175 = arith.constant 0.000000e+00 : f32
    %795 = vector.broadcast %cst_175 : f32 to vector<2x32xf32>
    %796 = arith.maximumf %794, %795 : vector<2x32xf32>
    %c0_176 = arith.constant 0 : index
    %c0_177 = arith.constant 0 : index
    %797 = vector.load %arg13[%c0_176, %c0_177] : memref<32x128xf32, #tpu.memory_space<vmem>>, vector<32x128xf32>
    %cst_178 = arith.constant dense<0.000000e+00> : vector<2x128xf32>
    %798 = tpu.matmul %796, %797, %cst_178 {dimension_numbers = #tpu.dot_dimension_numbers<[1], [0], [0], [1], [0, 0, 1, 1], [], []>} : vector<2x32xf32>, vector<32x128xf32>, vector<2x128xf32> -> vector<2x128xf32>
    %c0_179 = arith.constant 0 : index
    %c0_180 = arith.constant 0 : index
    %799 = vector.load %arg14[%c0_179, %c0_180] : memref<1x128xf32, #tpu.memory_space<vmem>>, vector<1x128xf32>
    %800 = vector.broadcast %799 : vector<1x128xf32> to vector<2x128xf32>
    %801 = arith.addf %798, %800 : vector<2x128xf32>
    %cst_181 = arith.constant 0.000000e+00 : f32
    %802 = vector.broadcast %cst_181 : f32 to vector<2x128xf32>
    %803 = arith.maximumf %801, %802 : vector<2x128xf32>
    %c0_182 = arith.constant 0 : index
    %c0_183 = arith.constant 0 : index
    %804 = vector.load %arg15[%c0_182, %c0_183] : memref<128x128xf32, #tpu.memory_space<vmem>>, vector<128x128xf32>
    %cst_184 = arith.constant dense<0.000000e+00> : vector<2x128xf32>
    %805 = tpu.matmul %803, %804, %cst_184 {dimension_numbers = #tpu.dot_dimension_numbers<[1], [0], [0], [1], [0, 0, 1, 1], [], []>} : vector<2x128xf32>, vector<128x128xf32>, vector<2x128xf32> -> vector<2x128xf32>
    %c0_185 = arith.constant 0 : index
    %c0_186 = arith.constant 0 : index
    %806 = vector.load %arg16[%c0_185, %c0_186] : memref<1x128xf32, #tpu.memory_space<vmem>>, vector<1x128xf32>
    %807 = vector.broadcast %806 : vector<1x128xf32> to vector<2x128xf32>
    %808 = arith.addf %805, %807 : vector<2x128xf32>
    %c0_187 = arith.constant 0 : index
    %c0_188 = arith.constant 0 : index
    %809 = vector.load %arg17[%c0_187, %c0_188] : memref<2x128xf32, #tpu.memory_space<vmem>>, vector<2x128xf32>
    tpu.vector_store %arg17[%c0_187, %c0_188], %808 {strides = array<i32>} : memref<2x128xf32, #tpu.memory_space<vmem>>, vector<2x128xf32>,
    return
  }
  func.func @transform_0(%arg0: i32) -> (i32, i32) {
    %c0_i32 = arith.constant 0 : i32
    %c0_i32_0 = arith.constant 0 : i32
    %c0_i32_1 = arith.constant 0 : i32
    return %c0_i32, %c0_i32_0 : i32, i32
  }
  func.func @transform_1(%arg0: i32) -> (i32, i32, i32) {
    %c0_i32 = arith.constant 0 : i32
    %c0_i32_0 = arith.constant 0 : i32
    %c0_i32_1 = arith.constant 0 : i32
    %c0_i32_2 = arith.constant 0 : i32
    return %c0_i32, %c0_i32_0, %c0_i32_1 : i32, i32, i32
  }
  func.func @transform_2(%arg0: i32) -> (i32, i32, i32) {
    %c0_i32 = arith.constant 0 : i32
    %c0_i32_0 = arith.constant 0 : i32
    %c0_i32_1 = arith.constant 0 : i32
    %c0_i32_2 = arith.constant 0 : i32
    return %c0_i32, %c0_i32_0, %c0_i32_1 : i32, i32, i32
  }
  func.func @transform_3(%arg0: i32) -> (i32, i32) {
    %c0_i32 = arith.constant 0 : i32
    %c0_i32_0 = arith.constant 0 : i32
    %c0_i32_1 = arith.constant 0 : i32
    return %c0_i32, %c0_i32_0 : i32, i32
  }
  func.func @transform_4(%arg0: i32) -> (i32, i32) {
    %c0_i32 = arith.constant 0 : i32
    %c0_i32_0 = arith.constant 0 : i32
    %c0_i32_1 = arith.constant 0 : i32
    return %c0_i32, %c0_i32_0 : i32, i32
  }
  func.func @transform_5(%arg0: i32) -> (i32, i32) {
    %c0_i32 = arith.constant 0 : i32
    %c0_i32_0 = arith.constant 0 : i32
    %c0_i32_1 = arith.constant 0 : i32
    return %c0_i32, %c0_i32_0 : i32, i32
  }
  func.func @transform_6(%arg0: i32) -> (i32, i32) {
    %c0_i32 = arith.constant 0 : i32
    %c0_i32_0 = arith.constant 0 : i32
    %c0_i32_1 = arith.constant 0 : i32
    return %c0_i32, %c0_i32_0 : i32, i32
  }
  func.func @transform_7(%arg0: i32) -> (i32, i32) {
    %c0_i32 = arith.constant 0 : i32
    %c0_i32_0 = arith.constant 0 : i32
    %c0_i32_1 = arith.constant 0 : i32
    return %c0_i32, %c0_i32_0 : i32, i32
  }
  func.func @transform_8(%arg0: i32) -> (i32, i32) {
    %c0_i32 = arith.constant 0 : i32
    %c0_i32_0 = arith.constant 0 : i32
    %c0_i32_1 = arith.constant 0 : i32
    return %c0_i32, %c0_i32_0 : i32, i32
  }
  func.func @transform_9(%arg0: i32) -> (i32, i32) {
    %c0_i32 = arith.constant 0 : i32
    %c0_i32_0 = arith.constant 0 : i32
    %c0_i32_1 = arith.constant 0 : i32
    return %c0_i32, %c0_i32_0 : i32, i32
  }
  func.func @transform_10(%arg0: i32) -> (i32, i32) {
    %c0_i32 = arith.constant 0 : i32
    %c0_i32_0 = arith.constant 0 : i32
    %c0_i32_1 = arith.constant 0 : i32
    return %c0_i32, %c0_i32_0 : i32, i32
  }
  func.func @transform_11(%arg0: i32) -> (i32, i32) {
    %c0_i32 = arith.constant 0 : i32
    %c0_i32_0 = arith.constant 0 : i32
    %c0_i32_1 = arith.constant 0 : i32
    return %c0_i32, %c0_i32_0 : i32, i32
  }
  func.func @transform_12(%arg0: i32) -> (i32, i32) {
    %c0_i32 = arith.constant 0 : i32
    %c0_i32_0 = arith.constant 0 : i32
    %c0_i32_1 = arith.constant 0 : i32
    return %c0_i32, %c0_i32_0 : i32, i32
  }
  func.func @transform_13(%arg0: i32) -> (i32, i32) {
    %c0_i32 = arith.constant 0 : i32
    %c0_i32_0 = arith.constant 0 : i32
    %c0_i32_1 = arith.constant 0 : i32
    return %c0_i32, %c0_i32_0 : i32, i32
  }
  func.func @transform_14(%arg0: i32) -> (i32, i32) {
    %c0_i32 = arith.constant 0 : i32
    %c0_i32_0 = arith.constant 0 : i32
    %c0_i32_1 = arith.constant 0 : i32
    return %c0_i32, %c0_i32_0 : i32, i32
  }
  func.func @transform_15(%arg0: i32) -> (i32, i32) {
    %c0_i32 = arith.constant 0 : i32
    %c0_i32_0 = arith.constant 0 : i32
    %c0_i32_1 = arith.constant 0 : i32
    return %c0_i32, %c0_i32_0 : i32, i32
  }
  func.func @transform_16(%arg0: i32) -> (i32, i32) {
    %c0_i32 = arith.constant 0 : i32
    %c0_i32_0 = arith.constant 0 : i32
    %c0_i32_1 = arith.constant 0 : i32
    return %c0_i32, %c0_i32_0 : i32, i32
  }
}

</mosaic_0001>

<llo_original>
// kernel: tpu_custom_call.1
$region0: #{tpu_custom_call.1}
  #allocation0 [shape = 'u32[]', space=smem, size = 0x4, offset = 0x4, fixed_abs, tag = 'smem constant byte address 0x4 - core index']
  #allocation1 [shape = 'u32[144,128]{1,0:T(1,128)}', space=vmem, size = 0x12000, scoped, tag = 'internal scratch']
  #allocation2 [shape = 'f32[16,32]{1,0:T(8,128)}', space=vmem, size = 0x2000, scoped, tag = 'scratch operand']
  %s0 = inlined_call_operand.vmem [shape: f32[16,4], index: 0, kind: input, shape index: {}]
  %s1 = inlined_call_operand.hbm [shape: f32[2,2,32], index: 1, kind: input, shape index: {}]
  %s2 = inlined_call_operand.hbm [shape: f32[2,2,32], index: 2, kind: input, shape index: {}]
  %s3 = inlined_call_operand.hbm [shape: f32[4,128], index: 3, kind: input, shape index: {}]
  %s4 = inlined_call_operand.vmem [shape: f32[32,128], index: 4, kind: input, shape index: {}]
  %s5 = inlined_call_operand.vmem [shape: f32[1,128], index: 5, kind: input, shape index: {}]
  %s6 = inlined_call_operand.hbm [shape: f32[32,128], index: 6, kind: input, shape index: {}]
  %s7 = inlined_call_operand.hbm [shape: f32[32,128], index: 7, kind: input, shape index: {}]
  %s8 = inlined_call_operand.hbm [shape: f32[1,128], index: 8, kind: input, shape index: {}]
  %s9 = inlined_call_operand.hbm [shape: f32[1,32], index: 9, kind: input, shape index: {}]
  %s10 = inlined_call_operand.hbm [shape: f32[1,32], index: 10, kind: input, shape index: {}]
  %s11 = inlined_call_operand.hbm [shape: f32[1,32], index: 11, kind: input, shape index: {}]
  %s12 = inlined_call_operand.vmem [shape: f32[32,128], index: 12, kind: input, shape index: {}]
  %s13 = inlined_call_operand.vmem [shape: f32[1,128], index: 13, kind: input, shape index: {}]
  %s14 = inlined_call_operand.hbm [shape: f32[128,128], index: 14, kind: input, shape index: {}]
  %s15 = inlined_call_operand.vmem [shape: f32[1,128], index: 15, kind: input, shape index: {}]
  %s16 = inlined_call_operand.hbm [shape: f32[2,128], index: 16, kind: output, shape index: {}]
  %s17 = sld [smem:[#allocation0]]
  $region114: #{tpu_custom_call.1} parent=0
    _
  %s19 = ssub.s32 1, %s17
  %s20 = scalar_select 0, %s19, %s17
  $region1: #{tpu_custom_call.1} parent=0
    #allocation3 [shape = 'u8[2048]{0}', space=vmem, size = 0x800, scoped, tag = 'input window, operand 1, single buffered']
    #allocation4 [shape = 's32[1]{0}', space=sflag, size = 0x4, scoped, tag = 'scoped memory for tpu_custom_call.1']
    #allocation5 [shape = 's32[1]{0}', space=sflag, size = 0x4, scoped, tag = 'scoped memory for tpu_custom_call.1']
    #allocation6 [shape = 'u8[2048]{0}', space=vmem, size = 0x800, scoped, tag = 'input window, operand 2, single buffered']
    #allocation7 [shape = 's32[1]{0}', space=sflag, size = 0x4, scoped, tag = 'scoped memory for tpu_custom_call.1']
    #allocation8 [shape = 'u8[2048]{0}', space=vmem, size = 0x800, scoped, tag = 'input window, operand 3, single buffered']
    #allocation9 [shape = 'u8[16384]{0}', space=vmem, size = 0x4000, scoped, tag = 'input window, operand 6, single buffered']
    #allocation10 [shape = 's32[1]{0}', space=sflag, size = 0x4, scoped, tag = 'scoped memory for tpu_custom_call.1']
    #allocation11 [shape = 'u8[16384]{0}', space=vmem, size = 0x4000, scoped, tag = 'input window, operand 7, single buffered']
    #allocation12 [shape = 'u8[512]{0}', space=vmem, size = 0x400, scoped, tag = 'input window, operand 8, single buffered']
    #allocation13 [shape = 's32[1]{0}', space=sflag, size = 0x4, scoped, tag = 'scoped memory for tpu_custom_call.1']
    #allocation14 [shape = 'u8[512]{0}', space=vmem, size = 0x400, scoped, tag = 'input window, operand 9, single buffered']
    #allocation15 [shape = 'u8[512]{0}', space=vmem, size = 0x400, scoped, tag = 'input window, operand 10, single buffered']
    #allocation16 [shape = 's32[1]{0}', space=sflag, size = 0x4, scoped, tag = 'scoped memory for tpu_custom_call.1']
    #allocation17 [shape = 'u8[512]{0}', space=vmem, size = 0x400, scoped, tag = 'input window, operand 11, single buffered']
    #allocation18 [shape = 'u8[65536]{0}', space=vmem, size = 0x10000, scoped, tag = 'input window, operand 14, single buffered']
    #allocation19 [shape = 's32[1]{0}', space=sflag, size = 0x4, scoped, tag = 'scoped memory for tpu_custom_call.1']
    #allocation20 [shape = 'u8[1024]{0}', space=vmem, size = 0x400, scoped, tag = 'output window, operand 0, single buffered']
    %21 = vsyncpa [#allocation4], 0
    %22 = vsyncpa [#allocation7], 0
    %23 = vsyncpa [#allocation10], 0
    %24 = vsyncpa [#allocation13], 0
    %25 = vsyncpa [#allocation16], 0
    %26 = vsyncpa [#allocation19], 0
    %27 = vsyncpa [#allocation5], 0
    // Predicated region
    $region2: #{tpu_custom_call.1} parent=1 // pred_check
      _
    $region3: #{tpu_custom_call.1} parent=1 // pred_check_branch
      %29 = sbr.rel (0) target = $region5
    $region4: #{tpu_custom_call.1} parent=1 // pred_region
      _
    $region5: #{tpu_custom_call.1} parent=1 // pred_fallthru
      _
    // Predicated region
    $region6: #{tpu_custom_call.1} parent=1 // pred_check
      _
    $region7: #{tpu_custom_call.1} parent=1 // pred_check_branch
      %31 = sbr.rel (0) target = $region9
    $region8: #{tpu_custom_call.1} parent=1 // pred_region
      %s33 = ssub.s32 64, 64
      %34 = vsyncadd [#allocation4], %s33
      %s35 = sshll.u32 [#allocation3], 4
      %s36 = int_to_ptr.vmem [resolvable:$true] %s35
      %41 = dma.hbm_to_vmem [thread:$0]  %s1, 64, %s36, [#allocation4], 32, 32, 2
    $region9: #{tpu_custom_call.1} parent=1 // pred_fallthru
      _
    // Predicated region
    $region10: #{tpu_custom_call.1} parent=1 // pred_check
      _
    $region11: #{tpu_custom_call.1} parent=1 // pred_check_branch
      %43 = sbr.rel (0) target = $region13
    $region12: #{tpu_custom_call.1} parent=1 // pred_region
      %s45 = ssub.s32 64, 64
      %46 = vsyncadd [#allocation7], %s45
      %s47 = sshll.u32 [#allocation6], 4
      %s48 = int_to_ptr.vmem [resolvable:$true] %s47
      %53 = dma.hbm_to_vmem [thread:$0]  %s2, 64, %s48, [#allocation7], 32, 32, 2
    $region13: #{tpu_custom_call.1} parent=1 // pred_fallthru
      _
    // Predicated region
    $region14: #{tpu_custom_call.1} parent=1 // pred_check
      _
    $region15: #{tpu_custom_call.1} parent=1 // pred_check_branch
      %55 = sbr.rel (0) target = $region17
    $region16: #{tpu_custom_call.1} parent=1 // pred_region
      %s57 = ssub.s32 64, 64
      %58 = vsyncadd [#allocation7], %s57
      %s60 = sshll.u32 [#allocation8], 4
      %s61 = int_to_ptr.vmem [resolvable:$true] %s60
      %63 = dma.hbm_to_vmem [thread:$0]  %s3, 64, %s61, [#allocation7]
    $region17: #{tpu_custom_call.1} parent=1 // pred_fallthru
      _
    // Predicated region
    $region18: #{tpu_custom_call.1} parent=1 // pred_check
      _
    $region19: #{tpu_custom_call.1} parent=1 // pred_check_branch
      %65 = sbr.rel (0) target = $region21
    $region20: #{tpu_custom_call.1} parent=1 // pred_region
      _
    $region21: #{tpu_custom_call.1} parent=1 // pred_fallthru
      _
    // Predicated region
    $region22: #{tpu_custom_call.1} parent=1 // pred_check
      _
    $region23: #{tpu_custom_call.1} parent=1 // pred_check_branch
      %67 = sbr.rel (0) target = $region25
    $region24: #{tpu_custom_call.1} parent=1 // pred_region
      _
    $region25: #{tpu_custom_call.1} parent=1 // pred_fallthru
      _
    // Predicated region
    $region26: #{tpu_custom_call.1} parent=1 // pred_check
      _
    $region27: #{tpu_custom_call.1} parent=1 // pred_check_branch
      %69 = sbr.rel (0) target = $region29
    $region28: #{tpu_custom_call.1} parent=1 // pred_region
      %s71 = ssub.s32 512, 512
      %72 = vsyncadd [#allocation10], %s71
      %s73 = sshll.u32 [#allocation9], 4
      %s74 = int_to_ptr.vmem [resolvable:$true] %s73
      %79 = dma.hbm_to_vmem [thread:$0]  %s6, 512, %s74, [#allocation10], 128, 128, 8
    $region29: #{tpu_custom_call.1} parent=1 // pred_fallthru
      _
    // Predicated region
    $region30: #{tpu_custom_call.1} parent=1 // pred_check
      _
    $region31: #{tpu_custom_call.1} parent=1 // pred_check_branch
      %81 = sbr.rel (0) target = $region33
    $region32: #{tpu_custom_call.1} parent=1 // pred_region
      %s83 = ssub.s32 512, 512
      %84 = vsyncadd [#allocation10], %s83
      %s85 = sshll.u32 [#allocation11], 4
      %s86 = int_to_ptr.vmem [resolvable:$true] %s85
      %91 = dma.hbm_to_vmem [thread:$0]  %s7, 512, %s86, [#allocation10], 128, 128, 8
    $region33: #{tpu_custom_call.1} parent=1 // pred_fallthru
      _
    // Predicated region
    $region34: #{tpu_custom_call.1} parent=1 // pred_check
      _
    $region35: #{tpu_custom_call.1} parent=1 // pred_check_branch
      %93 = sbr.rel (0) target = $region37
    $region36: #{tpu_custom_call.1} parent=1 // pred_region
      %s95 = ssub.s32 16, 16
      %96 = vsyncadd [#allocation13], %s95
      %s98 = sshll.u32 [#allocation12], 4
      %s99 = int_to_ptr.vmem [resolvable:$true] %s98
      %101 = dma.hbm_to_vmem [thread:$0]  %s8, 16, %s99, [#allocation13]
    $region37: #{tpu_custom_call.1} parent=1 // pred_fallthru
      _
    // Predicated region
    $region38: #{tpu_custom_call.1} parent=1 // pred_check
      _
    $region39: #{tpu_custom_call.1} parent=1 // pred_check_branch
      %103 = sbr.rel (0) target = $region41
    $region40: #{tpu_custom_call.1} parent=1 // pred_region
      %s105 = ssub.s32 16, 16
      %106 = vsyncadd [#allocation13], %s105
      %s108 = sshll.u32 [#allocation14], 4
      %s109 = int_to_ptr.vmem [resolvable:$true] %s108
      %111 = dma.hbm_to_vmem [thread:$0]  %s9, 16, %s109, [#allocation13]
    $region41: #{tpu_custom_call.1} parent=1 // pred_fallthru
      _
    // Predicated region
    $region42: #{tpu_custom_call.1} parent=1 // pred_check
      _
    $region43: #{tpu_custom_call.1} parent=1 // pred_check_branch
      %113 = sbr.rel (0) target = $region45
    $region44: #{tpu_custom_call.1} parent=1 // pred_region
      %s115 = ssub.s32 16, 16
      %116 = vsyncadd [#allocation16], %s115
      %s118 = sshll.u32 [#allocation15], 4
      %s119 = int_to_ptr.vmem [resolvable:$true] %s118
      %121 = dma.hbm_to_vmem [thread:$0]  %s10, 16, %s119, [#allocation16]
    $region45: #{tpu_custom_call.1} parent=1 // pred_fallthru
      _
    // Predicated region
    $region46: #{tpu_custom_call.1} parent=1 // pred_check
      _
    $region47: #{tpu_custom_call.1} parent=1 // pred_check_branch
      %123 = sbr.rel (0) target = $region49
    $region48: #{tpu_custom_call.1} parent=1 // pred_region
      %s125 = ssub.s32 16, 16
      %126 = vsyncadd [#allocation16], %s125
      %s128 = sshll.u32 [#allocation17], 4
      %s129 = int_to_ptr.vmem [resolvable:$true] %s128
      %131 = dma.hbm_to_vmem [thread:$0]  %s11, 16, %s129, [#allocation16]
    $region49: #{tpu_custom_call.1} parent=1 // pred_fallthru
      _
    // Predicated region
    $region50: #{tpu_custom_call.1} parent=1 // pred_check
      _
    $region51: #{tpu_custom_call.1} parent=1 // pred_check_branch
      %133 = sbr.rel (0) target = $region53
    $region52: #{tpu_custom_call.1} parent=1 // pred_region
      _
    $region53: #{tpu_custom_call.1} parent=1 // pred_fallthru
      _
    // Predicated region
    $region54: #{tpu_custom_call.1} parent=1 // pred_check
      _
    $region55: #{tpu_custom_call.1} parent=1 // pred_check_branch
      %135 = sbr.rel (0) target = $region57
    $region56: #{tpu_custom_call.1} parent=1 // pred_region
      _
    $region57: #{tpu_custom_call.1} parent=1 // pred_fallthru
      _
    // Predicated region
    $region58: #{tpu_custom_call.1} parent=1 // pred_check
      _
    $region59: #{tpu_custom_call.1} parent=1 // pred_check_branch
      %137 = sbr.rel (0) target = $region61
    $region60: #{tpu_custom_call.1} parent=1 // pred_region
      %s139 = ssub.s32 2048, 2048
      %140 = vsyncadd [#allocation19], %s139
      %s141 = sshll.u32 [#allocation18], 4
      %s142 = int_to_ptr.vmem [resolvable:$true] %s141
      %147 = dma.hbm_to_vmem [thread:$0]  %s14, 2048, %s142, [#allocation19], 128, 128, 8
    $region61: #{tpu_custom_call.1} parent=1 // pred_fallthru
      _
    // Predicated region
    $region62: #{tpu_custom_call.1} parent=1 // pred_check
      _
    $region63: #{tpu_custom_call.1} parent=1 // pred_check_branch
      %149 = sbr.rel (0) target = $region65
    $region64: #{tpu_custom_call.1} parent=1 // pred_region
      _
    $region65: #{tpu_custom_call.1} parent=1 // pred_fallthru
      _
    // Predicated region
    $region66: #{tpu_custom_call.1} parent=1 // pred_check
      _
    $region67: #{tpu_custom_call.1} parent=1 // pred_check_branch
      %151 = sbr.rel (0) target = $region69
    $region68: #{tpu_custom_call.1} parent=1 // pred_region
      %152 = dma.done [#allocation4], 64
    $region69: #{tpu_custom_call.1} parent=1 // pred_fallthru
      _
    // Predicated region
    $region70: #{tpu_custom_call.1} parent=1 // pred_check
      _
    $region71: #{tpu_custom_call.1} parent=1 // pred_check_branch
      %154 = sbr.rel (0) target = $region73
    $region72: #{tpu_custom_call.1} parent=1 // pred_region
      %155 = dma.done [#allocation7], 64
    $region73: #{tpu_custom_call.1} parent=1 // pred_fallthru
      _
    // Predicated region
    $region74: #{tpu_custom_call.1} parent=1 // pred_check
      _
    $region75: #{tpu_custom_call.1} parent=1 // pred_check_branch
      %157 = sbr.rel (0) target = $region77
    $region76: #{tpu_custom_call.1} parent=1 // pred_region
      %158 = dma.done [#allocation7], 64
    $region77: #{tpu_custom_call.1} parent=1 // pred_fallthru
      _
    // Predicated region
    $region78: #{tpu_custom_call.1} parent=1 // pred_check
      _
    $region79: #{tpu_custom_call.1} parent=1 // pred_check_branch
      %160 = sbr.rel (0) target = $region81
    $region80: #{tpu_custom_call.1} parent=1 // pred_region
      %161 = dma.done [#allocation10], 512
    $region81: #{tpu_custom_call.1} parent=1 // pred_fallthru
      _
    // Predicated region
    $region82: #{tpu_custom_call.1} parent=1 // pred_check
      _
    $region83: #{tpu_custom_call.1} parent=1 // pred_check_branch
      %163 = sbr.rel (0) target = $region85
    $region84: #{tpu_custom_call.1} parent=1 // pred_region
      %164 = dma.done [#allocation10], 512
    $region85: #{tpu_custom_call.1} parent=1 // pred_fallthru
      _
    // Predicated region
    $region86: #{tpu_custom_call.1} parent=1 // pred_check
      _
    $region87: #{tpu_custom_call.1} parent=1 // pred_check_branch
      %166 = sbr.rel (0) target = $region89
    $region88: #{tpu_custom_call.1} parent=1 // pred_region
      %167 = dma.done [#allocation13], 16
    $region89: #{tpu_custom_call.1} parent=1 // pred_fallthru
      _
    // Predicated region
    $region90: #{tpu_custom_call.1} parent=1 // pred_check
      _
    $region91: #{tpu_custom_call.1} parent=1 // pred_check_branch
      %169 = sbr.rel (0) target = $region93
    $region92: #{tpu_custom_call.1} parent=1 // pred_region
      %170 = dma.done [#allocation13], 16
    $region93: #{tpu_custom_call.1} parent=1 // pred_fallthru
      _
    // Predicated region
    $region94: #{tpu_custom_call.1} parent=1 // pred_check
      _
    $region95: #{tpu_custom_call.1} parent=1 // pred_check_branch
      %172 = sbr.rel (0) target = $region97
    $region96: #{tpu_custom_call.1} parent=1 // pred_region
      %173 = dma.done [#allocation16], 16
    $region97: #{tpu_custom_call.1} parent=1 // pred_fallthru
      _
    // Predicated region
    $region98: #{tpu_custom_call.1} parent=1 // pred_check
      _
    $region99: #{tpu_custom_call.1} parent=1 // pred_check_branch
      %175 = sbr.rel (0) target = $region101
    $region100: #{tpu_custom_call.1} parent=1 // pred_region
      %176 = dma.done [#allocation16], 16
    $region101: #{tpu_custom_call.1} parent=1 // pred_fallthru
      _
    // Predicated region
    $region102: #{tpu_custom_call.1} parent=1 // pred_check
      _
    $region103: #{tpu_custom_call.1} parent=1 // pred_check_branch
      %178 = sbr.rel (0) target = $region105
    $region104: #{tpu_custom_call.1} parent=1 // pred_region
      %179 = dma.done [#allocation19], 2048
    $region105: #{tpu_custom_call.1} parent=1 // pred_fallthru
      _
    %v180 = vld [vmem:[%s0] sm:$0xff]
    %v181 = vld [vmem:[%s0 + $0x8] sm:$0xff]
    %vm182 = vcmask 31744
    %v183 = vsel %vm182, %v180, 0.0
    %v184 = vsel %vm182, %v181, 0.0
    %v185 = vadd.f32 %v183, %v184
    %v186 = vrot.slane %v185, 4
    %v187 = vadd.f32 %v185, %v186
    %v188 = vrot.slane %v187, 2
    %v189 = vadd.f32 %v187, %v188
    %v190 = vrot.slane %v189, 1
    %v191 = vadd.f32 %v189, %v190
    %v192 = vrcp.pop 16.0
    %v193 = vmul.f32 %v191, %v192
    %v194 = vsub.f32 %v180, %v193
    %v195 = vsub.f32 %v181, %v193
    %v196 = vmul.f32 %v194, %v194
    %v197 = vmul.f32 %v195, %v195
    %v198 = vsel %vm182, %v196, 0.0
    %v199 = vsel %vm182, %v197, 0.0
    %v200 = vadd.f32 %v198, %v199
    %v201 = vrot.slane %v200, 4
    %v202 = vadd.f32 %v200, %v201
    %v203 = vrot.slane %v202, 2
    %v204 = vadd.f32 %v202, %v203
    %v205 = vrot.slane %v204, 1
    %v206 = vadd.f32 %v204, %v205
    %v207 = vrcp.pop 15.0
    %v208 = vmul.f32 %v206, %v207
    %v209 = vrsqrt.pop %v208
    %v210 = vmul.f32 %v208, %v209
    %vm211 = vcmp.eq.f32.partialorder %v208, inf
    %v212 = vsel %vm211, %v208, %v210
    %vm213 = vcmp.eq.f32.partialorder %v208, 0.0
    %v214 = vand.u32 %v208, 2147483648
    %v215 = vsel %vm213, %v214, %v212
    %v216 = vadd.f32 %v215, 1e-08
    %v217 = vrcp.pop %v216
    %v218 = vmul.f32 %v194, %v217
    %v219 = vmul.f32 %v195, %v217
    %v220 = vld [vmem:[#allocation8] sm:$0xf]
    %v221 = vld [vmem:[%s4] sm:$0xff]
    %v222 = vld [vmem:[%s4 + $0x8] sm:$0xff]
    %v223 = vld [vmem:[%s4 + $0x10] sm:$0xff]
    %v224 = vld [vmem:[%s4 + $0x18] sm:$0xff]
    %v225 = vld [vmem:[%s5] sm:$0x1]
    %v227 = vlaneseq
    %v228 = vshrl.u32 %v227, 7
    %v229 = vsub.s32 0, %v228
    %v230 = vrot.slane %v225, %v229
    %v233 = vsel %vm182, %v218, 0
    %v236 = vsel %vm182, %v219, 0
    %vm238 = vcmask 1043456
    %v240 = vsel %vm238, %v220, 0
    %242 = vmatprep.subr.mxu0 0.0
    %243 = vmatpush1.msra.mxu0 %v240
    %244 = vmatprep.subr.mxu0 0.0
    %245 = vmatpush1.msra.mxu0 0.0
    %246 = vmatprep.subr.mxu0 0.0
    %247 = vmatpush1.msra.mxu0 0.0
    %248 = vmatprep.subr.mxu0 0.0
    %249 = vmatpush1.msra.mxu0 0.0
    %250 = vmatprep.subr.mxu0 0.0
    %251 = vmatpush1.msra.mxu0 0.0
    %252 = vmatprep.subr.mxu0 0.0
    %253 = vmatpush1.msra.mxu0 0.0
    %254 = vmatprep.subr.mxu0 0.0
    %255 = vmatpush1.msra.mxu0 0.0
    %256 = vmatprep.subr.mxu0 0.0
    %257 = vmatpush1.msra.mxu0 0.0
    %258 = vmatprep.subr.mxu0 0.0
    %259 = vmatpush1.msra.mxu0 0.0
    %260 = vmatprep.subr.mxu0 0.0
    %261 = vmatpush1.msra.mxu0 0.0
    %262 = vmatprep.subr.mxu0 0.0
    %263 = vmatpush1.msra.mxu0 0.0
    %264 = vmatprep.subr.mxu0 0.0
    %265 = vmatpush1.msra.mxu0 0.0
    %266 = vmatprep.subr.mxu0 0.0
    %267 = vmatpush1.msra.mxu0 0.0
    %268 = vmatprep.subr.mxu0 0.0
    %269 = vmatpush1.msra.mxu0 0.0
    %270 = vmatprep.subr.mxu0 0.0
    %271 = vmatpush1.msra.mxu0 0.0
    %272 = vmatprep.subr.mxu0 0.0
    %273 = vmatpush1.msra.mxu0 0.0
    %274 = vmatprep.subr.mxu0 0.0
    %275 = vmatpush1.msra.mxu0 0.0
    %276 = vmatprep.subr.mxu0 0.0
    %277 = vmatpush1.msra.mxu0 0.0
    %278 = vmatprep.subr.mxu0 0.0
    %279 = vmatpush1.msra.mxu0 0.0
    %280 = vmatprep.subr.mxu0 0.0
    %281 = vmatpush1.msra.mxu0 0.0
    %282 = vmatprep.subr.mxu0 0.0
    %283 = vmatpush1.msra.mxu0 0.0
    %284 = vmatprep.subr.mxu0 0.0
    %285 = vmatpush1.msra.mxu0 0.0
    %286 = vmatprep.subr.mxu0 0.0
    %287 = vmatpush1.msra.mxu0 0.0
    %288 = vmatprep.subr.mxu0 0.0
    %289 = vmatpush1.msra.mxu0 0.0
    %290 = vmatprep.subr.mxu0 0.0
    %291 = vmatpush1.msra.mxu0 0.0
    %292 = vmatprep.subr.mxu0 0.0
    %293 = vmatpush1.msra.mxu0 0.0
    %294 = vmatprep.subr.mxu0 0.0
    %295 = vmatpush1.msra.mxu0 0.0
    %296 = vmatprep.subr.mxu0 0.0
    %297 = vmatpush1.msra.mxu0 0.0
    %298 = vmatprep.subr.mxu0 0.0
    %299 = vmatpush1.msra.mxu0 0.0
    %300 = vmatprep.subr.mxu0 0.0
    %301 = vmatpush1.msra.mxu0 0.0
    %302 = vmatprep.subr.mxu0 0.0
    %303 = vmatpush1.msra.mxu0 0.0
    %304 = vmatprep.subr.mxu0 0.0
    %305 = vmatpush1.msra.mxu0 0.0
    %306 = vmatprep.mubr.f32.mxu0 0.0
    %307 = vmatmul.mubr.f32.gmra.mrb[0].mxu0 %v233
    %v308 = vpop.f32.mrb[0].mxu0
    %v309 = vadd.f32 %v230, %v308
    %v310 = vpop.f32.mrb[0].mxu0
    %311 = vmatprep.mubr.f32.mxu0 0.0
    %312 = vmatmul.mubr.f32.gmra.mrb[0].mxu0 %v236
    %v313 = vpop.f32.mrb[0].mxu0
    %v314 = vadd.f32 %v230, %v313
    %v315 = vpop.f32.mrb[0].mxu0
    %316 = vdwg.mxu0
    %v317 = vld [vmem:[#allocation3] sm:$0x3]
    %v318 = vld [vmem:[#allocation6] sm:$0x3]
    %vm319 = vcmask 261120
    %v321 = vsel %vm319, %v317, 0
    %323 = vmatprep.subr.mxu0 0.0
    %324 = vmatpush1.msra.mxu0 %v221
    %325 = vmatprep.subr.mxu0 0.0
    %326 = vmatpush1.msra.mxu0 %v222
    %327 = vmatprep.subr.mxu0 0.0
    %328 = vmatpush1.msra.mxu0 %v223
    %329 = vmatprep.subr.mxu0 0.0
    %330 = vmatpush1.msra.mxu0 %v224
    %331 = vmatprep.subr.mxu0 0.0
    %332 = vmatpush1.msra.mxu0 0.0
    %333 = vmatprep.subr.mxu0 0.0
    %334 = vmatpush1.msra.mxu0 0.0
    %335 = vmatprep.subr.mxu0 0.0
    %336 = vmatpush1.msra.mxu0 0.0
    %337 = vmatprep.subr.mxu0 0.0
    %338 = vmatpush1.msra.mxu0 0.0
    %339 = vmatprep.subr.mxu0 0.0
    %340 = vmatpush1.msra.mxu0 0.0
    %341 = vmatprep.subr.mxu0 0.0
    %342 = vmatpush1.msra.mxu0 0.0
    %343 = vmatprep.subr.mxu0 0.0
    %344 = vmatpush1.msra.mxu0 0.0
    %345 = vmatprep.subr.mxu0 0.0
    %346 = vmatpush1.msra.mxu0 0.0
    %347 = vmatprep.subr.mxu0 0.0
    %348 = vmatpush1.msra.mxu0 0.0
    %349 = vmatprep.subr.mxu0 0.0
    %350 = vmatpush1.msra.mxu0 0.0
    %351 = vmatprep.subr.mxu0 0.0
    %352 = vmatpush1.msra.mxu0 0.0
    %353 = vmatprep.subr.mxu0 0.0
    %354 = vmatpush1.msra.mxu0 0.0
    %355 = vmatprep.subr.mxu0 0.0
    %356 = vmatpush1.msra.mxu0 0.0
    %357 = vmatprep.subr.mxu0 0.0
    %358 = vmatpush1.msra.mxu0 0.0
    %359 = vmatprep.subr.mxu0 0.0
    %360 = vmatpush1.msra.mxu0 0.0
    %361 = vmatprep.subr.mxu0 0.0
    %362 = vmatpush1.msra.mxu0 0.0
    %363 = vmatprep.subr.mxu0 0.0
    %364 = vmatpush1.msra.mxu0 0.0
    %365 = vmatprep.subr.mxu0 0.0
    %366 = vmatpush1.msra.mxu0 0.0
    %367 = vmatprep.subr.mxu0 0.0
    %368 = vmatpush1.msra.mxu0 0.0
    %369 = vmatprep.subr.mxu0 0.0
    %370 = vmatpush1.msra.mxu0 0.0
    %371 = vmatprep.subr.mxu0 0.0
    %372 = vmatpush1.msra.mxu0 0.0
    %373 = vmatprep.subr.mxu0 0.0
    %374 = vmatpush1.msra.mxu0 0.0
    %375 = vmatprep.subr.mxu0 0.0
    %376 = vmatpush1.msra.mxu0 0.0
    %377 = vmatprep.subr.mxu0 0.0
    %378 = vmatpush1.msra.mxu0 0.0
    %379 = vmatprep.subr.mxu0 0.0
    %380 = vmatpush1.msra.mxu0 0.0
    %381 = vmatprep.subr.mxu0 0.0
    %382 = vmatpush1.msra.mxu0 0.0
    %383 = vmatprep.subr.mxu0 0.0
    %384 = vmatpush1.msra.mxu0 0.0
    %385 = vmatprep.subr.mxu0 0.0
    %386 = vmatpush1.msra.mxu0 0.0
    %387 = vmatprep.mubr.f32.mxu0 0.0
    %388 = vmatmul.mubr.f32.gmra.mrb[0].mxu0 %v321
    %v389 = vpop.f32.mrb[0].mxu0
    %v390 = vadd.f32 0.0, %v389
    %v391 = vpop.f32.mrb[0].mxu0
    %392 = vdwg.mxu0
    %v393 = vadd.f32 %v309, %v390
    %v394 = vxor.u32 %v393, 2147483648
    %v395 = vmul.f32 %v394, 1.442695
    %v396 = vpow.pop %v395
    %v397 = vadd.f32 %v396, 1.0
    %v398 = vrcp.pop %v397
    %v399 = vmul.f32 1.0, %v398
    %v400 = vtanh.pop %v393
    %402 = vrot.lane.b32.xlu0 %v318, 32
    %v403 = vpop.permute.xlu0 %402
    %v405 = vmul.f32 %v399, %v403
    %407 = vrot.lane.b32.xlu0 %v400, 64
    %v408 = vpop.permute.xlu0 %407
    %v410 = vmul.f32 %v399, %v408
    %412 = vrot.lane.b32.xlu0 %v410, 32
    %v413 = vpop.permute.xlu0 %412
    %v415 = vadd.f32 %v405, %v413
    %v416 = vtanh.pop %v415
    %418 = vrot.lane.b32.xlu0 %v416, 64
    %v419 = vpop.permute.xlu0 %418
    %v421 = vmul.f32 %v399, %v419
    %423 = vrot.lane.b32.xlu0 %v421, 32
    %v424 = vpop.permute.xlu0 %423
    %vm426 = vcmask 254976
    %427 = vst.msk [vmem:[#allocation2] sm:$0x3] %vm426, %v424
    %v428 = vsel %vm319, %v424, 0
    %430 = vmatprep.subr.mxu0 0.0
    %431 = vmatpush1.msra.mxu0 %v221
    %432 = vmatprep.subr.mxu0 0.0
    %433 = vmatpush1.msra.mxu0 %v222
    %434 = vmatprep.subr.mxu0 0.0
    %435 = vmatpush1.msra.mxu0 %v223
    %436 = vmatprep.subr.mxu0 0.0
    %437 = vmatpush1.msra.mxu0 %v224
    %438 = vmatprep.subr.mxu0 0.0
    %439 = vmatpush1.msra.mxu0 0.0
    %440 = vmatprep.subr.mxu0 0.0
    %441 = vmatpush1.msra.mxu0 0.0
    %442 = vmatprep.subr.mxu0 0.0
    %443 = vmatpush1.msra.mxu0 0.0
    %444 = vmatprep.subr.mxu0 0.0
    %445 = vmatpush1.msra.mxu0 0.0
    %446 = vmatprep.subr.mxu0 0.0
    %447 = vmatpush1.msra.mxu0 0.0
    %448 = vmatprep.subr.mxu0 0.0
    %449 = vmatpush1.msra.mxu0 0.0
    %450 = vmatprep.subr.mxu0 0.0
    %451 = vmatpush1.msra.mxu0 0.0
    %452 = vmatprep.subr.mxu0 0.0
    %453 = vmatpush1.msra.mxu0 0.0
    %454 = vmatprep.subr.mxu0 0.0
    %455 = vmatpush1.msra.mxu0 0.0
    %456 = vmatprep.subr.mxu0 0.0
    %457 = vmatpush1.msra.mxu0 0.0
    %458 = vmatprep.subr.mxu0 0.0
    %459 = vmatpush1.msra.mxu0 0.0
    %460 = vmatprep.subr.mxu0 0.0
    %461 = vmatpush1.msra.mxu0 0.0
    %462 = vmatprep.subr.mxu0 0.0
    %463 = vmatpush1.msra.mxu0 0.0
    %464 = vmatprep.subr.mxu0 0.0
    %465 = vmatpush1.msra.mxu0 0.0
    %466 = vmatprep.subr.mxu0 0.0
    %467 = vmatpush1.msra.mxu0 0.0
    %468 = vmatprep.subr.mxu0 0.0
    %469 = vmatpush1.msra.mxu0 0.0
    %470 = vmatprep.subr.mxu0 0.0
    %471 = vmatpush1.msra.mxu0 0.0
    %472 = vmatprep.subr.mxu0 0.0
    %473 = vmatpush1.msra.mxu0 0.0
    %474 = vmatprep.subr.mxu0 0.0
    %475 = vmatpush1.msra.mxu0 0.0
    %476 = vmatprep.subr.mxu0 0.0
    %477 = vmatpush1.msra.mxu0 0.0
    %478 = vmatprep.subr.mxu0 0.0
    %479 = vmatpush1.msra.mxu0 0.0
    %480 = vmatprep.subr.mxu0 0.0
    %481 = vmatpush1.msra.mxu0 0.0
    %482 = vmatprep.subr.mxu0 0.0
    %483 = vmatpush1.msra.mxu0 0.0
    %484 = vmatprep.subr.mxu0 0.0
    %485 = vmatpush1.msra.mxu0 0.0
    %486 = vmatprep.subr.mxu0 0.0
    %487 = vmatpush1.msra.mxu0 0.0
    %488 = vmatprep.subr.mxu0 0.0
    %489 = vmatpush1.msra.mxu0 0.0
    %490 = vmatprep.subr.mxu0 0.0
    %491 = vmatpush1.msra.mxu0 0.0
    %492 = vmatprep.subr.mxu0 0.0
    %493 = vmatpush1.msra.mxu0 0.0
    %494 = vmatprep.mubr.f32.mxu0 0.0
    %495 = vmatmul.mubr.f32.gmra.mrb[0].mxu0 %v428
    %v496 = vpop.f32.mrb[0].mxu0
    %v497 = vadd.f32 0.0, %v496
    %v498 = vpop.f32.mrb[0].mxu0
    %499 = vdwg.mxu0
    %v501 = vrot.slane %v497, 6
    %v503 = vadd.f32 %v309, %v501
    %v504 = vxor.u32 %v503, 2147483648
    %v505 = vmul.f32 %v504, 1.442695
    %v506 = vpow.pop %v505
    %v507 = vadd.f32 %v506, 1.0
    %v508 = vrcp.pop %v507
    %v509 = vmul.f32 1.0, %v508
    %v510 = vtanh.pop %v503
    %v512 = vrot.slane %v415, 6
    %v514 = vmul.f32 %v509, %v512
    %516 = vrot.lane.b32.xlu0 %v510, 64
    %v517 = vpop.permute.xlu0 %516
    %v519 = vmul.f32 %v509, %v517
    %521 = vrot.lane.b32.xlu0 %v519, 32
    %v522 = vpop.permute.xlu0 %521
    %v524 = vadd.f32 %v514, %v522
    %v525 = vtanh.pop %v524
    %527 = vrot.lane.b32.xlu0 %v525, 64
    %v528 = vpop.permute.xlu0 %527
    %v530 = vmul.f32 %v509, %v528
    %532 = vrot.lane.b32.xlu0 %v530, 32
    %v533 = vpop.permute.xlu0 %532
    %vm535 = vcmask 257026
    %536 = vst.msk [vmem:[#allocation2] sm:$0xc] %vm535, %v533
    %v537 = vrot.slane %v530, 2
    %538 = vrot.lane.b32.xlu0 %v537, 32
    %v539 = vpop.permute.xlu0 %538
    %v540 = vsel %vm319, %v539, 0
    %542 = vmatprep.subr.mxu0 0.0
    %543 = vmatpush1.msra.mxu0 %v221
    %544 = vmatprep.subr.mxu0 0.0
    %545 = vmatpush1.msra.mxu0 %v222
    %546 = vmatprep.subr.mxu0 0.0
    %547 = vmatpush1.msra.mxu0 %v223
    %548 = vmatprep.subr.mxu0 0.0
    %549 = vmatpush1.msra.mxu0 %v224
    %550 = vmatprep.subr.mxu0 0.0
    %551 = vmatpush1.msra.mxu0 0.0
    %552 = vmatprep.subr.mxu0 0.0
    %553 = vmatpush1.msra.mxu0 0.0
    %554 = vmatprep.subr.mxu0 0.0
    %555 = vmatpush1.msra.mxu0 0.0
    %556 = vmatprep.subr.mxu0 0.0
    %557 = vmatpush1.msra.mxu0 0.0
    %558 = vmatprep.subr.mxu0 0.0
    %559 = vmatpush1.msra.mxu0 0.0
    %560 = vmatprep.subr.mxu0 0.0
    %561 = vmatpush1.msra.mxu0 0.0
    %562 = vmatprep.subr.mxu0 0.0
    %563 = vmatpush1.msra.mxu0 0.0
    %564 = vmatprep.subr.mxu0 0.0
    %565 = vmatpush1.msra.mxu0 0.0
    %566 = vmatprep.subr.mxu0 0.0
    %567 = vmatpush1.msra.mxu0 0.0
    %568 = vmatprep.subr.mxu0 0.0
    %569 = vmatpush1.msra.mxu0 0.0
    %570 = vmatprep.subr.mxu0 0.0
    %571 = vmatpush1.msra.mxu0 0.0
    %572 = vmatprep.subr.mxu0 0.0
    %573 = vmatpush1.msra.mxu0 0.0
    %574 = vmatprep.subr.mxu0 0.0
    %575 = vmatpush1.msra.mxu0 0.0
    %576 = vmatprep.subr.mxu0 0.0
    %577 = vmatpush1.msra.mxu0 0.0
    %578 = vmatprep.subr.mxu0 0.0
    %579 = vmatpush1.msra.mxu0 0.0
    %580 = vmatprep.subr.mxu0 0.0
    %581 = vmatpush1.msra.mxu0 0.0
    %582 = vmatprep.subr.mxu0 0.0
    %583 = vmatpush1.msra.mxu0 0.0
    %584 = vmatprep.subr.mxu0 0.0
    %585 = vmatpush1.msra.mxu0 0.0
    %586 = vmatprep.subr.mxu0 0.0
    %587 = vmatpush1.msra.mxu0 0.0
    %588 = vmatprep.subr.mxu0 0.0
    %589 = vmatpush1.msra.mxu0 0.0
    %590 = vmatprep.subr.mxu0 0.0
    %591 = vmatpush1.msra.mxu0 0.0
    %592 = vmatprep.subr.mxu0 0.0
    %593 = vmatpush1.msra.mxu0 0.0
    %594 = vmatprep.subr.mxu0 0.0
    %595 = vmatpush1.msra.mxu0 0.0
    %596 = vmatprep.subr.mxu0 0.0
    %597 = vmatpush1.msra.mxu0 0.0
    %598 = vmatprep.subr.mxu0 0.0
    %599 = vmatpush1.msra.mxu0 0.0
    %600 = vmatprep.subr.mxu0 0.0
    %601 = vmatpush1.msra.mxu0 0.0
    %602 = vmatprep.subr.mxu0 0.0
    %603 = vmatpush1.msra.mxu0 0.0
    %604 = vmatprep.subr.mxu0 0.0
    %605 = vmatpush1.msra.mxu0 0.0
    %606 = vmatprep.mubr.f32.mxu0 0.0
    %607 = vmatmul.mubr.f32.gmra.mrb[0].mxu0 %v540
    %v608 = vpop.f32.mrb[0].mxu0
    %v609 = vadd.f32 0.0, %v608
    %v610 = vpop.f32.mrb[0].mxu0
    %611 = vdwg.mxu0
    %v613 = vrot.slane %v609, 4
    %v615 = vadd.f32 %v309, %v613
    %v616 = vxor.u32 %v615, 2147483648
    %v617 = vmul.f32 %v616, 1.442695
    %v618 = vpow.pop %v617
    %v619 = vadd.f32 %v618, 1.0
    %v620 = vrcp.pop %v619
    %v621 = vmul.f32 1.0, %v620
    %v622 = vtanh.pop %v615
    %v624 = vrot.slane %v524, 6
    %v626 = vmul.f32 %v621, %v624
    %628 = vrot.lane.b32.xlu0 %v622, 64
    %v629 = vpop.permute.xlu0 %628
    %v631 = vmul.f32 %v621, %v629
    %633 = vrot.lane.b32.xlu0 %v631, 32
    %v634 = vpop.permute.xlu0 %633
    %v636 = vadd.f32 %v626, %v634
    %v637 = vtanh.pop %v636
    %639 = vrot.lane.b32.xlu0 %v637, 64
    %v640 = vpop.permute.xlu0 %639
    %v642 = vmul.f32 %v621, %v640
    %644 = vrot.lane.b32.xlu0 %v642, 32
    %v645 = vpop.permute.xlu0 %644
    %vm647 = vcmask 259076
    %648 = vst.msk [vmem:[#allocation2] sm:$0x30] %vm647, %v645
    %v649 = vrot.slane %v642, 4
    %650 = vrot.lane.b32.xlu0 %v649, 32
    %v651 = vpop.permute.xlu0 %650
    %v652 = vsel %vm319, %v651, 0
    %654 = vmatprep.subr.mxu0 0.0
    %655 = vmatpush1.msra.mxu0 %v221
    %656 = vmatprep.subr.mxu0 0.0
    %657 = vmatpush1.msra.mxu0 %v222
    %658 = vmatprep.subr.mxu0 0.0
    %659 = vmatpush1.msra.mxu0 %v223
    %660 = vmatprep.subr.mxu0 0.0
    %661 = vmatpush1.msra.mxu0 %v224
    %662 = vmatprep.subr.mxu0 0.0
    %663 = vmatpush1.msra.mxu0 0.0
    %664 = vmatprep.subr.mxu0 0.0
    %665 = vmatpush1.msra.mxu0 0.0
    %666 = vmatprep.subr.mxu0 0.0
    %667 = vmatpush1.msra.mxu0 0.0
    %668 = vmatprep.subr.mxu0 0.0
    %669 = vmatpush1.msra.mxu0 0.0
    %670 = vmatprep.subr.mxu0 0.0
    %671 = vmatpush1.msra.mxu0 0.0
    %672 = vmatprep.subr.mxu0 0.0
    %673 = vmatpush1.msra.mxu0 0.0
    %674 = vmatprep.subr.mxu0 0.0
    %675 = vmatpush1.msra.mxu0 0.0
    %676 = vmatprep.subr.mxu0 0.0
    %677 = vmatpush1.msra.mxu0 0.0
    %678 = vmatprep.subr.mxu0 0.0
    %679 = vmatpush1.msra.mxu0 0.0
    %680 = vmatprep.subr.mxu0 0.0
    %681 = vmatpush1.msra.mxu0 0.0
    %682 = vmatprep.subr.mxu0 0.0
    %683 = vmatpush1.msra.mxu0 0.0
    %684 = vmatprep.subr.mxu0 0.0
    %685 = vmatpush1.msra.mxu0 0.0
    %686 = vmatprep.subr.mxu0 0.0
    %687 = vmatpush1.msra.mxu0 0.0
    %688 = vmatprep.subr.mxu0 0.0
    %689 = vmatpush1.msra.mxu0 0.0
    %690 = vmatprep.subr.mxu0 0.0
    %691 = vmatpush1.msra.mxu0 0.0
    %692 = vmatprep.subr.mxu0 0.0
    %693 = vmatpush1.msra.mxu0 0.0
    %694 = vmatprep.subr.mxu0 0.0
    %695 = vmatpush1.msra.mxu0 0.0
    %696 = vmatprep.subr.mxu0 0.0
    %697 = vmatpush1.msra.mxu0 0.0
    %698 = vmatprep.subr.mxu0 0.0
    %699 = vmatpush1.msra.mxu0 0.0
    %700 = vmatprep.subr.mxu0 0.0
    %701 = vmatpush1.msra.mxu0 0.0
    %702 = vmatprep.subr.mxu0 0.0
    %703 = vmatpush1.msra.mxu0 0.0
    %704 = vmatprep.subr.mxu0 0.0
    %705 = vmatpush1.msra.mxu0 0.0
    %706 = vmatprep.subr.mxu0 0.0
    %707 = vmatpush1.msra.mxu0 0.0
    %708 = vmatprep.subr.mxu0 0.0
    %709 = vmatpush1.msra.mxu0 0.0
    %710 = vmatprep.subr.mxu0 0.0
    %711 = vmatpush1.msra.mxu0 0.0
    %712 = vmatprep.subr.mxu0 0.0
    %713 = vmatpush1.msra.mxu0 0.0
    %714 = vmatprep.subr.mxu0 0.0
    %715 = vmatpush1.msra.mxu0 0.0
    %716 = vmatprep.subr.mxu0 0.0
    %717 = vmatpush1.msra.mxu0 0.0
    %718 = vmatprep.mubr.f32.mxu0 0.0
    %719 = vmatmul.mubr.f32.gmra.mrb[0].mxu0 %v652
    %v720 = vpop.f32.mrb[0].mxu0
    %v721 = vadd.f32 0.0, %v720
    %v722 = vpop.f32.mrb[0].mxu0
    %723 = vdwg.mxu0
    %v725 = vrot.slane %v721, 2
    %v727 = vadd.f32 %v309, %v725
    %v728 = vxor.u32 %v727, 2147483648
    %v729 = vmul.f32 %v728, 1.442695
    %v730 = vpow.pop %v729
    %v731 = vadd.f32 %v730, 1.0
    %v732 = vrcp.pop %v731
    %v733 = vmul.f32 1.0, %v732
    %v734 = vtanh.pop %v727
    %v736 = vrot.slane %v636, 6
    %v738 = vmul.f32 %v733, %v736
    %740 = vrot.lane.b32.xlu0 %v734, 64
    %v741 = vpop.permute.xlu0 %740
    %v743 = vmul.f32 %v733, %v741
    %745 = vrot.lane.b32.xlu0 %v743, 32
    %v746 = vpop.permute.xlu0 %745
    %v748 = vadd.f32 %v738, %v746
    %v749 = vtanh.pop %v748
    %751 = vrot.lane.b32.xlu0 %v749, 64
    %v752 = vpop.permute.xlu0 %751
    %v754 = vmul.f32 %v733, %v752
    %756 = vrot.lane.b32.xlu0 %v754, 32
    %v757 = vpop.permute.xlu0 %756
    %vm759 = vcmask 261126
    %760 = vst.msk [vmem:[#allocation2] sm:$0xc0] %vm759, %v757
    %v761 = vrot.slane %v754, 6
    %762 = vrot.lane.b32.xlu0 %v761, 32
    %v763 = vpop.permute.xlu0 %762
    %v764 = vsel %vm319, %v763, 0
    %766 = vmatprep.subr.mxu0 0.0
    %767 = vmatpush1.msra.mxu0 %v221
    %768 = vmatprep.subr.mxu0 0.0
    %769 = vmatpush1.msra.mxu0 %v222
    %770 = vmatprep.subr.mxu0 0.0
    %771 = vmatpush1.msra.mxu0 %v223
    %772 = vmatprep.subr.mxu0 0.0
    %773 = vmatpush1.msra.mxu0 %v224
    %774 = vmatprep.subr.mxu0 0.0
    %775 = vmatpush1.msra.mxu0 0.0
    %776 = vmatprep.subr.mxu0 0.0
    %777 = vmatpush1.msra.mxu0 0.0
    %778 = vmatprep.subr.mxu0 0.0
    %779 = vmatpush1.msra.mxu0 0.0
    %780 = vmatprep.subr.mxu0 0.0
    %781 = vmatpush1.msra.mxu0 0.0
    %782 = vmatprep.subr.mxu0 0.0
    %783 = vmatpush1.msra.mxu0 0.0
    %784 = vmatprep.subr.mxu0 0.0
    %785 = vmatpush1.msra.mxu0 0.0
    %786 = vmatprep.subr.mxu0 0.0
    %787 = vmatpush1.msra.mxu0 0.0
    %788 = vmatprep.subr.mxu0 0.0
    %789 = vmatpush1.msra.mxu0 0.0
    %790 = vmatprep.subr.mxu0 0.0
    %791 = vmatpush1.msra.mxu0 0.0
    %792 = vmatprep.subr.mxu0 0.0
    %793 = vmatpush1.msra.mxu0 0.0
    %794 = vmatprep.subr.mxu0 0.0
    %795 = vmatpush1.msra.mxu0 0.0
    %796 = vmatprep.subr.mxu0 0.0
    %797 = vmatpush1.msra.mxu0 0.0
    %798 = vmatprep.subr.mxu0 0.0
    %799 = vmatpush1.msra.mxu0 0.0
    %800 = vmatprep.subr.mxu0 0.0
    %801 = vmatpush1.msra.mxu0 0.0
    %802 = vmatprep.subr.mxu0 0.0
    %803 = vmatpush1.msra.mxu0 0.0
    %804 = vmatprep.subr.mxu0 0.0
    %805 = vmatpush1.msra.mxu0 0.0
    %806 = vmatprep.subr.mxu0 0.0
    %807 = vmatpush1.msra.mxu0 0.0
    %808 = vmatprep.subr.mxu0 0.0
    %809 = vmatpush1.msra.mxu0 0.0
    %810 = vmatprep.subr.mxu0 0.0
    %811 = vmatpush1.msra.mxu0 0.0
    %812 = vmatprep.subr.mxu0 0.0
    %813 = vmatpush1.msra.mxu0 0.0
    %814 = vmatprep.subr.mxu0 0.0
    %815 = vmatpush1.msra.mxu0 0.0
    %816 = vmatprep.subr.mxu0 0.0
    %817 = vmatpush1.msra.mxu0 0.0
    %818 = vmatprep.subr.mxu0 0.0
    %819 = vmatpush1.msra.mxu0 0.0
    %820 = vmatprep.subr.mxu0 0.0
    %821 = vmatpush1.msra.mxu0 0.0
    %822 = vmatprep.subr.mxu0 0.0
    %823 = vmatpush1.msra.mxu0 0.0
    %824 = vmatprep.subr.mxu0 0.0
    %825 = vmatpush1.msra.mxu0 0.0
    %826 = vmatprep.subr.mxu0 0.0
    %827 = vmatpush1.msra.mxu0 0.0
    %828 = vmatprep.subr.mxu0 0.0
    %829 = vmatpush1.msra.mxu0 0.0
    %830 = vmatprep.mubr.f32.mxu0 0.0
    %831 = vmatmul.mubr.f32.gmra.mrb[0].mxu0 %v764
    %v832 = vpop.f32.mrb[0].mxu0
    %v833 = vadd.f32 0.0, %v832
    %v834 = vpop.f32.mrb[0].mxu0
    %835 = vdwg.mxu0
    %v836 = vadd.f32 %v314, %v833
    %v837 = vxor.u32 %v836, 2147483648
    %v838 = vmul.f32 %v837, 1.442695
    %v839 = vpow.pop %v838
    %v840 = vadd.f32 %v839, 1.0
    %v841 = vrcp.pop %v840
    %v842 = vmul.f32 1.0, %v841
    %v843 = vtanh.pop %v836
    %v845 = vrot.slane %v748, 6
    %v847 = vmul.f32 %v842, %v845
    %849 = vrot.lane.b32.xlu0 %v843, 64
    %v850 = vpop.permute.xlu0 %849
    %v852 = vmul.f32 %v842, %v850
    %854 = vrot.lane.b32.xlu0 %v852, 32
    %v855 = vpop.permute.xlu0 %854
    %v857 = vadd.f32 %v847, %v855
    %v858 = vtanh.pop %v857
    %860 = vrot.lane.b32.xlu0 %v858, 64
    %v861 = vpop.permute.xlu0 %860
    %v863 = vmul.f32 %v842, %v861
    %865 = vrot.lane.b32.xlu0 %v863, 32
    %v866 = vpop.permute.xlu0 %865
    %868 = vst.msk [vmem:[#allocation2 + $0x8] sm:$0x3] %vm426, %v866
    %v869 = vsel %vm319, %v866, 0
    %871 = vmatprep.subr.mxu0 0.0
    %872 = vmatpush1.msra.mxu0 %v221
    %873 = vmatprep.subr.mxu0 0.0
    %874 = vmatpush1.msra.mxu0 %v222
    %875 = vmatprep.subr.mxu0 0.0
    %876 = vmatpush1.msra.mxu0 %v223
    %877 = vmatprep.subr.mxu0 0.0
    %878 = vmatpush1.msra.mxu0 %v224
    %879 = vmatprep.subr.mxu0 0.0
    %880 = vmatpush1.msra.mxu0 0.0
    %881 = vmatprep.subr.mxu0 0.0
    %882 = vmatpush1.msra.mxu0 0.0
    %883 = vmatprep.subr.mxu0 0.0
    %884 = vmatpush1.msra.mxu0 0.0
    %885 = vmatprep.subr.mxu0 0.0
    %886 = vmatpush1.msra.mxu0 0.0
    %887 = vmatprep.subr.mxu0 0.0
    %888 = vmatpush1.msra.mxu0 0.0
    %889 = vmatprep.subr.mxu0 0.0
    %890 = vmatpush1.msra.mxu0 0.0
    %891 = vmatprep.subr.mxu0 0.0
    %892 = vmatpush1.msra.mxu0 0.0
    %893 = vmatprep.subr.mxu0 0.0
    %894 = vmatpush1.msra.mxu0 0.0
    %895 = vmatprep.subr.mxu0 0.0
    %896 = vmatpush1.msra.mxu0 0.0
    %897 = vmatprep.subr.mxu0 0.0
    %898 = vmatpush1.msra.mxu0 0.0
    %899 = vmatprep.subr.mxu0 0.0
    %900 = vmatpush1.msra.mxu0 0.0
    %901 = vmatprep.subr.mxu0 0.0
    %902 = vmatpush1.msra.mxu0 0.0
    %903 = vmatprep.subr.mxu0 0.0
    %904 = vmatpush1.msra.mxu0 0.0
    %905 = vmatprep.subr.mxu0 0.0
    %906 = vmatpush1.msra.mxu0 0.0
    %907 = vmatprep.subr.mxu0 0.0
    %908 = vmatpush1.msra.mxu0 0.0
    %909 = vmatprep.subr.mxu0 0.0
    %910 = vmatpush1.msra.mxu0 0.0
    %911 = vmatprep.subr.mxu0 0.0
    %912 = vmatpush1.msra.mxu0 0.0
    %913 = vmatprep.subr.mxu0 0.0
    %914 = vmatpush1.msra.mxu0 0.0
    %915 = vmatprep.subr.mxu0 0.0
    %916 = vmatpush1.msra.mxu0 0.0
    %917 = vmatprep.subr.mxu0 0.0
    %918 = vmatpush1.msra.mxu0 0.0
    %919 = vmatprep.subr.mxu0 0.0
    %920 = vmatpush1.msra.mxu0 0.0
    %921 = vmatprep.subr.mxu0 0.0
    %922 = vmatpush1.msra.mxu0 0.0
    %923 = vmatprep.subr.mxu0 0.0
    %924 = vmatpush1.msra.mxu0 0.0
    %925 = vmatprep.subr.mxu0 0.0
    %926 = vmatpush1.msra.mxu0 0.0
    %927 = vmatprep.subr.mxu0 0.0
    %928 = vmatpush1.msra.mxu0 0.0
    %929 = vmatprep.subr.mxu0 0.0
    %930 = vmatpush1.msra.mxu0 0.0
    %931 = vmatprep.subr.mxu0 0.0
    %932 = vmatpush1.msra.mxu0 0.0
    %933 = vmatprep.subr.mxu0 0.0
    %934 = vmatpush1.msra.mxu0 0.0
    %935 = vmatprep.mubr.f32.mxu0 0.0
    %936 = vmatmul.mubr.f32.gmra.mrb[0].mxu0 %v869
    %v937 = vpop.f32.mrb[0].mxu0
    %v938 = vadd.f32 0.0, %v937
    %v939 = vpop.f32.mrb[0].mxu0
    %940 = vdwg.mxu0
    %v942 = vrot.slane %v938, 6
    %v944 = vadd.f32 %v314, %v942
    %v945 = vxor.u32 %v944, 2147483648
    %v946 = vmul.f32 %v945, 1.442695
    %v947 = vpow.pop %v946
    %v948 = vadd.f32 %v947, 1.0
    %v949 = vrcp.pop %v948
    %v950 = vmul.f32 1.0, %v949
    %v951 = vtanh.pop %v944
    %v953 = vrot.slane %v857, 6
    %v955 = vmul.f32 %v950, %v953
    %957 = vrot.lane.b32.xlu0 %v951, 64
    %v958 = vpop.permute.xlu0 %957
    %v960 = vmul.f32 %v950, %v958
    %962 = vrot.lane.b32.xlu0 %v960, 32
    %v963 = vpop.permute.xlu0 %962
    %v965 = vadd.f32 %v955, %v963
    %v966 = vtanh.pop %v965
    %968 = vrot.lane.b32.xlu0 %v966, 64
    %v969 = vpop.permute.xlu0 %968
    %v971 = vmul.f32 %v950, %v969
    %973 = vrot.lane.b32.xlu0 %v971, 32
    %v974 = vpop.permute.xlu0 %973
    %976 = vst.msk [vmem:[#allocation2 + $0x8] sm:$0xc] %vm535, %v974
    %v977 = vrot.slane %v971, 2
    %978 = vrot.lane.b32.xlu0 %v977, 32
    %v979 = vpop.permute.xlu0 %978
    %v980 = vsel %vm319, %v979, 0
    %982 = vmatprep.subr.mxu0 0.0
    %983 = vmatpush1.msra.mxu0 %v221
    %984 = vmatprep.subr.mxu0 0.0
    %985 = vmatpush1.msra.mxu0 %v222
    %986 = vmatprep.subr.mxu0 0.0
    %987 = vmatpush1.msra.mxu0 %v223
    %988 = vmatprep.subr.mxu0 0.0
    %989 = vmatpush1.msra.mxu0 %v224
    %990 = vmatprep.subr.mxu0 0.0
    %991 = vmatpush1.msra.mxu0 0.0
    %992 = vmatprep.subr.mxu0 0.0
    %993 = vmatpush1.msra.mxu0 0.0
    %994 = vmatprep.subr.mxu0 0.0
    %995 = vmatpush1.msra.mxu0 0.0
    %996 = vmatprep.subr.mxu0 0.0
    %997 = vmatpush1.msra.mxu0 0.0
    %998 = vmatprep.subr.mxu0 0.0
    %999 = vmatpush1.msra.mxu0 0.0
    %1000 = vmatprep.subr.mxu0 0.0
    %1001 = vmatpush1.msra.mxu0 0.0
    %1002 = vmatprep.subr.mxu0 0.0
    %1003 = vmatpush1.msra.mxu0 0.0
    %1004 = vmatprep.subr.mxu0 0.0
    %1005 = vmatpush1.msra.mxu0 0.0
    %1006 = vmatprep.subr.mxu0 0.0
    %1007 = vmatpush1.msra.mxu0 0.0
    %1008 = vmatprep.subr.mxu0 0.0
    %1009 = vmatpush1.msra.mxu0 0.0
    %1010 = vmatprep.subr.mxu0 0.0
    %1011 = vmatpush1.msra.mxu0 0.0
    %1012 = vmatprep.subr.mxu0 0.0
    %1013 = vmatpush1.msra.mxu0 0.0
    %1014 = vmatprep.subr.mxu0 0.0
    %1015 = vmatpush1.msra.mxu0 0.0
    %1016 = vmatprep.subr.mxu0 0.0
    %1017 = vmatpush1.msra.mxu0 0.0
    %1018 = vmatprep.subr.mxu0 0.0
    %1019 = vmatpush1.msra.mxu0 0.0
    %1020 = vmatprep.subr.mxu0 0.0
    %1021 = vmatpush1.msra.mxu0 0.0
    %1022 = vmatprep.subr.mxu0 0.0
    %1023 = vmatpush1.msra.mxu0 0.0
    %1024 = vmatprep.subr.mxu0 0.0
    %1025 = vmatpush1.msra.mxu0 0.0
    %1026 = vmatprep.subr.mxu0 0.0
    %1027 = vmatpush1.msra.mxu0 0.0
    %1028 = vmatprep.subr.mxu0 0.0
    %1029 = vmatpush1.msra.mxu0 0.0
    %1030 = vmatprep.subr.mxu0 0.0
    %1031 = vmatpush1.msra.mxu0 0.0
    %1032 = vmatprep.subr.mxu0 0.0
    %1033 = vmatpush1.msra.mxu0 0.0
    %1034 = vmatprep.subr.mxu0 0.0
    %1035 = vmatpush1.msra.mxu0 0.0
    %1036 = vmatprep.subr.mxu0 0.0
    %1037 = vmatpush1.msra.mxu0 0.0
    %1038 = vmatprep.subr.mxu0 0.0
    %1039 = vmatpush1.msra.mxu0 0.0
    %1040 = vmatprep.subr.mxu0 0.0
    %1041 = vmatpush1.msra.mxu0 0.0
    %1042 = vmatprep.subr.mxu0 0.0
    %1043 = vmatpush1.msra.mxu0 0.0
    %1044 = vmatprep.subr.mxu0 0.0
    %1045 = vmatpush1.msra.mxu0 0.0
    %1046 = vmatprep.mubr.f32.mxu0 0.0
    %1047 = vmatmul.mubr.f32.gmra.mrb[0].mxu0 %v980
    %v1048 = vpop.f32.mrb[0].mxu0
    %v1049 = vadd.f32 0.0, %v1048
    %v1050 = vpop.f32.mrb[0].mxu0
    %1051 = vdwg.mxu0
    %v1053 = vrot.slane %v1049, 4
    %v1055 = vadd.f32 %v314, %v1053
    %v1056 = vxor.u32 %v1055, 2147483648
    %v1057 = vmul.f32 %v1056, 1.442695
    %v1058 = vpow.pop %v1057
    %v1059 = vadd.f32 %v1058, 1.0
    %v1060 = vrcp.pop %v1059
    %v1061 = vmul.f32 1.0, %v1060
    %v1062 = vtanh.pop %v1055
    %v1064 = vrot.slane %v965, 6
    %v1066 = vmul.f32 %v1061, %v1064
    %1068 = vrot.lane.b32.xlu0 %v1062, 64
    %v1069 = vpop.permute.xlu0 %1068
    %v1071 = vmul.f32 %v1061, %v1069
    %1073 = vrot.lane.b32.xlu0 %v1071, 32
    %v1074 = vpop.permute.xlu0 %1073
    %v1076 = vadd.f32 %v1066, %v1074
    %v1077 = vtanh.pop %v1076
    %1079 = vrot.lane.b32.xlu0 %v1077, 64
    %v1080 = vpop.permute.xlu0 %1079
    %v1082 = vmul.f32 %v1061, %v1080
    %1084 = vrot.lane.b32.xlu0 %v1082, 32
    %v1085 = vpop.permute.xlu0 %1084
    %1087 = vst.msk [vmem:[#allocation2 + $0x8] sm:$0x30] %vm647, %v1085
    %v1088 = vrot.slane %v1082, 4
    %1089 = vrot.lane.b32.xlu0 %v1088, 32
    %v1090 = vpop.permute.xlu0 %1089
    %v1091 = vsel %vm319, %v1090, 0
    %1093 = vmatprep.subr.mxu0 0.0
    %1094 = vmatpush1.msra.mxu0 %v221
    %1095 = vmatprep.subr.mxu0 0.0
    %1096 = vmatpush1.msra.mxu0 %v222
    %1097 = vmatprep.subr.mxu0 0.0
    %1098 = vmatpush1.msra.mxu0 %v223
    %1099 = vmatprep.subr.mxu0 0.0
    %1100 = vmatpush1.msra.mxu0 %v224
    %1101 = vmatprep.subr.mxu0 0.0
    %1102 = vmatpush1.msra.mxu0 0.0
    %1103 = vmatprep.subr.mxu0 0.0
    %1104 = vmatpush1.msra.mxu0 0.0
    %1105 = vmatprep.subr.mxu0 0.0
    %1106 = vmatpush1.msra.mxu0 0.0
    %1107 = vmatprep.subr.mxu0 0.0
    %1108 = vmatpush1.msra.mxu0 0.0
    %1109 = vmatprep.subr.mxu0 0.0
    %1110 = vmatpush1.msra.mxu0 0.0
    %1111 = vmatprep.subr.mxu0 0.0
    %1112 = vmatpush1.msra.mxu0 0.0
    %1113 = vmatprep.subr.mxu0 0.0
    %1114 = vmatpush1.msra.mxu0 0.0
    %1115 = vmatprep.subr.mxu0 0.0
    %1116 = vmatpush1.msra.mxu0 0.0
    %1117 = vmatprep.subr.mxu0 0.0
    %1118 = vmatpush1.msra.mxu0 0.0
    %1119 = vmatprep.subr.mxu0 0.0
    %1120 = vmatpush1.msra.mxu0 0.0
    %1121 = vmatprep.subr.mxu0 0.0
    %1122 = vmatpush1.msra.mxu0 0.0
    %1123 = vmatprep.subr.mxu0 0.0
    %1124 = vmatpush1.msra.mxu0 0.0
    %1125 = vmatprep.subr.mxu0 0.0
    %1126 = vmatpush1.msra.mxu0 0.0
    %1127 = vmatprep.subr.mxu0 0.0
    %1128 = vmatpush1.msra.mxu0 0.0
    %1129 = vmatprep.subr.mxu0 0.0
    %1130 = vmatpush1.msra.mxu0 0.0
    %1131 = vmatprep.subr.mxu0 0.0
    %1132 = vmatpush1.msra.mxu0 0.0
    %1133 = vmatprep.subr.mxu0 0.0
    %1134 = vmatpush1.msra.mxu0 0.0
    %1135 = vmatprep.subr.mxu0 0.0
    %1136 = vmatpush1.msra.mxu0 0.0
    %1137 = vmatprep.subr.mxu0 0.0
    %1138 = vmatpush1.msra.mxu0 0.0
    %1139 = vmatprep.subr.mxu0 0.0
    %1140 = vmatpush1.msra.mxu0 0.0
    %1141 = vmatprep.subr.mxu0 0.0
    %1142 = vmatpush1.msra.mxu0 0.0
    %1143 = vmatprep.subr.mxu0 0.0
    %1144 = vmatpush1.msra.mxu0 0.0
    %1145 = vmatprep.subr.mxu0 0.0
    %1146 = vmatpush1.msra.mxu0 0.0
    %1147 = vmatprep.subr.mxu0 0.0
    %1148 = vmatpush1.msra.mxu0 0.0
    %1149 = vmatprep.subr.mxu0 0.0
    %1150 = vmatpush1.msra.mxu0 0.0
    %1151 = vmatprep.subr.mxu0 0.0
    %1152 = vmatpush1.msra.mxu0 0.0
    %1153 = vmatprep.subr.mxu0 0.0
    %1154 = vmatpush1.msra.mxu0 0.0
    %1155 = vmatprep.subr.mxu0 0.0
    %1156 = vmatpush1.msra.mxu0 0.0
    %1157 = vmatprep.mubr.f32.mxu0 0.0
    %1158 = vmatmul.mubr.f32.gmra.mrb[0].mxu0 %v1091
    %v1159 = vpop.f32.mrb[0].mxu0
    %v1160 = vadd.f32 0.0, %v1159
    %v1161 = vpop.f32.mrb[0].mxu0
    %1162 = vdwg.mxu0
    %v1164 = vrot.slane %v1160, 2
    %v1166 = vadd.f32 %v314, %v1164
    %v1167 = vxor.u32 %v1166, 2147483648
    %v1168 = vmul.f32 %v1167, 1.442695
    %v1169 = vpow.pop %v1168
    %v1170 = vadd.f32 %v1169, 1.0
    %v1171 = vrcp.pop %v1170
    %v1172 = vmul.f32 1.0, %v1171
    %v1173 = vtanh.pop %v1166
    %v1175 = vrot.slane %v1076, 6
    %v1177 = vmul.f32 %v1172, %v1175
    %1179 = vrot.lane.b32.xlu0 %v1173, 64
    %v1180 = vpop.permute.xlu0 %1179
    %v1182 = vmul.f32 %v1172, %v1180
    %1184 = vrot.lane.b32.xlu0 %v1182, 32
    %v1185 = vpop.permute.xlu0 %1184
    %v1187 = vadd.f32 %v1177, %v1185
    %v1188 = vtanh.pop %v1187
    %1190 = vrot.lane.b32.xlu0 %v1188, 64
    %v1191 = vpop.permute.xlu0 %1190
    %v1193 = vmul.f32 %v1172, %v1191
    %1195 = vrot.lane.b32.xlu0 %v1193, 32
    %v1196 = vpop.permute.xlu0 %1195
    %1198 = vst.msk [vmem:[#allocation2 + $0x8] sm:$0xc0] %vm759, %v1196
    %v1199 = vld [vmem:[#allocation2] sm:$0xff]
    %v1200 = vld [vmem:[#allocation2 + $0x8] sm:$0xff]
    %v1201 = vld [vmem:[#allocation9] sm:$0xff]
    %v1202 = vld [vmem:[#allocation9 + $0x8] sm:$0xff]
    %v1203 = vld [vmem:[#allocation9 + $0x10] sm:$0xff]
    %v1204 = vld [vmem:[#allocation9 + $0x18] sm:$0xff]
    %v1205 = vld [vmem:[#allocation11] sm:$0xff]
    %v1206 = vld [vmem:[#allocation11 + $0x8] sm:$0xff]
    %v1207 = vld [vmem:[#allocation11 + $0x10] sm:$0xff]
    %v1208 = vld [vmem:[#allocation11 + $0x18] sm:$0xff]
    %v1209 = vld [vmem:[#allocation12] sm:$0x1]
    %v1211 = vlaneseq
    %v1212 = vshrl.u32 %v1211, 7
    %v1213 = vsub.s32 0, %v1212
    %v1214 = vrot.slane %v1209, %v1213
    %v1217 = vsel %vm319, %v1199, 0
    %v1220 = vsel %vm319, %v1200, 0
    %1222 = vmatprep.subr.mxu0 0.0
    %1223 = vmatpush1.msra.mxu0 %v1201
    %1224 = vmatprep.subr.mxu0 0.0
    %1225 = vmatpush1.msra.mxu0 %v1202
    %1226 = vmatprep.subr.mxu0 0.0
    %1227 = vmatpush1.msra.mxu0 %v1203
    %1228 = vmatprep.subr.mxu0 0.0
    %1229 = vmatpush1.msra.mxu0 %v1204
    %1230 = vmatprep.subr.mxu0 0.0
    %1231 = vmatpush1.msra.mxu0 0.0
    %1232 = vmatprep.subr.mxu0 0.0
    %1233 = vmatpush1.msra.mxu0 0.0
    %1234 = vmatprep.subr.mxu0 0.0
    %1235 = vmatpush1.msra.mxu0 0.0
    %1236 = vmatprep.subr.mxu0 0.0
    %1237 = vmatpush1.msra.mxu0 0.0
    %1238 = vmatprep.subr.mxu0 0.0
    %1239 = vmatpush1.msra.mxu0 0.0
    %1240 = vmatprep.subr.mxu0 0.0
    %1241 = vmatpush1.msra.mxu0 0.0
    %1242 = vmatprep.subr.mxu0 0.0
    %1243 = vmatpush1.msra.mxu0 0.0
    %1244 = vmatprep.subr.mxu0 0.0
    %1245 = vmatpush1.msra.mxu0 0.0
    %1246 = vmatprep.subr.mxu0 0.0
    %1247 = vmatpush1.msra.mxu0 0.0
    %1248 = vmatprep.subr.mxu0 0.0
    %1249 = vmatpush1.msra.mxu0 0.0
    %1250 = vmatprep.subr.mxu0 0.0
    %1251 = vmatpush1.msra.mxu0 0.0
    %1252 = vmatprep.subr.mxu0 0.0
    %1253 = vmatpush1.msra.mxu0 0.0
    %1254 = vmatprep.subr.mxu0 0.0
    %1255 = vmatpush1.msra.mxu0 0.0
    %1256 = vmatprep.subr.mxu0 0.0
    %1257 = vmatpush1.msra.mxu0 0.0
    %1258 = vmatprep.subr.mxu0 0.0
    %1259 = vmatpush1.msra.mxu0 0.0
    %1260 = vmatprep.subr.mxu0 0.0
    %1261 = vmatpush1.msra.mxu0 0.0
    %1262 = vmatprep.subr.mxu0 0.0
    %1263 = vmatpush1.msra.mxu0 0.0
    %1264 = vmatprep.subr.mxu0 0.0
    %1265 = vmatpush1.msra.mxu0 0.0
    %1266 = vmatprep.subr.mxu0 0.0
    %1267 = vmatpush1.msra.mxu0 0.0
    %1268 = vmatprep.subr.mxu0 0.0
    %1269 = vmatpush1.msra.mxu0 0.0
    %1270 = vmatprep.subr.mxu0 0.0
    %1271 = vmatpush1.msra.mxu0 0.0
    %1272 = vmatprep.subr.mxu0 0.0
    %1273 = vmatpush1.msra.mxu0 0.0
    %1274 = vmatprep.subr.mxu0 0.0
    %1275 = vmatpush1.msra.mxu0 0.0
    %1276 = vmatprep.subr.mxu0 0.0
    %1277 = vmatpush1.msra.mxu0 0.0
    %1278 = vmatprep.subr.mxu0 0.0
    %1279 = vmatpush1.msra.mxu0 0.0
    %1280 = vmatprep.subr.mxu0 0.0
    %1281 = vmatpush1.msra.mxu0 0.0
    %1282 = vmatprep.subr.mxu0 0.0
    %1283 = vmatpush1.msra.mxu0 0.0
    %1284 = vmatprep.subr.mxu0 0.0
    %1285 = vmatpush1.msra.mxu0 0.0
    %1286 = vmatprep.mubr.f32.mxu0 0.0
    %1287 = vmatmul.mubr.f32.gmra.mrb[0].mxu0 %v1217
    %v1288 = vpop.f32.mrb[0].mxu0
    %v1289 = vadd.f32 %v1214, %v1288
    %v1290 = vpop.f32.mrb[0].mxu0
    %1291 = vmatprep.mubr.f32.mxu0 0.0
    %1292 = vmatmul.mubr.f32.gmra.mrb[0].mxu0 %v1220
    %v1293 = vpop.f32.mrb[0].mxu0
    %v1294 = vadd.f32 %v1214, %v1293
    %v1295 = vpop.f32.mrb[0].mxu0
    %1296 = vdwg.mxu0
    %s1297 = scalar_lea.vmem [#allocation3], 2
    %v1298 = vld [vmem:[%s1297] sm:$0x3]
    %s1299 = scalar_lea.vmem [#allocation6], 2
    %v1300 = vld [vmem:[%s1299] sm:$0x3]
    %v1302 = vsel %vm319, %v1298, 0
    %1304 = vmatprep.subr.mxu0 0.0
    %1305 = vmatpush1.msra.mxu0 %v1205
    %1306 = vmatprep.subr.mxu0 0.0
    %1307 = vmatpush1.msra.mxu0 %v1206
    %1308 = vmatprep.subr.mxu0 0.0
    %1309 = vmatpush1.msra.mxu0 %v1207
    %1310 = vmatprep.subr.mxu0 0.0
    %1311 = vmatpush1.msra.mxu0 %v1208
    %1312 = vmatprep.subr.mxu0 0.0
    %1313 = vmatpush1.msra.mxu0 0.0
    %1314 = vmatprep.subr.mxu0 0.0
    %1315 = vmatpush1.msra.mxu0 0.0
    %1316 = vmatprep.subr.mxu0 0.0
    %1317 = vmatpush1.msra.mxu0 0.0
    %1318 = vmatprep.subr.mxu0 0.0
    %1319 = vmatpush1.msra.mxu0 0.0
    %1320 = vmatprep.subr.mxu0 0.0
    %1321 = vmatpush1.msra.mxu0 0.0
    %1322 = vmatprep.subr.mxu0 0.0
    %1323 = vmatpush1.msra.mxu0 0.0
    %1324 = vmatprep.subr.mxu0 0.0
    %1325 = vmatpush1.msra.mxu0 0.0
    %1326 = vmatprep.subr.mxu0 0.0
    %1327 = vmatpush1.msra.mxu0 0.0
    %1328 = vmatprep.subr.mxu0 0.0
    %1329 = vmatpush1.msra.mxu0 0.0
    %1330 = vmatprep.subr.mxu0 0.0
    %1331 = vmatpush1.msra.mxu0 0.0
    %1332 = vmatprep.subr.mxu0 0.0
    %1333 = vmatpush1.msra.mxu0 0.0
    %1334 = vmatprep.subr.mxu0 0.0
    %1335 = vmatpush1.msra.mxu0 0.0
    %1336 = vmatprep.subr.mxu0 0.0
    %1337 = vmatpush1.msra.mxu0 0.0
    %1338 = vmatprep.subr.mxu0 0.0
    %1339 = vmatpush1.msra.mxu0 0.0
    %1340 = vmatprep.subr.mxu0 0.0
    %1341 = vmatpush1.msra.mxu0 0.0
    %1342 = vmatprep.subr.mxu0 0.0
    %1343 = vmatpush1.msra.mxu0 0.0
    %1344 = vmatprep.subr.mxu0 0.0
    %1345 = vmatpush1.msra.mxu0 0.0
    %1346 = vmatprep.subr.mxu0 0.0
    %1347 = vmatpush1.msra.mxu0 0.0
    %1348 = vmatprep.subr.mxu0 0.0
    %1349 = vmatpush1.msra.mxu0 0.0
    %1350 = vmatprep.subr.mxu0 0.0
    %1351 = vmatpush1.msra.mxu0 0.0
    %1352 = vmatprep.subr.mxu0 0.0
    %1353 = vmatpush1.msra.mxu0 0.0
    %1354 = vmatprep.subr.mxu0 0.0
    %1355 = vmatpush1.msra.mxu0 0.0
    %1356 = vmatprep.subr.mxu0 0.0
    %1357 = vmatpush1.msra.mxu0 0.0
    %1358 = vmatprep.subr.mxu0 0.0
    %1359 = vmatpush1.msra.mxu0 0.0
    %1360 = vmatprep.subr.mxu0 0.0
    %1361 = vmatpush1.msra.mxu0 0.0
    %1362 = vmatprep.subr.mxu0 0.0
    %1363 = vmatpush1.msra.mxu0 0.0
    %1364 = vmatprep.subr.mxu0 0.0
    %1365 = vmatpush1.msra.mxu0 0.0
    %1366 = vmatprep.subr.mxu0 0.0
    %1367 = vmatpush1.msra.mxu0 0.0
    %1368 = vmatprep.mubr.f32.mxu0 0.0
    %1369 = vmatmul.mubr.f32.gmra.mrb[0].mxu0 %v1302
    %v1370 = vpop.f32.mrb[0].mxu0
    %v1371 = vadd.f32 0.0, %v1370
    %v1372 = vpop.f32.mrb[0].mxu0
    %1373 = vdwg.mxu0
    %v1374 = vadd.f32 %v1289, %v1371
    %v1375 = vxor.u32 %v1374, 2147483648
    %v1376 = vmul.f32 %v1375, 1.442695
    %v1377 = vpow.pop %v1376
    %v1378 = vadd.f32 %v1377, 1.0
    %v1379 = vrcp.pop %v1378
    %v1380 = vmul.f32 1.0, %v1379
    %v1381 = vtanh.pop %v1374
    %1383 = vrot.lane.b32.xlu0 %v1300, 32
    %v1384 = vpop.permute.xlu0 %1383
    %v1386 = vmul.f32 %v1380, %v1384
    %1388 = vrot.lane.b32.xlu0 %v1381, 64
    %v1389 = vpop.permute.xlu0 %1388
    %v1391 = vmul.f32 %v1380, %v1389
    %1393 = vrot.lane.b32.xlu0 %v1391, 32
    %v1394 = vpop.permute.xlu0 %1393
    %v1396 = vadd.f32 %v1386, %v1394
    %v1397 = vtanh.pop %v1396
    %1399 = vrot.lane.b32.xlu0 %v1397, 64
    %v1400 = vpop.permute.xlu0 %1399
    %v1402 = vmul.f32 %v1380, %v1400
    %1404 = vrot.lane.b32.xlu0 %v1402, 32
    %v1405 = vpop.permute.xlu0 %1404
    %v1406 = vsel %vm319, %v1405, 0
    %1408 = vmatprep.subr.mxu0 0.0
    %1409 = vmatpush1.msra.mxu0 %v1205
    %1410 = vmatprep.subr.mxu0 0.0
    %1411 = vmatpush1.msra.mxu0 %v1206
    %1412 = vmatprep.subr.mxu0 0.0
    %1413 = vmatpush1.msra.mxu0 %v1207
    %1414 = vmatprep.subr.mxu0 0.0
    %1415 = vmatpush1.msra.mxu0 %v1208
    %1416 = vmatprep.subr.mxu0 0.0
    %1417 = vmatpush1.msra.mxu0 0.0
    %1418 = vmatprep.subr.mxu0 0.0
    %1419 = vmatpush1.msra.mxu0 0.0
    %1420 = vmatprep.subr.mxu0 0.0
    %1421 = vmatpush1.msra.mxu0 0.0
    %1422 = vmatprep.subr.mxu0 0.0
    %1423 = vmatpush1.msra.mxu0 0.0
    %1424 = vmatprep.subr.mxu0 0.0
    %1425 = vmatpush1.msra.mxu0 0.0
    %1426 = vmatprep.subr.mxu0 0.0
    %1427 = vmatpush1.msra.mxu0 0.0
    %1428 = vmatprep.subr.mxu0 0.0
    %1429 = vmatpush1.msra.mxu0 0.0
    %1430 = vmatprep.subr.mxu0 0.0
    %1431 = vmatpush1.msra.mxu0 0.0
    %1432 = vmatprep.subr.mxu0 0.0
    %1433 = vmatpush1.msra.mxu0 0.0
    %1434 = vmatprep.subr.mxu0 0.0
    %1435 = vmatpush1.msra.mxu0 0.0
    %1436 = vmatprep.subr.mxu0 0.0
    %1437 = vmatpush1.msra.mxu0 0.0
    %1438 = vmatprep.subr.mxu0 0.0
    %1439 = vmatpush1.msra.mxu0 0.0
    %1440 = vmatprep.subr.mxu0 0.0
    %1441 = vmatpush1.msra.mxu0 0.0
    %1442 = vmatprep.subr.mxu0 0.0
    %1443 = vmatpush1.msra.mxu0 0.0
    %1444 = vmatprep.subr.mxu0 0.0
    %1445 = vmatpush1.msra.mxu0 0.0
    %1446 = vmatprep.subr.mxu0 0.0
    %1447 = vmatpush1.msra.mxu0 0.0
    %1448 = vmatprep.subr.mxu0 0.0
    %1449 = vmatpush1.msra.mxu0 0.0
    %1450 = vmatprep.subr.mxu0 0.0
    %1451 = vmatpush1.msra.mxu0 0.0
    %1452 = vmatprep.subr.mxu0 0.0
    %1453 = vmatpush1.msra.mxu0 0.0
    %1454 = vmatprep.subr.mxu0 0.0
    %1455 = vmatpush1.msra.mxu0 0.0
    %1456 = vmatprep.subr.mxu0 0.0
    %1457 = vmatpush1.msra.mxu0 0.0
    %1458 = vmatprep.subr.mxu0 0.0
    %1459 = vmatpush1.msra.mxu0 0.0
    %1460 = vmatprep.subr.mxu0 0.0
    %1461 = vmatpush1.msra.mxu0 0.0
    %1462 = vmatprep.subr.mxu0 0.0
    %1463 = vmatpush1.msra.mxu0 0.0
    %1464 = vmatprep.subr.mxu0 0.0
    %1465 = vmatpush1.msra.mxu0 0.0
    %1466 = vmatprep.subr.mxu0 0.0
    %1467 = vmatpush1.msra.mxu0 0.0
    %1468 = vmatprep.subr.mxu0 0.0
    %1469 = vmatpush1.msra.mxu0 0.0
    %1470 = vmatprep.subr.mxu0 0.0
    %1471 = vmatpush1.msra.mxu0 0.0
    %1472 = vmatprep.mubr.f32.mxu0 0.0
    %1473 = vmatmul.mubr.f32.gmra.mrb[0].mxu0 %v1406
    %v1474 = vpop.f32.mrb[0].mxu0
    %v1475 = vadd.f32 0.0, %v1474
    %v1476 = vpop.f32.mrb[0].mxu0
    %1477 = vdwg.mxu0
    %v1479 = vrot.slane %v1475, 6
    %v1481 = vadd.f32 %v1289, %v1479
    %v1482 = vxor.u32 %v1481, 2147483648
    %v1483 = vmul.f32 %v1482, 1.442695
    %v1484 = vpow.pop %v1483
    %v1485 = vadd.f32 %v1484, 1.0
    %v1486 = vrcp.pop %v1485
    %v1487 = vmul.f32 1.0, %v1486
    %v1488 = vtanh.pop %v1481
    %v1490 = vrot.slane %v1396, 6
    %v1492 = vmul.f32 %v1487, %v1490
    %1494 = vrot.lane.b32.xlu0 %v1488, 64
    %v1495 = vpop.permute.xlu0 %1494
    %v1497 = vmul.f32 %v1487, %v1495
    %1499 = vrot.lane.b32.xlu0 %v1497, 32
    %v1500 = vpop.permute.xlu0 %1499
    %v1502 = vadd.f32 %v1492, %v1500
    %v1503 = vtanh.pop %v1502
    %1505 = vrot.lane.b32.xlu0 %v1503, 64
    %v1506 = vpop.permute.xlu0 %1505
    %v1508 = vmul.f32 %v1487, %v1506
    %v1510 = vrot.slane %v1508, 2
    %1511 = vrot.lane.b32.xlu0 %v1510, 32
    %v1512 = vpop.permute.xlu0 %1511
    %v1513 = vsel %vm319, %v1512, 0
    %1515 = vmatprep.subr.mxu0 0.0
    %1516 = vmatpush1.msra.mxu0 %v1205
    %1517 = vmatprep.subr.mxu0 0.0
    %1518 = vmatpush1.msra.mxu0 %v1206
    %1519 = vmatprep.subr.mxu0 0.0
    %1520 = vmatpush1.msra.mxu0 %v1207
    %1521 = vmatprep.subr.mxu0 0.0
    %1522 = vmatpush1.msra.mxu0 %v1208
    %1523 = vmatprep.subr.mxu0 0.0
    %1524 = vmatpush1.msra.mxu0 0.0
    %1525 = vmatprep.subr.mxu0 0.0
    %1526 = vmatpush1.msra.mxu0 0.0
    %1527 = vmatprep.subr.mxu0 0.0
    %1528 = vmatpush1.msra.mxu0 0.0
    %1529 = vmatprep.subr.mxu0 0.0
    %1530 = vmatpush1.msra.mxu0 0.0
    %1531 = vmatprep.subr.mxu0 0.0
    %1532 = vmatpush1.msra.mxu0 0.0
    %1533 = vmatprep.subr.mxu0 0.0
    %1534 = vmatpush1.msra.mxu0 0.0
    %1535 = vmatprep.subr.mxu0 0.0
    %1536 = vmatpush1.msra.mxu0 0.0
    %1537 = vmatprep.subr.mxu0 0.0
    %1538 = vmatpush1.msra.mxu0 0.0
    %1539 = vmatprep.subr.mxu0 0.0
    %1540 = vmatpush1.msra.mxu0 0.0
    %1541 = vmatprep.subr.mxu0 0.0
    %1542 = vmatpush1.msra.mxu0 0.0
    %1543 = vmatprep.subr.mxu0 0.0
    %1544 = vmatpush1.msra.mxu0 0.0
    %1545 = vmatprep.subr.mxu0 0.0
    %1546 = vmatpush1.msra.mxu0 0.0
    %1547 = vmatprep.subr.mxu0 0.0
    %1548 = vmatpush1.msra.mxu0 0.0
    %1549 = vmatprep.subr.mxu0 0.0
    %1550 = vmatpush1.msra.mxu0 0.0
    %1551 = vmatprep.subr.mxu0 0.0
    %1552 = vmatpush1.msra.mxu0 0.0
    %1553 = vmatprep.subr.mxu0 0.0
    %1554 = vmatpush1.msra.mxu0 0.0
    %1555 = vmatprep.subr.mxu0 0.0
    %1556 = vmatpush1.msra.mxu0 0.0
    %1557 = vmatprep.subr.mxu0 0.0
    %1558 = vmatpush1.msra.mxu0 0.0
    %1559 = vmatprep.subr.mxu0 0.0
    %1560 = vmatpush1.msra.mxu0 0.0
    %1561 = vmatprep.subr.mxu0 0.0
    %1562 = vmatpush1.msra.mxu0 0.0
    %1563 = vmatprep.subr.mxu0 0.0
    %1564 = vmatpush1.msra.mxu0 0.0
    %1565 = vmatprep.subr.mxu0 0.0
    %1566 = vmatpush1.msra.mxu0 0.0
    %1567 = vmatprep.subr.mxu0 0.0
    %1568 = vmatpush1.msra.mxu0 0.0
    %1569 = vmatprep.subr.mxu0 0.0
    %1570 = vmatpush1.msra.mxu0 0.0
    %1571 = vmatprep.subr.mxu0 0.0
    %1572 = vmatpush1.msra.mxu0 0.0
    %1573 = vmatprep.subr.mxu0 0.0
    %1574 = vmatpush1.msra.mxu0 0.0
    %1575 = vmatprep.subr.mxu0 0.0
    %1576 = vmatpush1.msra.mxu0 0.0
    %1577 = vmatprep.subr.mxu0 0.0
    %1578 = vmatpush1.msra.mxu0 0.0
    %1579 = vmatprep.mubr.f32.mxu0 0.0
    %1580 = vmatmul.mubr.f32.gmra.mrb[0].mxu0 %v1513
    %v1581 = vpop.f32.mrb[0].mxu0
    %v1582 = vadd.f32 0.0, %v1581
    %v1583 = vpop.f32.mrb[0].mxu0
    %1584 = vdwg.mxu0
    %v1586 = vrot.slane %v1582, 4
    %v1588 = vadd.f32 %v1289, %v1586
    %v1589 = vxor.u32 %v1588, 2147483648
    %v1590 = vmul.f32 %v1589, 1.442695
    %v1591 = vpow.pop %v1590
    %v1592 = vadd.f32 %v1591, 1.0
    %v1593 = vrcp.pop %v1592
    %v1594 = vmul.f32 1.0, %v1593
    %v1595 = vtanh.pop %v1588
    %v1597 = vrot.slane %v1502, 6
    %v1599 = vmul.f32 %v1594, %v1597
    %1601 = vrot.lane.b32.xlu0 %v1595, 64
    %v1602 = vpop.permute.xlu0 %1601
    %v1604 = vmul.f32 %v1594, %v1602
    %1606 = vrot.lane.b32.xlu0 %v1604, 32
    %v1607 = vpop.permute.xlu0 %1606
    %v1609 = vadd.f32 %v1599, %v1607
    %v1610 = vtanh.pop %v1609
    %1612 = vrot.lane.b32.xlu0 %v1610, 64
    %v1613 = vpop.permute.xlu0 %1612
    %v1615 = vmul.f32 %v1594, %v1613
    %v1617 = vrot.slane %v1615, 4
    %1618 = vrot.lane.b32.xlu0 %v1617, 32
    %v1619 = vpop.permute.xlu0 %1618
    %v1620 = vsel %vm319, %v1619, 0
    %1622 = vmatprep.subr.mxu0 0.0
    %1623 = vmatpush1.msra.mxu0 %v1205
    %1624 = vmatprep.subr.mxu0 0.0
    %1625 = vmatpush1.msra.mxu0 %v1206
    %1626 = vmatprep.subr.mxu0 0.0
    %1627 = vmatpush1.msra.mxu0 %v1207
    %1628 = vmatprep.subr.mxu0 0.0
    %1629 = vmatpush1.msra.mxu0 %v1208
    %1630 = vmatprep.subr.mxu0 0.0
    %1631 = vmatpush1.msra.mxu0 0.0
    %1632 = vmatprep.subr.mxu0 0.0
    %1633 = vmatpush1.msra.mxu0 0.0
    %1634 = vmatprep.subr.mxu0 0.0
    %1635 = vmatpush1.msra.mxu0 0.0
    %1636 = vmatprep.subr.mxu0 0.0
    %1637 = vmatpush1.msra.mxu0 0.0
    %1638 = vmatprep.subr.mxu0 0.0
    %1639 = vmatpush1.msra.mxu0 0.0
    %1640 = vmatprep.subr.mxu0 0.0
    %1641 = vmatpush1.msra.mxu0 0.0
    %1642 = vmatprep.subr.mxu0 0.0
    %1643 = vmatpush1.msra.mxu0 0.0
    %1644 = vmatprep.subr.mxu0 0.0
    %1645 = vmatpush1.msra.mxu0 0.0
    %1646 = vmatprep.subr.mxu0 0.0
    %1647 = vmatpush1.msra.mxu0 0.0
    %1648 = vmatprep.subr.mxu0 0.0
    %1649 = vmatpush1.msra.mxu0 0.0
    %1650 = vmatprep.subr.mxu0 0.0
    %1651 = vmatpush1.msra.mxu0 0.0
    %1652 = vmatprep.subr.mxu0 0.0
    %1653 = vmatpush1.msra.mxu0 0.0
    %1654 = vmatprep.subr.mxu0 0.0
    %1655 = vmatpush1.msra.mxu0 0.0
    %1656 = vmatprep.subr.mxu0 0.0
    %1657 = vmatpush1.msra.mxu0 0.0
    %1658 = vmatprep.subr.mxu0 0.0
    %1659 = vmatpush1.msra.mxu0 0.0
    %1660 = vmatprep.subr.mxu0 0.0
    %1661 = vmatpush1.msra.mxu0 0.0
    %1662 = vmatprep.subr.mxu0 0.0
    %1663 = vmatpush1.msra.mxu0 0.0
    %1664 = vmatprep.subr.mxu0 0.0
    %1665 = vmatpush1.msra.mxu0 0.0
    %1666 = vmatprep.subr.mxu0 0.0
    %1667 = vmatpush1.msra.mxu0 0.0
    %1668 = vmatprep.subr.mxu0 0.0
    %1669 = vmatpush1.msra.mxu0 0.0
    %1670 = vmatprep.subr.mxu0 0.0
    %1671 = vmatpush1.msra.mxu0 0.0
    %1672 = vmatprep.subr.mxu0 0.0
    %1673 = vmatpush1.msra.mxu0 0.0
    %1674 = vmatprep.subr.mxu0 0.0
    %1675 = vmatpush1.msra.mxu0 0.0
    %1676 = vmatprep.subr.mxu0 0.0
    %1677 = vmatpush1.msra.mxu0 0.0
    %1678 = vmatprep.subr.mxu0 0.0
    %1679 = vmatpush1.msra.mxu0 0.0
    %1680 = vmatprep.subr.mxu0 0.0
    %1681 = vmatpush1.msra.mxu0 0.0
    %1682 = vmatprep.subr.mxu0 0.0
    %1683 = vmatpush1.msra.mxu0 0.0
    %1684 = vmatprep.subr.mxu0 0.0
    %1685 = vmatpush1.msra.mxu0 0.0
    %1686 = vmatprep.mubr.f32.mxu0 0.0
    %1687 = vmatmul.mubr.f32.gmra.mrb[0].mxu0 %v1620
    %v1688 = vpop.f32.mrb[0].mxu0
    %v1689 = vadd.f32 0.0, %v1688
    %v1690 = vpop.f32.mrb[0].mxu0
    %1691 = vdwg.mxu0
    %v1693 = vrot.slane %v1689, 2
    %v1695 = vadd.f32 %v1289, %v1693
    %v1696 = vxor.u32 %v1695, 2147483648
    %v1697 = vmul.f32 %v1696, 1.442695
    %v1698 = vpow.pop %v1697
    %v1699 = vadd.f32 %v1698, 1.0
    %v1700 = vrcp.pop %v1699
    %v1701 = vmul.f32 1.0, %v1700
    %v1702 = vtanh.pop %v1695
    %v1704 = vrot.slane %v1609, 6
    %v1706 = vmul.f32 %v1701, %v1704
    %1708 = vrot.lane.b32.xlu0 %v1702, 64
    %v1709 = vpop.permute.xlu0 %1708
    %v1711 = vmul.f32 %v1701, %v1709
    %1713 = vrot.lane.b32.xlu0 %v1711, 32
    %v1714 = vpop.permute.xlu0 %1713
    %v1716 = vadd.f32 %v1706, %v1714
    %v1717 = vtanh.pop %v1716
    %1719 = vrot.lane.b32.xlu0 %v1717, 64
    %v1720 = vpop.permute.xlu0 %1719
    %v1722 = vmul.f32 %v1701, %v1720
    %v1724 = vrot.slane %v1722, 6
    %1725 = vrot.lane.b32.xlu0 %v1724, 32
    %v1726 = vpop.permute.xlu0 %1725
    %v1727 = vsel %vm319, %v1726, 0
    %1729 = vmatprep.subr.mxu0 0.0
    %1730 = vmatpush1.msra.mxu0 %v1205
    %1731 = vmatprep.subr.mxu0 0.0
    %1732 = vmatpush1.msra.mxu0 %v1206
    %1733 = vmatprep.subr.mxu0 0.0
    %1734 = vmatpush1.msra.mxu0 %v1207
    %1735 = vmatprep.subr.mxu0 0.0
    %1736 = vmatpush1.msra.mxu0 %v1208
    %1737 = vmatprep.subr.mxu0 0.0
    %1738 = vmatpush1.msra.mxu0 0.0
    %1739 = vmatprep.subr.mxu0 0.0
    %1740 = vmatpush1.msra.mxu0 0.0
    %1741 = vmatprep.subr.mxu0 0.0
    %1742 = vmatpush1.msra.mxu0 0.0
    %1743 = vmatprep.subr.mxu0 0.0
    %1744 = vmatpush1.msra.mxu0 0.0
    %1745 = vmatprep.subr.mxu0 0.0
    %1746 = vmatpush1.msra.mxu0 0.0
    %1747 = vmatprep.subr.mxu0 0.0
    %1748 = vmatpush1.msra.mxu0 0.0
    %1749 = vmatprep.subr.mxu0 0.0
    %1750 = vmatpush1.msra.mxu0 0.0
    %1751 = vmatprep.subr.mxu0 0.0
    %1752 = vmatpush1.msra.mxu0 0.0
    %1753 = vmatprep.subr.mxu0 0.0
    %1754 = vmatpush1.msra.mxu0 0.0
    %1755 = vmatprep.subr.mxu0 0.0
    %1756 = vmatpush1.msra.mxu0 0.0
    %1757 = vmatprep.subr.mxu0 0.0
    %1758 = vmatpush1.msra.mxu0 0.0
    %1759 = vmatprep.subr.mxu0 0.0
    %1760 = vmatpush1.msra.mxu0 0.0
    %1761 = vmatprep.subr.mxu0 0.0
    %1762 = vmatpush1.msra.mxu0 0.0
    %1763 = vmatprep.subr.mxu0 0.0
    %1764 = vmatpush1.msra.mxu0 0.0
    %1765 = vmatprep.subr.mxu0 0.0
    %1766 = vmatpush1.msra.mxu0 0.0
    %1767 = vmatprep.subr.mxu0 0.0
    %1768 = vmatpush1.msra.mxu0 0.0
    %1769 = vmatprep.subr.mxu0 0.0
    %1770 = vmatpush1.msra.mxu0 0.0
    %1771 = vmatprep.subr.mxu0 0.0
    %1772 = vmatpush1.msra.mxu0 0.0
    %1773 = vmatprep.subr.mxu0 0.0
    %1774 = vmatpush1.msra.mxu0 0.0
    %1775 = vmatprep.subr.mxu0 0.0
    %1776 = vmatpush1.msra.mxu0 0.0
    %1777 = vmatprep.subr.mxu0 0.0
    %1778 = vmatpush1.msra.mxu0 0.0
    %1779 = vmatprep.subr.mxu0 0.0
    %1780 = vmatpush1.msra.mxu0 0.0
    %1781 = vmatprep.subr.mxu0 0.0
    %1782 = vmatpush1.msra.mxu0 0.0
    %1783 = vmatprep.subr.mxu0 0.0
    %1784 = vmatpush1.msra.mxu0 0.0
    %1785 = vmatprep.subr.mxu0 0.0
    %1786 = vmatpush1.msra.mxu0 0.0
    %1787 = vmatprep.subr.mxu0 0.0
    %1788 = vmatpush1.msra.mxu0 0.0
    %1789 = vmatprep.subr.mxu0 0.0
    %1790 = vmatpush1.msra.mxu0 0.0
    %1791 = vmatprep.subr.mxu0 0.0
    %1792 = vmatpush1.msra.mxu0 0.0
    %1793 = vmatprep.mubr.f32.mxu0 0.0
    %1794 = vmatmul.mubr.f32.gmra.mrb[0].mxu0 %v1727
    %v1795 = vpop.f32.mrb[0].mxu0
    %v1796 = vadd.f32 0.0, %v1795
    %v1797 = vpop.f32.mrb[0].mxu0
    %1798 = vdwg.mxu0
    %v1799 = vadd.f32 %v1294, %v1796
    %v1800 = vxor.u32 %v1799, 2147483648
    %v1801 = vmul.f32 %v1800, 1.442695
    %v1802 = vpow.pop %v1801
    %v1803 = vadd.f32 %v1802, 1.0
    %v1804 = vrcp.pop %v1803
    %v1805 = vmul.f32 1.0, %v1804
    %v1806 = vtanh.pop %v1799
    %v1808 = vrot.slane %v1716, 6
    %v1810 = vmul.f32 %v1805, %v1808
    %1812 = vrot.lane.b32.xlu0 %v1806, 64
    %v1813 = vpop.permute.xlu0 %1812
    %v1815 = vmul.f32 %v1805, %v1813
    %1817 = vrot.lane.b32.xlu0 %v1815, 32
    %v1818 = vpop.permute.xlu0 %1817
    %v1820 = vadd.f32 %v1810, %v1818
    %v1821 = vtanh.pop %v1820
    %1823 = vrot.lane.b32.xlu0 %v1821, 64
    %v1824 = vpop.permute.xlu0 %1823
    %v1826 = vmul.f32 %v1805, %v1824
    %1828 = vrot.lane.b32.xlu0 %v1826, 32
    %v1829 = vpop.permute.xlu0 %1828
    %v1830 = vsel %vm319, %v1829, 0
    %1832 = vmatprep.subr.mxu0 0.0
    %1833 = vmatpush1.msra.mxu0 %v1205
    %1834 = vmatprep.subr.mxu0 0.0
    %1835 = vmatpush1.msra.mxu0 %v1206
    %1836 = vmatprep.subr.mxu0 0.0
    %1837 = vmatpush1.msra.mxu0 %v1207
    %1838 = vmatprep.subr.mxu0 0.0
    %1839 = vmatpush1.msra.mxu0 %v1208
    %1840 = vmatprep.subr.mxu0 0.0
    %1841 = vmatpush1.msra.mxu0 0.0
    %1842 = vmatprep.subr.mxu0 0.0
    %1843 = vmatpush1.msra.mxu0 0.0
    %1844 = vmatprep.subr.mxu0 0.0
    %1845 = vmatpush1.msra.mxu0 0.0
    %1846 = vmatprep.subr.mxu0 0.0
    %1847 = vmatpush1.msra.mxu0 0.0
    %1848 = vmatprep.subr.mxu0 0.0
    %1849 = vmatpush1.msra.mxu0 0.0
    %1850 = vmatprep.subr.mxu0 0.0
    %1851 = vmatpush1.msra.mxu0 0.0
    %1852 = vmatprep.subr.mxu0 0.0
    %1853 = vmatpush1.msra.mxu0 0.0
    %1854 = vmatprep.subr.mxu0 0.0
    %1855 = vmatpush1.msra.mxu0 0.0
    %1856 = vmatprep.subr.mxu0 0.0
    %1857 = vmatpush1.msra.mxu0 0.0
    %1858 = vmatprep.subr.mxu0 0.0
    %1859 = vmatpush1.msra.mxu0 0.0
    %1860 = vmatprep.subr.mxu0 0.0
    %1861 = vmatpush1.msra.mxu0 0.0
    %1862 = vmatprep.subr.mxu0 0.0
    %1863 = vmatpush1.msra.mxu0 0.0
    %1864 = vmatprep.subr.mxu0 0.0
    %1865 = vmatpush1.msra.mxu0 0.0
    %1866 = vmatprep.subr.mxu0 0.0
    %1867 = vmatpush1.msra.mxu0 0.0
    %1868 = vmatprep.subr.mxu0 0.0
    %1869 = vmatpush1.msra.mxu0 0.0
    %1870 = vmatprep.subr.mxu0 0.0
    %1871 = vmatpush1.msra.mxu0 0.0
    %1872 = vmatprep.subr.mxu0 0.0
    %1873 = vmatpush1.msra.mxu0 0.0
    %1874 = vmatprep.subr.mxu0 0.0
    %1875 = vmatpush1.msra.mxu0 0.0
    %1876 = vmatprep.subr.mxu0 0.0
    %1877 = vmatpush1.msra.mxu0 0.0
    %1878 = vmatprep.subr.mxu0 0.0
    %1879 = vmatpush1.msra.mxu0 0.0
    %1880 = vmatprep.subr.mxu0 0.0
    %1881 = vmatpush1.msra.mxu0 0.0
    %1882 = vmatprep.subr.mxu0 0.0
    %1883 = vmatpush1.msra.mxu0 0.0
    %1884 = vmatprep.subr.mxu0 0.0
    %1885 = vmatpush1.msra.mxu0 0.0
    %1886 = vmatprep.subr.mxu0 0.0
    %1887 = vmatpush1.msra.mxu0 0.0
    %1888 = vmatprep.subr.mxu0 0.0
    %1889 = vmatpush1.msra.mxu0 0.0
    %1890 = vmatprep.subr.mxu0 0.0
    %1891 = vmatpush1.msra.mxu0 0.0
    %1892 = vmatprep.subr.mxu0 0.0
    %1893 = vmatpush1.msra.mxu0 0.0
    %1894 = vmatprep.subr.mxu0 0.0
    %1895 = vmatpush1.msra.mxu0 0.0
    %1896 = vmatprep.mubr.f32.mxu0 0.0
    %1897 = vmatmul.mubr.f32.gmra.mrb[0].mxu0 %v1830
    %v1898 = vpop.f32.mrb[0].mxu0
    %v1899 = vadd.f32 0.0, %v1898
    %v1900 = vpop.f32.mrb[0].mxu0
    %1901 = vdwg.mxu0
    %v1903 = vrot.slane %v1899, 6
    %v1905 = vadd.f32 %v1294, %v1903
    %v1906 = vxor.u32 %v1905, 2147483648
    %v1907 = vmul.f32 %v1906, 1.442695
    %v1908 = vpow.pop %v1907
    %v1909 = vadd.f32 %v1908, 1.0
    %v1910 = vrcp.pop %v1909
    %v1911 = vmul.f32 1.0, %v1910
    %v1912 = vtanh.pop %v1905
    %v1914 = vrot.slane %v1820, 6
    %v1916 = vmul.f32 %v1911, %v1914
    %1918 = vrot.lane.b32.xlu0 %v1912, 64
    %v1919 = vpop.permute.xlu0 %1918
    %v1921 = vmul.f32 %v1911, %v1919
    %1923 = vrot.lane.b32.xlu0 %v1921, 32
    %v1924 = vpop.permute.xlu0 %1923
    %v1926 = vadd.f32 %v1916, %v1924
    %v1927 = vtanh.pop %v1926
    %1929 = vrot.lane.b32.xlu0 %v1927, 64
    %v1930 = vpop.permute.xlu0 %1929
    %v1932 = vmul.f32 %v1911, %v1930
    %v1934 = vrot.slane %v1932, 2
    %1935 = vrot.lane.b32.xlu0 %v1934, 32
    %v1936 = vpop.permute.xlu0 %1935
    %v1937 = vsel %vm319, %v1936, 0
    %1939 = vmatprep.subr.mxu0 0.0
    %1940 = vmatpush1.msra.mxu0 %v1205
    %1941 = vmatprep.subr.mxu0 0.0
    %1942 = vmatpush1.msra.mxu0 %v1206
    %1943 = vmatprep.subr.mxu0 0.0
    %1944 = vmatpush1.msra.mxu0 %v1207
    %1945 = vmatprep.subr.mxu0 0.0
    %1946 = vmatpush1.msra.mxu0 %v1208
    %1947 = vmatprep.subr.mxu0 0.0
    %1948 = vmatpush1.msra.mxu0 0.0
    %1949 = vmatprep.subr.mxu0 0.0
    %1950 = vmatpush1.msra.mxu0 0.0
    %1951 = vmatprep.subr.mxu0 0.0
    %1952 = vmatpush1.msra.mxu0 0.0
    %1953 = vmatprep.subr.mxu0 0.0
    %1954 = vmatpush1.msra.mxu0 0.0
    %1955 = vmatprep.subr.mxu0 0.0
    %1956 = vmatpush1.msra.mxu0 0.0
    %1957 = vmatprep.subr.mxu0 0.0
    %1958 = vmatpush1.msra.mxu0 0.0
    %1959 = vmatprep.subr.mxu0 0.0
    %1960 = vmatpush1.msra.mxu0 0.0
    %1961 = vmatprep.subr.mxu0 0.0
    %1962 = vmatpush1.msra.mxu0 0.0
    %1963 = vmatprep.subr.mxu0 0.0
    %1964 = vmatpush1.msra.mxu0 0.0
    %1965 = vmatprep.subr.mxu0 0.0
    %1966 = vmatpush1.msra.mxu0 0.0
    %1967 = vmatprep.subr.mxu0 0.0
    %1968 = vmatpush1.msra.mxu0 0.0
    %1969 = vmatprep.subr.mxu0 0.0
    %1970 = vmatpush1.msra.mxu0 0.0
    %1971 = vmatprep.subr.mxu0 0.0
    %1972 = vmatpush1.msra.mxu0 0.0
    %1973 = vmatprep.subr.mxu0 0.0
    %1974 = vmatpush1.msra.mxu0 0.0
    %1975 = vmatprep.subr.mxu0 0.0
    %1976 = vmatpush1.msra.mxu0 0.0
    %1977 = vmatprep.subr.mxu0 0.0
    %1978 = vmatpush1.msra.mxu0 0.0
    %1979 = vmatprep.subr.mxu0 0.0
    %1980 = vmatpush1.msra.mxu0 0.0
    %1981 = vmatprep.subr.mxu0 0.0
    %1982 = vmatpush1.msra.mxu0 0.0
    %1983 = vmatprep.subr.mxu0 0.0
    %1984 = vmatpush1.msra.mxu0 0.0
    %1985 = vmatprep.subr.mxu0 0.0
    %1986 = vmatpush1.msra.mxu0 0.0
    %1987 = vmatprep.subr.mxu0 0.0
    %1988 = vmatpush1.msra.mxu0 0.0
    %1989 = vmatprep.subr.mxu0 0.0
    %1990 = vmatpush1.msra.mxu0 0.0
    %1991 = vmatprep.subr.mxu0 0.0
    %1992 = vmatpush1.msra.mxu0 0.0
    %1993 = vmatprep.subr.mxu0 0.0
    %1994 = vmatpush1.msra.mxu0 0.0
    %1995 = vmatprep.subr.mxu0 0.0
    %1996 = vmatpush1.msra.mxu0 0.0
    %1997 = vmatprep.subr.mxu0 0.0
    %1998 = vmatpush1.msra.mxu0 0.0
    %1999 = vmatprep.subr.mxu0 0.0
    %2000 = vmatpush1.msra.mxu0 0.0
    %2001 = vmatprep.subr.mxu0 0.0
    %2002 = vmatpush1.msra.mxu0 0.0
    %2003 = vmatprep.mubr.f32.mxu0 0.0
    %2004 = vmatmul.mubr.f32.gmra.mrb[0].mxu0 %v1937
    %v2005 = vpop.f32.mrb[0].mxu0
    %v2006 = vadd.f32 0.0, %v2005
    %v2007 = vpop.f32.mrb[0].mxu0
    %2008 = vdwg.mxu0
    %v2010 = vrot.slane %v2006, 4
    %v2012 = vadd.f32 %v1294, %v2010
    %v2013 = vxor.u32 %v2012, 2147483648
    %v2014 = vmul.f32 %v2013, 1.442695
    %v2015 = vpow.pop %v2014
    %v2016 = vadd.f32 %v2015, 1.0
    %v2017 = vrcp.pop %v2016
    %v2018 = vmul.f32 1.0, %v2017
    %v2019 = vtanh.pop %v2012
    %v2021 = vrot.slane %v1926, 6
    %v2023 = vmul.f32 %v2018, %v2021
    %2025 = vrot.lane.b32.xlu0 %v2019, 64
    %v2026 = vpop.permute.xlu0 %2025
    %v2028 = vmul.f32 %v2018, %v2026
    %2030 = vrot.lane.b32.xlu0 %v2028, 32
    %v2031 = vpop.permute.xlu0 %2030
    %v2033 = vadd.f32 %v2023, %v2031
    %v2034 = vtanh.pop %v2033
    %2036 = vrot.lane.b32.xlu0 %v2034, 64
    %v2037 = vpop.permute.xlu0 %2036
    %v2039 = vmul.f32 %v2018, %v2037
    %v2041 = vrot.slane %v2039, 4
    %2042 = vrot.lane.b32.xlu0 %v2041, 32
    %v2043 = vpop.permute.xlu0 %2042
    %v2044 = vsel %vm319, %v2043, 0
    %2046 = vmatprep.subr.mxu0 0.0
    %2047 = vmatpush1.msra.mxu0 %v1205
    %2048 = vmatprep.subr.mxu0 0.0
    %2049 = vmatpush1.msra.mxu0 %v1206
    %2050 = vmatprep.subr.mxu0 0.0
    %2051 = vmatpush1.msra.mxu0 %v1207
    %2052 = vmatprep.subr.mxu0 0.0
    %2053 = vmatpush1.msra.mxu0 %v1208
    %2054 = vmatprep.subr.mxu0 0.0
    %2055 = vmatpush1.msra.mxu0 0.0
    %2056 = vmatprep.subr.mxu0 0.0
    %2057 = vmatpush1.msra.mxu0 0.0
    %2058 = vmatprep.subr.mxu0 0.0
    %2059 = vmatpush1.msra.mxu0 0.0
    %2060 = vmatprep.subr.mxu0 0.0
    %2061 = vmatpush1.msra.mxu0 0.0
    %2062 = vmatprep.subr.mxu0 0.0
    %2063 = vmatpush1.msra.mxu0 0.0
    %2064 = vmatprep.subr.mxu0 0.0
    %2065 = vmatpush1.msra.mxu0 0.0
    %2066 = vmatprep.subr.mxu0 0.0
    %2067 = vmatpush1.msra.mxu0 0.0
    %2068 = vmatprep.subr.mxu0 0.0
    %2069 = vmatpush1.msra.mxu0 0.0
    %2070 = vmatprep.subr.mxu0 0.0
    %2071 = vmatpush1.msra.mxu0 0.0
    %2072 = vmatprep.subr.mxu0 0.0
    %2073 = vmatpush1.msra.mxu0 0.0
    %2074 = vmatprep.subr.mxu0 0.0
    %2075 = vmatpush1.msra.mxu0 0.0
    %2076 = vmatprep.subr.mxu0 0.0
    %2077 = vmatpush1.msra.mxu0 0.0
    %2078 = vmatprep.subr.mxu0 0.0
    %2079 = vmatpush1.msra.mxu0 0.0
    %2080 = vmatprep.subr.mxu0 0.0
    %2081 = vmatpush1.msra.mxu0 0.0
    %2082 = vmatprep.subr.mxu0 0.0
    %2083 = vmatpush1.msra.mxu0 0.0
    %2084 = vmatprep.subr.mxu0 0.0
    %2085 = vmatpush1.msra.mxu0 0.0
    %2086 = vmatprep.subr.mxu0 0.0
    %2087 = vmatpush1.msra.mxu0 0.0
    %2088 = vmatprep.subr.mxu0 0.0
    %2089 = vmatpush1.msra.mxu0 0.0
    %2090 = vmatprep.subr.mxu0 0.0
    %2091 = vmatpush1.msra.mxu0 0.0
    %2092 = vmatprep.subr.mxu0 0.0
    %2093 = vmatpush1.msra.mxu0 0.0
    %2094 = vmatprep.subr.mxu0 0.0
    %2095 = vmatpush1.msra.mxu0 0.0
    %2096 = vmatprep.subr.mxu0 0.0
    %2097 = vmatpush1.msra.mxu0 0.0
    %2098 = vmatprep.subr.mxu0 0.0
    %2099 = vmatpush1.msra.mxu0 0.0
    %2100 = vmatprep.subr.mxu0 0.0
    %2101 = vmatpush1.msra.mxu0 0.0
    %2102 = vmatprep.subr.mxu0 0.0
    %2103 = vmatpush1.msra.mxu0 0.0
    %2104 = vmatprep.subr.mxu0 0.0
    %2105 = vmatpush1.msra.mxu0 0.0
    %2106 = vmatprep.subr.mxu0 0.0
    %2107 = vmatpush1.msra.mxu0 0.0
    %2108 = vmatprep.subr.mxu0 0.0
    %2109 = vmatpush1.msra.mxu0 0.0
    %2110 = vmatprep.mubr.f32.mxu0 0.0
    %2111 = vmatmul.mubr.f32.gmra.mrb[0].mxu0 %v2044
    %v2112 = vpop.f32.mrb[0].mxu0
    %v2113 = vadd.f32 0.0, %v2112
    %v2114 = vpop.f32.mrb[0].mxu0
    %2115 = vdwg.mxu0
    %v2117 = vrot.slane %v2113, 2
    %v2119 = vadd.f32 %v1294, %v2117
    %v2120 = vxor.u32 %v2119, 2147483648
    %v2121 = vmul.f32 %v2120, 1.442695
    %v2122 = vpow.pop %v2121
    %v2123 = vadd.f32 %v2122, 1.0
    %v2124 = vrcp.pop %v2123
    %v2125 = vmul.f32 1.0, %v2124
    %v2126 = vtanh.pop %v2119
    %v2128 = vrot.slane %v2033, 6
    %v2130 = vmul.f32 %v2125, %v2128
    %2132 = vrot.lane.b32.xlu0 %v2126, 64
    %v2133 = vpop.permute.xlu0 %2132
    %v2135 = vmul.f32 %v2125, %v2133
    %2137 = vrot.lane.b32.xlu0 %v2135, 32
    %v2138 = vpop.permute.xlu0 %2137
    %v2140 = vadd.f32 %v2130, %v2138
    %v2141 = vtanh.pop %v2140
    %2143 = vrot.lane.b32.xlu0 %v2141, 64
    %v2144 = vpop.permute.xlu0 %2143
    %v2146 = vmul.f32 %v2125, %v2144
    %v2147 = vld [vmem:[#allocation14] sm:$0x1]
    %v2148 = vld [vmem:[#allocation15] sm:$0x1]
    %v2149 = vld [vmem:[#allocation17] sm:$0x1]
    %v2151 = vsel %vm426, %v1405, 0.0
    %2152 = vadd.xlane.f32.xlu0 %v2151
    %v2153 = vpop.xlane.xlu0 %2152
    %v2154 = vrcp.pop 32.0
    %v2155 = vmul.f32 %v2153, %v2154
    %v2156 = vsub.f32 %v1402, %v2155
    %v2157 = vmul.f32 %v2156, %v2156
    %2159 = vrot.lane.b32.xlu0 %v2157, 32
    %v2160 = vpop.permute.xlu0 %2159
    %v2162 = vsel %vm426, %v2160, 0.0
    %2163 = vadd.xlane.f32.xlu0 %v2162
    %v2164 = vpop.xlane.xlu0 %2163
    %v2165 = vmul.f32 %v2164, %v2154
    %v2166 = vadd.f32 %v2165, 1e-05
    %v2167 = vrsqrt.pop %v2166
    %v2168 = vmul.f32 %v2156, %v2167
    %v2170 = vlaneseq
    %v2171 = vshrl.u32 %v2170, 7
    %v2172 = vsub.s32 0, %v2171
    %v2173 = vrot.slane %v2147, %v2172
    %2174 = vrot.lane.b32.xlu0 %v2173, 96
    %v2175 = vpop.permute.xlu0 %2174
    %v2177 = vmul.f32 %v2168, %v2175
    %v2179 = vlaneseq
    %v2180 = vshrl.u32 %v2179, 7
    %v2181 = vsub.s32 0, %v2180
    %v2182 = vrot.slane %v2148, %v2181
    %2183 = vrot.lane.b32.xlu0 %v2182, 96
    %v2184 = vpop.permute.xlu0 %2183
    %v2186 = vadd.f32 %v2177, %v2184
    %v2188 = vlaneseq
    %v2189 = vshrl.u32 %v2188, 7
    %v2190 = vsub.s32 0, %v2189
    %v2191 = vrot.slane %v2149, %v2190
    %2192 = vrot.lane.b32.xlu0 %v2191, 96
    %v2193 = vpop.permute.xlu0 %2192
    %v2195 = vmul.f32 %v2186, %v2193
    %2197 = vrot.lane.b32.xlu0 %v2195, 32
    %v2198 = vpop.permute.xlu0 %2197
    %v2200 = vsel %vm426, %v2198, 0.0
    %2201 = vadd.xlane.f32.xlu0 %v2200
    %v2202 = vpop.xlane.xlu0 %2201
    %2203 = vrot.lane.b32.xlu0 %v1508, 32
    %v2204 = vpop.permute.xlu0 %2203
    %v2206 = vsel %vm535, %v2204, 0.0
    %2207 = vadd.xlane.f32.xlu0 %v2206
    %v2208 = vpop.xlane.xlu0 %2207
    %v2209 = vmul.f32 %v2208, %v2154
    %v2210 = vsub.f32 %v1508, %v2209
    %v2211 = vmul.f32 %v2210, %v2210
    %2213 = vrot.lane.b32.xlu0 %v2211, 32
    %v2214 = vpop.permute.xlu0 %2213
    %v2216 = vsel %vm535, %v2214, 0.0
    %2217 = vadd.xlane.f32.xlu0 %v2216
    %v2218 = vpop.xlane.xlu0 %2217
    %v2219 = vmul.f32 %v2218, %v2154
    %v2220 = vadd.f32 %v2219, 1e-05
    %v2221 = vrsqrt.pop %v2220
    %v2222 = vmul.f32 %v2210, %v2221
    %v2223 = vmul.f32 %v2222, %v2175
    %v2224 = vadd.f32 %v2223, %v2184
    %v2225 = vmul.f32 %v2224, %v2193
    %2227 = vrot.lane.b32.xlu0 %v2225, 32
    %v2228 = vpop.permute.xlu0 %2227
    %v2230 = vsel %vm535, %v2228, 0.0
    %2231 = vadd.xlane.f32.xlu0 %v2230
    %v2232 = vpop.xlane.xlu0 %2231
    %2233 = vrot.lane.b32.xlu0 %v1615, 32
    %v2234 = vpop.permute.xlu0 %2233
    %v2236 = vsel %vm647, %v2234, 0.0
    %2237 = vadd.xlane.f32.xlu0 %v2236
    %v2238 = vpop.xlane.xlu0 %2237
    %v2239 = vmul.f32 %v2238, %v2154
    %v2240 = vsub.f32 %v1615, %v2239
    %v2241 = vmul.f32 %v2240, %v2240
    %2243 = vrot.lane.b32.xlu0 %v2241, 32
    %v2244 = vpop.permute.xlu0 %2243
    %v2246 = vsel %vm647, %v2244, 0.0
    %2247 = vadd.xlane.f32.xlu0 %v2246
    %v2248 = vpop.xlane.xlu0 %2247
    %v2249 = vmul.f32 %v2248, %v2154
    %v2250 = vadd.f32 %v2249, 1e-05
    %v2251 = vrsqrt.pop %v2250
    %v2252 = vmul.f32 %v2240, %v2251
    %v2253 = vmul.f32 %v2252, %v2175
    %v2254 = vadd.f32 %v2253, %v2184
    %v2255 = vmul.f32 %v2254, %v2193
    %2257 = vrot.lane.b32.xlu0 %v2255, 32
    %v2258 = vpop.permute.xlu0 %2257
    %v2260 = vsel %vm647, %v2258, 0.0
    %2261 = vadd.xlane.f32.xlu0 %v2260
    %v2262 = vpop.xlane.xlu0 %2261
    %2263 = vrot.lane.b32.xlu0 %v1722, 32
    %v2264 = vpop.permute.xlu0 %2263
    %v2266 = vsel %vm759, %v2264, 0.0
    %2267 = vadd.xlane.f32.xlu0 %v2266
    %v2268 = vpop.xlane.xlu0 %2267
    %v2269 = vmul.f32 %v2268, %v2154
    %v2270 = vsub.f32 %v1722, %v2269
    %v2271 = vmul.f32 %v2270, %v2270
    %2273 = vrot.lane.b32.xlu0 %v2271, 32
    %v2274 = vpop.permute.xlu0 %2273
    %v2276 = vsel %vm759, %v2274, 0.0
    %2277 = vadd.xlane.f32.xlu0 %v2276
    %v2278 = vpop.xlane.xlu0 %2277
    %v2279 = vmul.f32 %v2278, %v2154
    %v2280 = vadd.f32 %v2279, 1e-05
    %v2281 = vrsqrt.pop %v2280
    %v2282 = vmul.f32 %v2270, %v2281
    %v2283 = vmul.f32 %v2282, %v2175
    %v2284 = vadd.f32 %v2283, %v2184
    %v2285 = vmul.f32 %v2284, %v2193
    %2287 = vrot.lane.b32.xlu0 %v2285, 32
    %v2288 = vpop.permute.xlu0 %2287
    %v2290 = vsel %vm759, %v2288, 0.0
    %2291 = vadd.xlane.f32.xlu0 %v2290
    %v2292 = vpop.xlane.xlu0 %2291
    %v2294 = vsel %vm426, %v1829, 0.0
    %2295 = vadd.xlane.f32.xlu0 %v2294
    %v2296 = vpop.xlane.xlu0 %2295
    %v2297 = vmul.f32 %v2296, %v2154
    %v2298 = vsub.f32 %v1826, %v2297
    %v2299 = vmul.f32 %v2298, %v2298
    %2301 = vrot.lane.b32.xlu0 %v2299, 32
    %v2302 = vpop.permute.xlu0 %2301
    %v2304 = vsel %vm426, %v2302, 0.0
    %2305 = vadd.xlane.f32.xlu0 %v2304
    %v2306 = vpop.xlane.xlu0 %2305
    %v2307 = vmul.f32 %v2306, %v2154
    %v2308 = vadd.f32 %v2307, 1e-05
    %v2309 = vrsqrt.pop %v2308
    %v2310 = vmul.f32 %v2298, %v2309
    %v2311 = vmul.f32 %v2310, %v2175
    %v2312 = vadd.f32 %v2311, %v2184
    %v2313 = vmul.f32 %v2312, %v2193
    %2315 = vrot.lane.b32.xlu0 %v2313, 32
    %v2316 = vpop.permute.xlu0 %2315
    %v2318 = vsel %vm426, %v2316, 0.0
    %2319 = vadd.xlane.f32.xlu0 %v2318
    %v2320 = vpop.xlane.xlu0 %2319
    %2321 = vrot.lane.b32.xlu0 %v1932, 32
    %v2322 = vpop.permute.xlu0 %2321
    %v2324 = vsel %vm535, %v2322, 0.0
    %2325 = vadd.xlane.f32.xlu0 %v2324
    %v2326 = vpop.xlane.xlu0 %2325
    %v2327 = vmul.f32 %v2326, %v2154
    %v2328 = vsub.f32 %v1932, %v2327
    %v2329 = vmul.f32 %v2328, %v2328
    %2331 = vrot.lane.b32.xlu0 %v2329, 32
    %v2332 = vpop.permute.xlu0 %2331
    %v2334 = vsel %vm535, %v2332, 0.0
    %2335 = vadd.xlane.f32.xlu0 %v2334
    %v2336 = vpop.xlane.xlu0 %2335
    %v2337 = vmul.f32 %v2336, %v2154
    %v2338 = vadd.f32 %v2337, 1e-05
    %v2339 = vrsqrt.pop %v2338
    %v2340 = vmul.f32 %v2328, %v2339
    %v2341 = vmul.f32 %v2340, %v2175
    %v2342 = vadd.f32 %v2341, %v2184
    %v2343 = vmul.f32 %v2342, %v2193
    %2345 = vrot.lane.b32.xlu0 %v2343, 32
    %v2346 = vpop.permute.xlu0 %2345
    %v2348 = vsel %vm535, %v2346, 0.0
    %2349 = vadd.xlane.f32.xlu0 %v2348
    %v2350 = vpop.xlane.xlu0 %2349
    %2351 = vrot.lane.b32.xlu0 %v2039, 32
    %v2352 = vpop.permute.xlu0 %2351
    %v2354 = vsel %vm647, %v2352, 0.0
    %2355 = vadd.xlane.f32.xlu0 %v2354
    %v2356 = vpop.xlane.xlu0 %2355
    %v2357 = vmul.f32 %v2356, %v2154
    %v2358 = vsub.f32 %v2039, %v2357
    %v2359 = vmul.f32 %v2358, %v2358
    %2361 = vrot.lane.b32.xlu0 %v2359, 32
    %v2362 = vpop.permute.xlu0 %2361
    %v2364 = vsel %vm647, %v2362, 0.0
    %2365 = vadd.xlane.f32.xlu0 %v2364
    %v2366 = vpop.xlane.xlu0 %2365
    %v2367 = vmul.f32 %v2366, %v2154
    %v2368 = vadd.f32 %v2367, 1e-05
    %v2369 = vrsqrt.pop %v2368
    %v2370 = vmul.f32 %v2358, %v2369
    %v2371 = vmul.f32 %v2370, %v2175
    %v2372 = vadd.f32 %v2371, %v2184
    %v2373 = vmul.f32 %v2372, %v2193
    %2375 = vrot.lane.b32.xlu0 %v2373, 32
    %v2376 = vpop.permute.xlu0 %2375
    %v2378 = vsel %vm647, %v2376, 0.0
    %2379 = vadd.xlane.f32.xlu0 %v2378
    %v2380 = vpop.xlane.xlu0 %2379
    %2382 = vrot.lane.b32.xlu0 %v2146, 32
    %v2383 = vpop.permute.xlu0 %2382
    %v2385 = vsel %vm759, %v2383, 0.0
    %2386 = vadd.xlane.f32.xlu0 %v2385
    %v2387 = vpop.xlane.xlu0 %2386
    %v2388 = vmul.f32 %v2387, %v2154
    %v2389 = vsub.f32 %v2146, %v2388
    %v2390 = vmul.f32 %v2389, %v2389
    %2392 = vrot.lane.b32.xlu0 %v2390, 32
    %v2393 = vpop.permute.xlu0 %2392
    %v2395 = vsel %vm759, %v2393, 0.0
    %2396 = vadd.xlane.f32.xlu0 %v2395
    %v2397 = vpop.xlane.xlu0 %2396
    %v2398 = vmul.f32 %v2397, %v2154
    %v2399 = vadd.f32 %v2398, 1e-05
    %v2400 = vrsqrt.pop %v2399
    %v2401 = vmul.f32 %v2389, %v2400
    %v2402 = vmul.f32 %v2401, %v2175
    %v2403 = vadd.f32 %v2402, %v2184
    %v2404 = vmul.f32 %v2403, %v2193
    %2406 = vrot.lane.b32.xlu0 %v2404, 32
    %v2407 = vpop.permute.xlu0 %2406
    %v2409 = vsel %vm759, %v2407, 0.0
    %2410 = vadd.xlane.f32.xlu0 %v2409
    %v2411 = vpop.xlane.xlu0 %2410
    %v2413 = vrot.slane %v2232, 2
    %v2415 = vmax.f32 %v2202, %v2413
    %v2417 = vrot.slane %v2292, 2
    %v2419 = vmax.f32 %v2262, %v2417
    %v2421 = vrot.slane %v2350, 2
    %v2423 = vmax.f32 %v2320, %v2421
    %v2425 = vrot.slane %v2411, 2
    %v2427 = vmax.f32 %v2380, %v2425
    %v2429 = vrot.slane %v2419, 4
    %v2431 = vmax.f32 %v2415, %v2429
    %v2433 = vrot.slane %v2427, 4
    %v2435 = vmax.f32 %v2423, %v2433
    %v2436 = vmax.f32 %v2431, %v2435
    %v2437 = vsub.f32 %v2202, %v2436
    %v2438 = vmax.f32 %v2437, -10.0
    %v2439 = vmin.f32 %v2438, 10.0
    %v2440 = vmul.f32 %v2439, 1.442695
    %v2441 = vpow.pop %v2440
    %v2443 = vrot.slane %v2436, 6
    %v2445 = vsub.f32 %v2232, %v2443
    %v2446 = vmax.f32 %v2445, -10.0
    %v2447 = vmin.f32 %v2446, 10.0
    %v2448 = vmul.f32 %v2447, 1.442695
    %v2449 = vpow.pop %v2448
    %v2450 = vrot.slane %v2436, 4
    %v2452 = vsub.f32 %v2262, %v2450
    %v2453 = vmax.f32 %v2452, -10.0
    %v2454 = vmin.f32 %v2453, 10.0
    %v2455 = vmul.f32 %v2454, 1.442695
    %v2456 = vpow.pop %v2455
    %v2457 = vrot.slane %v2436, 2
    %v2459 = vsub.f32 %v2292, %v2457
    %v2460 = vmax.f32 %v2459, -10.0
    %v2461 = vmin.f32 %v2460, 10.0
    %v2462 = vmul.f32 %v2461, 1.442695
    %v2463 = vpow.pop %v2462
    %v2464 = vsub.f32 %v2320, %v2436
    %v2465 = vmax.f32 %v2464, -10.0
    %v2466 = vmin.f32 %v2465, 10.0
    %v2467 = vmul.f32 %v2466, 1.442695
    %v2468 = vpow.pop %v2467
    %v2469 = vsub.f32 %v2350, %v2443
    %v2470 = vmax.f32 %v2469, -10.0
    %v2471 = vmin.f32 %v2470, 10.0
    %v2472 = vmul.f32 %v2471, 1.442695
    %v2473 = vpow.pop %v2472
    %v2474 = vsub.f32 %v2380, %v2450
    %v2475 = vmax.f32 %v2474, -10.0
    %v2476 = vmin.f32 %v2475, 10.0
    %v2477 = vmul.f32 %v2476, 1.442695
    %v2478 = vpow.pop %v2477
    %v2479 = vsub.f32 %v2411, %v2457
    %v2480 = vmax.f32 %v2479, -10.0
    %v2481 = vmin.f32 %v2480, 10.0
    %v2482 = vmul.f32 %v2481, 1.442695
    %v2483 = vpow.pop %v2482
    %v2485 = vrot.slane %v2449, 2
    %v2487 = vadd.f32 %v2441, %v2485
    %v2489 = vrot.slane %v2463, 2
    %v2491 = vadd.f32 %v2456, %v2489
    %v2493 = vrot.slane %v2473, 2
    %v2495 = vadd.f32 %v2468, %v2493
    %v2497 = vrot.slane %v2483, 2
    %v2499 = vadd.f32 %v2478, %v2497
    %v2501 = vrot.slane %v2491, 4
    %v2503 = vadd.f32 %v2487, %v2501
    %v2505 = vrot.slane %v2499, 4
    %v2507 = vadd.f32 %v2495, %v2505
    %v2508 = vadd.f32 %v2503, %v2507
    %v2509 = vrcp.pop %v2508
    %2511 = vset.pattern.permute.xlu0 0
    %2512 = vperm.xlu0 %2511, %v2441
    %v2513 = vpop.permute.xlu0 %2512
    %v2515 = vmul.f32 %v2513, %v2186
    %2516 = vset.pattern.permute.xlu0 0
    %2517 = vperm.xlu0 %2516, %v2449
    %v2518 = vpop.permute.xlu0 %2517
    %v2520 = vmul.f32 %v2518, %v2224
    %2522 = vset.pattern.permute.xlu0 0
    %2523 = vperm.xlu0 %2522, %v2456
    %v2524 = vpop.permute.xlu0 %2523
    %v2526 = vmul.f32 %v2524, %v2254
    %2527 = vset.pattern.permute.xlu0 0
    %2528 = vperm.xlu0 %2527, %v2463
    %v2529 = vpop.permute.xlu0 %2528
    %v2531 = vmul.f32 %v2529, %v2284
    %2533 = vset.pattern.permute.xlu0 0
    %2534 = vperm.xlu0 %2533, %v2468
    %v2535 = vpop.permute.xlu0 %2534
    %v2537 = vmul.f32 %v2535, %v2312
    %2538 = vset.pattern.permute.xlu0 0
    %2539 = vperm.xlu0 %2538, %v2473
    %v2540 = vpop.permute.xlu0 %2539
    %v2542 = vmul.f32 %v2540, %v2342
    %2544 = vset.pattern.permute.xlu0 0
    %2545 = vperm.xlu0 %2544, %v2478
    %v2546 = vpop.permute.xlu0 %2545
    %v2548 = vmul.f32 %v2546, %v2372
    %2549 = vset.pattern.permute.xlu0 0
    %2550 = vperm.xlu0 %2549, %v2483
    %v2551 = vpop.permute.xlu0 %2550
    %v2553 = vmul.f32 %v2551, %v2403
    %v2555 = vrot.slane %v2520, 2
    %v2557 = vadd.f32 %v2515, %v2555
    %v2559 = vrot.slane %v2531, 2
    %v2561 = vadd.f32 %v2526, %v2559
    %v2563 = vrot.slane %v2542, 2
    %v2565 = vadd.f32 %v2537, %v2563
    %v2567 = vrot.slane %v2553, 2
    %v2569 = vadd.f32 %v2548, %v2567
    %v2571 = vrot.slane %v2561, 4
    %v2573 = vadd.f32 %v2557, %v2571
    %v2575 = vrot.slane %v2569, 4
    %v2577 = vadd.f32 %v2565, %v2575
    %v2578 = vadd.f32 %v2573, %v2577
    %2580 = vset.pattern.permute.xlu0 0
    %2581 = vperm.xlu0 %2580, %v2509
    %v2582 = vpop.permute.xlu0 %2581
    %v2584 = vmul.f32 %v2578, %v2582
    %v2585 = vmax.f32 %v2584, 0.0
    %v2586 = vld [vmem:[%s12] sm:$0xff]
    %v2587 = vld [vmem:[%s12 + $0x8] sm:$0xff]
    %v2588 = vld [vmem:[%s12 + $0x10] sm:$0xff]
    %v2589 = vld [vmem:[%s12 + $0x18] sm:$0xff]
    %v2590 = vld [vmem:[%s13] sm:$0x1]
    %v2592 = vlaneseq
    %v2593 = vshrl.u32 %v2592, 7
    %v2594 = vsub.s32 0, %v2593
    %v2595 = vrot.slane %v2590, %v2594
    %2598 = vrot.lane.b32.xlu0 %v2585, 32
    %v2599 = vpop.permute.xlu0 %2598
    %v2600 = vsel %vm319, %v2599, 0
    %2602 = vmatprep.subr.mxu0 0.0
    %2603 = vmatpush1.msra.mxu0 %v2586
    %2604 = vmatprep.subr.mxu0 0.0
    %2605 = vmatpush1.msra.mxu0 %v2587
    %2606 = vmatprep.subr.mxu0 0.0
    %2607 = vmatpush1.msra.mxu0 %v2588
    %2608 = vmatprep.subr.mxu0 0.0
    %2609 = vmatpush1.msra.mxu0 %v2589
    %2610 = vmatprep.subr.mxu0 0.0
    %2611 = vmatpush1.msra.mxu0 0.0
    %2612 = vmatprep.subr.mxu0 0.0
    %2613 = vmatpush1.msra.mxu0 0.0
    %2614 = vmatprep.subr.mxu0 0.0
    %2615 = vmatpush1.msra.mxu0 0.0
    %2616 = vmatprep.subr.mxu0 0.0
    %2617 = vmatpush1.msra.mxu0 0.0
    %2618 = vmatprep.subr.mxu0 0.0
    %2619 = vmatpush1.msra.mxu0 0.0
    %2620 = vmatprep.subr.mxu0 0.0
    %2621 = vmatpush1.msra.mxu0 0.0
    %2622 = vmatprep.subr.mxu0 0.0
    %2623 = vmatpush1.msra.mxu0 0.0
    %2624 = vmatprep.subr.mxu0 0.0
    %2625 = vmatpush1.msra.mxu0 0.0
    %2626 = vmatprep.subr.mxu0 0.0
    %2627 = vmatpush1.msra.mxu0 0.0
    %2628 = vmatprep.subr.mxu0 0.0
    %2629 = vmatpush1.msra.mxu0 0.0
    %2630 = vmatprep.subr.mxu0 0.0
    %2631 = vmatpush1.msra.mxu0 0.0
    %2632 = vmatprep.subr.mxu0 0.0
    %2633 = vmatpush1.msra.mxu0 0.0
    %2634 = vmatprep.subr.mxu0 0.0
    %2635 = vmatpush1.msra.mxu0 0.0
    %2636 = vmatprep.subr.mxu0 0.0
    %2637 = vmatpush1.msra.mxu0 0.0
    %2638 = vmatprep.subr.mxu0 0.0
    %2639 = vmatpush1.msra.mxu0 0.0
    %2640 = vmatprep.subr.mxu0 0.0
    %2641 = vmatpush1.msra.mxu0 0.0
    %2642 = vmatprep.subr.mxu0 0.0
    %2643 = vmatpush1.msra.mxu0 0.0
    %2644 = vmatprep.subr.mxu0 0.0
    %2645 = vmatpush1.msra.mxu0 0.0
    %2646 = vmatprep.subr.mxu0 0.0
    %2647 = vmatpush1.msra.mxu0 0.0
    %2648 = vmatprep.subr.mxu0 0.0
    %2649 = vmatpush1.msra.mxu0 0.0
    %2650 = vmatprep.subr.mxu0 0.0
    %2651 = vmatpush1.msra.mxu0 0.0
    %2652 = vmatprep.subr.mxu0 0.0
    %2653 = vmatpush1.msra.mxu0 0.0
    %2654 = vmatprep.subr.mxu0 0.0
    %2655 = vmatpush1.msra.mxu0 0.0
    %2656 = vmatprep.subr.mxu0 0.0
    %2657 = vmatpush1.msra.mxu0 0.0
    %2658 = vmatprep.subr.mxu0 0.0
    %2659 = vmatpush1.msra.mxu0 0.0
    %2660 = vmatprep.subr.mxu0 0.0
    %2661 = vmatpush1.msra.mxu0 0.0
    %2662 = vmatprep.subr.mxu0 0.0
    %2663 = vmatpush1.msra.mxu0 0.0
    %2664 = vmatprep.subr.mxu0 0.0
    %2665 = vmatpush1.msra.mxu0 0.0
    %2666 = vmatprep.mubr.f32.mxu0 0.0
    %2667 = vmatmul.mubr.f32.gmra.mrb[0].mxu0 %v2600
    %v2668 = vpop.f32.mrb[0].mxu0
    %v2669 = vadd.f32 %v2595, %v2668
    %v2670 = vpop.f32.mrb[0].mxu0
    %2671 = vdwg.mxu0
    %v2672 = vmax.f32 %v2669, 0.0
    %v2673 = vld [vmem:[#allocation18] sm:$0xff]
    %v2674 = vld [vmem:[#allocation18 + $0x8] sm:$0xff]
    %v2675 = vld [vmem:[#allocation18 + $0x10] sm:$0xff]
    %v2676 = vld [vmem:[#allocation18 + $0x18] sm:$0xff]
    %v2677 = vld [vmem:[#allocation18 + $0x20] sm:$0xff]
    %v2678 = vld [vmem:[#allocation18 + $0x28] sm:$0xff]
    %v2679 = vld [vmem:[#allocation18 + $0x30] sm:$0xff]
    %v2680 = vld [vmem:[#allocation18 + $0x38] sm:$0xff]
    %v2681 = vld [vmem:[#allocation18 + $0x40] sm:$0xff]
    %v2682 = vld [vmem:[#allocation18 + $0x48] sm:$0xff]
    %v2683 = vld [vmem:[#allocation18 + $0x50] sm:$0xff]
    %v2684 = vld [vmem:[#allocation18 + $0x58] sm:$0xff]
    %v2685 = vld [vmem:[#allocation18 + $0x60] sm:$0xff]
    %v2686 = vld [vmem:[#allocation18 + $0x68] sm:$0xff]
    %v2687 = vld [vmem:[#allocation18 + $0x70] sm:$0xff]
    %v2688 = vld [vmem:[#allocation18 + $0x78] sm:$0xff]
    %v2689 = vld [vmem:[%s15] sm:$0x1]
    %v2691 = vlaneseq
    %v2692 = vshrl.u32 %v2691, 7
    %v2693 = vsub.s32 0, %v2692
    %v2694 = vrot.slane %v2689, %v2693
    %2696 = vmatprep.subr.mxu0 0.0
    %2697 = vmatpush1.msra.mxu0 %v2673
    %2698 = vmatprep.subr.mxu0 0.0
    %2699 = vmatpush1.msra.mxu0 %v2674
    %2700 = vmatprep.subr.mxu0 0.0
    %2701 = vmatpush1.msra.mxu0 %v2675
    %2702 = vmatprep.subr.mxu0 0.0
    %2703 = vmatpush1.msra.mxu0 %v2676
    %2704 = vmatprep.subr.mxu0 0.0
    %2705 = vmatpush1.msra.mxu0 %v2677
    %2706 = vmatprep.subr.mxu0 0.0
    %2707 = vmatpush1.msra.mxu0 %v2678
    %2708 = vmatprep.subr.mxu0 0.0
    %2709 = vmatpush1.msra.mxu0 %v2679
    %2710 = vmatprep.subr.mxu0 0.0
    %2711 = vmatpush1.msra.mxu0 %v2680
    %2712 = vmatprep.subr.mxu0 0.0
    %2713 = vmatpush1.msra.mxu0 %v2681
    %2714 = vmatprep.subr.mxu0 0.0
    %2715 = vmatpush1.msra.mxu0 %v2682
    %2716 = vmatprep.subr.mxu0 0.0
    %2717 = vmatpush1.msra.mxu0 %v2683
    %2718 = vmatprep.subr.mxu0 0.0
    %2719 = vmatpush1.msra.mxu0 %v2684
    %2720 = vmatprep.subr.mxu0 0.0
    %2721 = vmatpush1.msra.mxu0 %v2685
    %2722 = vmatprep.subr.mxu0 0.0
    %2723 = vmatpush1.msra.mxu0 %v2686
    %2724 = vmatprep.subr.mxu0 0.0
    %2725 = vmatpush1.msra.mxu0 %v2687
    %2726 = vmatprep.subr.mxu0 0.0
    %2727 = vmatpush1.msra.mxu0 %v2688
    %2728 = vmatprep.subr.mxu0 0.0
    %2729 = vmatpush1.msra.mxu0 0.0
    %2730 = vmatprep.subr.mxu0 0.0
    %2731 = vmatpush1.msra.mxu0 0.0
    %2732 = vmatprep.subr.mxu0 0.0
    %2733 = vmatpush1.msra.mxu0 0.0
    %2734 = vmatprep.subr.mxu0 0.0
    %2735 = vmatpush1.msra.mxu0 0.0
    %2736 = vmatprep.subr.mxu0 0.0
    %2737 = vmatpush1.msra.mxu0 0.0
    %2738 = vmatprep.subr.mxu0 0.0
    %2739 = vmatpush1.msra.mxu0 0.0
    %2740 = vmatprep.subr.mxu0 0.0
    %2741 = vmatpush1.msra.mxu0 0.0
    %2742 = vmatprep.subr.mxu0 0.0
    %2743 = vmatpush1.msra.mxu0 0.0
    %2744 = vmatprep.subr.mxu0 0.0
    %2745 = vmatpush1.msra.mxu0 0.0
    %2746 = vmatprep.subr.mxu0 0.0
    %2747 = vmatpush1.msra.mxu0 0.0
    %2748 = vmatprep.subr.mxu0 0.0
    %2749 = vmatpush1.msra.mxu0 0.0
    %2750 = vmatprep.subr.mxu0 0.0
    %2751 = vmatpush1.msra.mxu0 0.0
    %2752 = vmatprep.subr.mxu0 0.0
    %2753 = vmatpush1.msra.mxu0 0.0
    %2754 = vmatprep.subr.mxu0 0.0
    %2755 = vmatpush1.msra.mxu0 0.0
    %2756 = vmatprep.subr.mxu0 0.0
    %2757 = vmatpush1.msra.mxu0 0.0
    %2758 = vmatprep.subr.mxu0 0.0
    %2759 = vmatpush1.msra.mxu0 0.0
    %2760 = vmatprep.mubr.f32.mxu0 0.0
    %2761 = vmatmul.mubr.f32.gmra.mrb[0].mxu0 %v2672
    %v2762 = vpop.f32.mrb[0].mxu0
    %v2763 = vadd.f32 %v2694, %v2762
    %v2764 = vpop.f32.mrb[0].mxu0
    %2765 = vdwg.mxu0
    %2766 = vst [vmem:[#allocation20] sm:$0x3] %v2763
    // Predicated region
    $region106: #{tpu_custom_call.1} parent=1 // pred_check
      _
    $region107: #{tpu_custom_call.1} parent=1 // pred_check_branch
      %2768 = sbr.rel (0) target = $region109
    $region108: #{tpu_custom_call.1} parent=1 // pred_region
      %s2770 = ssub.s32 32, 32
      %2771 = vsyncadd [#allocation5], %s2770
      %s2773 = sshll.u32 [#allocation20], 4
      %s2774 = int_to_ptr.vmem [resolvable:$true] %s2773
      %2776 = dma.vmem_to_hbm [thread:$0]  %s2774, 32, %s16, [#allocation5]
    $region109: #{tpu_custom_call.1} parent=1 // pred_fallthru
      _
    // Predicated region
    $region110: #{tpu_custom_call.1} parent=1 // pred_check
      _
    $region111: #{tpu_custom_call.1} parent=1 // pred_check_branch
      %2778 = sbr.rel (0) target = $region113
    $region112: #{tpu_custom_call.1} parent=1 // pred_region
      %2779 = dma.done [#allocation5], 32
    $region113: #{tpu_custom_call.1} parent=1 // pred_fallthru
      _
    %2780 = vsyncpa [#allocation4], 1
    %2781 = vsyncpa [#allocation7], 1
    %2782 = vsyncpa [#allocation10], 1
    %2783 = vsyncpa [#allocation13], 1
    %2784 = vsyncpa [#allocation16], 1
    %2785 = vsyncpa [#allocation19], 1
    %2786 = vsyncpa [#allocation5], 1

</llo_original>
